<compile_context>
chip_gen: v5e
topology: v5e:2x2
jax: 0.10.0
libtpu: 0.0.40
codegen_flags: <defaults>
</compile_context>

<pallas_src>
import functools
from math import gcd

import jax
import jax.numpy as jnp
from jax.experimental import pallas as pl
from jax.experimental.pallas import tpu as pltpu


# ---------------------------------------------------------------------------
# Kernel 1: 3x3 conv (padding=1) + bias via one im2col matmul per image,
#           plus per-step partial sum / sum-of-squares for BN statistics.
# ---------------------------------------------------------------------------
def conv_stats_kernel(x_ref, w_ref, b_ref, y_ref, psum_ref, pssq_ref,
                      xpad_ref, *, nb, H, W):
    # x_ref:    (nb, H, W, Cin)      un-padded input block (nb batch images)
    # w_ref:    (9*Cin, Cout)        folded conv weight (taps share one K dim)
    # b_ref:    (1, Cout)            conv bias
    # y_ref:    (nb, H*W, Cout)      conv + bias output
    # psum_ref: (1, 1, Cout)         per-step partial sum  (over nb*H*W rows)
    # pssq_ref: (1, 1, Cout)         per-step partial sum of squares
    # xpad_ref: (nb, H+2, W+2, Cin)  VMEM scratch holding the padded block
    cin = x_ref.shape[-1]
    cout = w_ref.shape[-1]

    # Build the zero halo in VMEM (no jnp.pad / extra HBM pass in the wrapper).
    # Re-zeroed every step so the kernel stays correct when the batch axis is
    # split across TensorCores ("parallel"); the scratch is tiny.
    xpad_ref[...] = jnp.zeros_like(xpad_ref)
    xpad_ref[:, 1:H + 1, 1:W + 1, :] = x_ref[...]

    s = jnp.zeros((1, cout), dtype=jnp.float32)
    q = jnp.zeros((1, cout), dtype=jnp.float32)
    for b in range(nb):  # static unroll; nb is kept small by construction
        # im2col: 9 shifted (H*W, Cin) views concatenated along lanes
        # -> a single (H*W, 9*Cin) x (9*Cin, Cout) MXU matmul.
        taps = []
        for dy in range(3):
            for dx in range(3):
                taps.append(
                    xpad_ref[b, dy:dy + H, dx:dx + W, :].reshape(H * W, cin))
        patch = jnp.concatenate(taps, axis=-1)                    # (H*W, 9*Cin)
        acc = jnp.dot(patch, w_ref[...],
                      preferred_element_type=jnp.float32)          # (H*W, Cout)
        acc = acc + b_ref[...]
        y_ref[b] = acc
        s = s + jnp.sum(acc, axis=0, keepdims=True)
        q = q + jnp.sum(acc * acc, axis=0, keepdims=True)

    psum_ref[...] = s.reshape(1, 1, cout)
    pssq_ref[...] = q.reshape(1, 1, cout)


# ---------------------------------------------------------------------------
# Kernel 2: affine BatchNorm (precomputed per-channel scale/shift, tiled to a
#           lane-dense row) + ReLU, lane-dense elementwise.
# ---------------------------------------------------------------------------
def bn_relu_kernel(y_ref, scale_ref, shift_ref, o_ref):
    # y_ref/o_ref: (rows, L) with L a multiple of 128 (full-width vld/vst).
    o_ref[...] = jnp.maximum(y_ref[...] * scale_ref[...] + shift_ref[...], 0.0)


# ---------------------------------------------------------------------------
# Tiling helpers (keep double-buffered working sets well under VMEM limits).
# ---------------------------------------------------------------------------
def _batch_block(N, H, W, cin, cout, budget_bytes=4 << 20):
    """Images per conv grid step: as many as fit a modest VMEM budget."""
    per_image = ((H + 2) * (W + 2) * cin + H * W * cin + H * W * cout) * 4
    nb = max(1, min(N, budget_bytes // max(per_image, 1)))
    while N % nb:
        nb -= 1
    return nb


def _row_block(R, L, budget_bytes=4 << 20):
    """Rows per grid step for the (R, L) BN+ReLU pass (multiple of 8)."""
    if R * L * 4 <= budget_bytes or R % 8 != 0:
        return R
    rows = min(R, max(8, (budget_bytes // (L * 4)) // 8 * 8))
    while R % rows:
        rows -= 8
    return max(rows, 8)


# ---------------------------------------------------------------------------
# Wrapper: CBN forward pass (matches the PyTorch module: NCHW in / NCHW out).
# ---------------------------------------------------------------------------
@jax.jit
def cbn_forward(x_nchw, w_oihw, bias, gamma, beta, eps=1e-5):
    x_nchw = x_nchw.astype(jnp.float32)
    N, Cin, H, W = x_nchw.shape
    Cout = w_oihw.shape[0]

    # NCHW -> NHWC (channels on the lane dim for the conv matmul).
    x = jnp.transpose(x_nchw, (0, 2, 3, 1))
    # OIHW -> (ky, kx, Cin, Cout) -> (9*Cin, Cout): all 9 taps in one K dim.
    w2 = jnp.transpose(w_oihw.astype(jnp.float32),
                       (2, 3, 1, 0)).reshape(9 * Cin, Cout)
    b2 = bias.reshape(1, Cout).astype(jnp.float32)

    nb = _batch_block(N, H, W, Cin, Cout)
    g = N // nb

    # NOTE(perf): for large H*W*C, additionally tile the H dimension (1-row
    # halo) and raise pltpu.CompilerParams(vmem_limit_bytes=...) with headroom
    # (v6e: 128 MiB physical VMEM, v7x: only 64 MiB).  Demo blocks are tiny.
    conv_call = pl.pallas_call(
        functools.partial(conv_stats_kernel, nb=nb, H=H, W=W),
        out_shape=(
            jax.ShapeDtypeStruct((N, H * W, Cout), jnp.float32),  # conv out
            jax.ShapeDtypeStruct((g, 1, Cout), jnp.float32),      # partial sum
            jax.ShapeDtypeStruct((g, 1, Cout), jnp.float32),      # partial ssq
        ),
        grid_spec=pltpu.PrefetchScalarGridSpec(
            num_scalar_prefetch=0,
            grid=(g,),
            in_specs=[
                pl.BlockSpec((nb, H, W, Cin), lambda n: (n, 0, 0, 0)),
                pl.BlockSpec((9 * Cin, Cout), lambda n: (0, 0)),
                pl.BlockSpec((1, Cout), lambda n: (0, 0)),
            ],
            out_specs=(
                pl.BlockSpec((nb, H * W, Cout), lambda n: (n, 0, 0)),
                pl.BlockSpec((1, 1, Cout), lambda n: (n, 0, 0)),
                pl.BlockSpec((1, 1, Cout), lambda n: (n, 0, 0)),
            ),
            scratch_shapes=[pltpu.VMEM((nb, H + 2, W + 2, Cin), jnp.float32)],
        ),
        compiler_params=pltpu.CompilerParams(
            dimension_semantics=("parallel",)),
    )
    y, psum, pssq = conv_call(x, w2, b2)

    # BatchNorm2d training-mode statistics over (N, H, W) per channel
    # (biased variance, matching PyTorch's forward normalization).
    # TODO(synk): E[x^2]-E[x]^2 in f32 is cancellation-prone when |mean|>>std;
    # switch to a two-pass variance if tolerances ever tighten.
    cnt = jnp.float32(N * H * W)
    mean = jnp.sum(psum, axis=(0, 1)) / cnt                       # (Cout,)
    var = jnp.sum(pssq, axis=(0, 1)) / cnt - mean * mean
    invstd = jax.lax.rsqrt(var + eps)
    scale = gamma.astype(jnp.float32) * invstd
    shift = beta.astype(jnp.float32) - mean * scale

    # --- pass 2: BN affine + ReLU on a lane-dense flattened view ----------
    total = N * H * W * Cout
    L = 128 * Cout // gcd(128, Cout)                              # lcm(128, C)
    if Cout <= 128 and total % L == 0:
        reps = L // Cout
        y2 = y.reshape(total // L, L)        # same dense buffer, free reshape
        scale_row = jnp.tile(scale, reps).reshape(1, L)
        shift_row = jnp.tile(shift, reps).reshape(1, L)
    else:
        L = Cout                             # fallback: channel-minor layout
        y2 = y.reshape(N * H * W, Cout)
        scale_row = scale.reshape(1, Cout)
        shift_row = shift.reshape(1, Cout)
    R = y2.shape[0]
    rows = _row_block(R, L)

    norm_call = pl.pallas_call(
        bn_relu_kernel,
        out_shape=jax.ShapeDtypeStruct((R, L), jnp.float32),
        grid_spec=pltpu.PrefetchScalarGridSpec(
            num_scalar_prefetch=0,
            grid=(R // rows,),
            in_specs=[
                pl.BlockSpec((rows, L), lambda n: (n, 0)),
                pl.BlockSpec((1, L), lambda n: (0, 0)),
                pl.BlockSpec((1, L), lambda n: (0, 0)),
            ],
            out_specs=pl.BlockSpec((rows, L), lambda n: (n, 0)),
        ),
        input_output_aliases={0: 0},   # overwrite the conv intermediate in place
        compiler_params=pltpu.CompilerParams(
            dimension_semantics=("parallel",)),
    )
    out_flat = norm_call(y2, scale_row, shift_row)

    out_nhwc = out_flat.reshape(N, H, W, Cout)
    return jnp.transpose(out_nhwc, (0, 3, 1, 2))   # back to NCHW


# ---------------------------------------------------------------------------
# Pure-JAX reference for a sanity check.
# ---------------------------------------------------------------------------
def cbn_reference(x_nchw, w_oihw, bias, gamma, beta, eps=1e-5):
    y = jax.lax.conv_general_dilated(
        x_nchw, w_oihw, window_strides=(1, 1), padding=((1, 1), (1, 1)),
        dimension_numbers=("NCHW", "OIHW", "NCHW"))
    y = y + bias.reshape(1, -1, 1, 1)
    mean = jnp.mean(y, axis=(0, 2, 3), keepdims=True)
    var = jnp.mean((y - mean) ** 2, axis=(0, 2, 3), keepdims=True)
    yhat = (y - mean) * jax.lax.rsqrt(var + eps)
    yhat = gamma.reshape(1, -1, 1, 1) * yhat + beta.reshape(1, -1, 1, 1)
    return jnp.maximum(yhat, 0.0)


if __name__ == "__main__":
    key = jax.random.PRNGKey(0)
    k_x, k_w, k_b, k_g, k_beta = jax.random.split(key, 5)

    N, Cin, Cout, H, W = 2, 4, 8, 16, 16

    x = jax.random.normal(k_x, (N, Cin, H, W), dtype=jnp.float32)
    w = jax.random.normal(k_w, (Cout, Cin, 3, 3), dtype=jnp.float32) * 0.1
    b = jax.random.normal(k_b, (Cout,), dtype=jnp.float32) * 0.1
    gamma = 1.0 + 0.1 * jax.random.normal(k_g, (Cout,), dtype=jnp.float32)
    beta = 0.1 * jax.random.normal(k_beta, (Cout,), dtype=jnp.float32)

    out = cbn_forward(x, w, b, gamma, beta)
    out = jax.block_until_ready(out)

    ref = cbn_reference(x, w, b, gamma, beta)
    assert out.shape == (N, Cout, H, W)
    assert jnp.allclose(out, ref, atol=1e-4, rtol=1e-4), "mismatch vs reference"

    print("KERNEL_OK")
</pallas_src>

<mosaic_0001>
module attributes {stable_mosaic.version = 11 : i64} {
  func.func @conv_stats_kernel(%arg0: i32, %arg1: memref<2x16x16x4xf32, #tpu.memory_space<vmem>>, %arg2: memref<36x8xf32, #tpu.memory_space<vmem>>, %arg3: memref<1x8xf32, #tpu.memory_space<vmem>>, %arg4: memref<2x256x8xf32, #tpu.memory_space<vmem>>, %arg5: memref<1x1x8xf32, #tpu.memory_space<vmem>>, %arg6: memref<1x1x8xf32, #tpu.memory_space<vmem>>, %arg7: memref<2x18x18x4xf32, #tpu.memory_space<vmem>>) attributes {dimension_semantics = [#tpu.dimension_semantics<parallel>], iteration_bounds = array<i64: 1>, scalar_prefetch = 0 : i64, scratch_operands = 1 : i64, tpu.core_type = #tpu.core_type<tc>, window_params = [{transform_indices = @transform_0, window_bounds = array<i64: 2, 16, 16, 4>}, {pipeline_mode = #tpu.pipeline_mode<synchronous>, transform_indices = @transform_1, window_bounds = array<i64: 36, 8>}, {pipeline_mode = #tpu.pipeline_mode<synchronous>, transform_indices = @transform_2, window_bounds = array<i64: 1, 8>}, {transform_indices = @transform_3, window_bounds = array<i64: 2, 256, 8>}, {transform_indices = @transform_4, window_bounds = array<i64: 1, 1, 8>}, {transform_indices = @transform_5, window_bounds = array<i64: 1, 1, 8>}]} {
    %cst = arith.constant 0.000000e+00 : f32
    %0 = vector.broadcast %cst : f32 to vector<2x18x18x4xf32>
    %c0 = arith.constant 0 : index
    %c0_0 = arith.constant 0 : index
    %c0_1 = arith.constant 0 : index
    %c0_2 = arith.constant 0 : index
    %1 = vector.load %arg7[%c0, %c0_0, %c0_1, %c0_2] : memref<2x18x18x4xf32, #tpu.memory_space<vmem>>, vector<2x18x18x4xf32>
    tpu.vector_store %arg7[%c0, %c0_0, %c0_1, %c0_2], %0 {strides = array<i32>} : memref<2x18x18x4xf32, #tpu.memory_space<vmem>>, vector<2x18x18x4xf32>,
    %c0_3 = arith.constant 0 : index
    %c0_4 = arith.constant 0 : index
    %c0_5 = arith.constant 0 : index
    %c0_6 = arith.constant 0 : index
    %2 = vector.load %arg1[%c0_3, %c0_4, %c0_5, %c0_6] : memref<2x16x16x4xf32, #tpu.memory_space<vmem>>, vector<2x16x16x4xf32>
    %c0_7 = arith.constant 0 : index
    %c1 = arith.constant 1 : index
    %c1_8 = arith.constant 1 : index
    %c0_9 = arith.constant 0 : index
    %3 = vector.load %arg7[%c0_7, %c1, %c1_8, %c0_9] : memref<2x18x18x4xf32, #tpu.memory_space<vmem>>, vector<2x16x16x4xf32>
    tpu.vector_store %arg7[%c0_7, %c1, %c1_8, %c0_9], %2 {strides = array<i32>} : memref<2x18x18x4xf32, #tpu.memory_space<vmem>>, vector<2x16x16x4xf32>,
    %cst_10 = arith.constant 0.000000e+00 : f32
    %4 = vector.broadcast %cst_10 : f32 to vector<1x8xf32>
    %cst_11 = arith.constant 0.000000e+00 : f32
    %5 = vector.broadcast %cst_11 : f32 to vector<1x8xf32>
    %c0_12 = arith.constant 0 : index
    %c0_13 = arith.constant 0 : index
    %c0_14 = arith.constant 0 : index
    %c0_15 = arith.constant 0 : index
    %6 = vector.load %arg7[%c0_12, %c0_13, %c0_14, %c0_15] : memref<2x18x18x4xf32, #tpu.memory_space<vmem>>, vector<1x16x16x4xf32>
    %7 = vector.shape_cast %6 : vector<1x16x16x4xf32> to vector<16x16x4xf32>
    %8 = vector.shape_cast %7 : vector<16x16x4xf32> to vector<256x4xf32>
    %c0_16 = arith.constant 0 : index
    %c0_17 = arith.constant 0 : index
    %c1_18 = arith.constant 1 : index
    %c0_19 = arith.constant 0 : index
    %9 = vector.load %arg7[%c0_16, %c0_17, %c1_18, %c0_19] : memref<2x18x18x4xf32, #tpu.memory_space<vmem>>, vector<1x16x16x4xf32>
    %10 = vector.shape_cast %9 : vector<1x16x16x4xf32> to vector<16x16x4xf32>
    %11 = vector.shape_cast %10 : vector<16x16x4xf32> to vector<256x4xf32>
    %c0_20 = arith.constant 0 : index
    %c0_21 = arith.constant 0 : index
    %c2 = arith.constant 2 : index
    %c0_22 = arith.constant 0 : index
    %12 = vector.load %arg7[%c0_20, %c0_21, %c2, %c0_22] : memref<2x18x18x4xf32, #tpu.memory_space<vmem>>, vector<1x16x16x4xf32>
    %13 = vector.shape_cast %12 : vector<1x16x16x4xf32> to vector<16x16x4xf32>
    %14 = vector.shape_cast %13 : vector<16x16x4xf32> to vector<256x4xf32>
    %c0_23 = arith.constant 0 : index
    %c1_24 = arith.constant 1 : index
    %c0_25 = arith.constant 0 : index
    %c0_26 = arith.constant 0 : index
    %15 = vector.load %arg7[%c0_23, %c1_24, %c0_25, %c0_26] : memref<2x18x18x4xf32, #tpu.memory_space<vmem>>, vector<1x16x16x4xf32>
    %16 = vector.shape_cast %15 : vector<1x16x16x4xf32> to vector<16x16x4xf32>
    %17 = vector.shape_cast %16 : vector<16x16x4xf32> to vector<256x4xf32>
    %c0_27 = arith.constant 0 : index
    %c1_28 = arith.constant 1 : index
    %c1_29 = arith.constant 1 : index
    %c0_30 = arith.constant 0 : index
    %18 = vector.load %arg7[%c0_27, %c1_28, %c1_29, %c0_30] : memref<2x18x18x4xf32, #tpu.memory_space<vmem>>, vector<1x16x16x4xf32>
    %19 = vector.shape_cast %18 : vector<1x16x16x4xf32> to vector<16x16x4xf32>
    %20 = vector.shape_cast %19 : vector<16x16x4xf32> to vector<256x4xf32>
    %c0_31 = arith.constant 0 : index
    %c1_32 = arith.constant 1 : index
    %c2_33 = arith.constant 2 : index
    %c0_34 = arith.constant 0 : index
    %21 = vector.load %arg7[%c0_31, %c1_32, %c2_33, %c0_34] : memref<2x18x18x4xf32, #tpu.memory_space<vmem>>, vector<1x16x16x4xf32>
    %22 = vector.shape_cast %21 : vector<1x16x16x4xf32> to vector<16x16x4xf32>
    %23 = vector.shape_cast %22 : vector<16x16x4xf32> to vector<256x4xf32>
    %c0_35 = arith.constant 0 : index
    %c2_36 = arith.constant 2 : index
    %c0_37 = arith.constant 0 : index
    %c0_38 = arith.constant 0 : index
    %24 = vector.load %arg7[%c0_35, %c2_36, %c0_37, %c0_38] : memref<2x18x18x4xf32, #tpu.memory_space<vmem>>, vector<1x16x16x4xf32>
    %25 = vector.shape_cast %24 : vector<1x16x16x4xf32> to vector<16x16x4xf32>
    %26 = vector.shape_cast %25 : vector<16x16x4xf32> to vector<256x4xf32>
    %c0_39 = arith.constant 0 : index
    %c2_40 = arith.constant 2 : index
    %c1_41 = arith.constant 1 : index
    %c0_42 = arith.constant 0 : index
    %27 = vector.load %arg7[%c0_39, %c2_40, %c1_41, %c0_42] : memref<2x18x18x4xf32, #tpu.memory_space<vmem>>, vector<1x16x16x4xf32>
    %28 = vector.shape_cast %27 : vector<1x16x16x4xf32> to vector<16x16x4xf32>
    %29 = vector.shape_cast %28 : vector<16x16x4xf32> to vector<256x4xf32>
    %c0_43 = arith.constant 0 : index
    %c2_44 = arith.constant 2 : index
    %c2_45 = arith.constant 2 : index
    %c0_46 = arith.constant 0 : index
    %30 = vector.load %arg7[%c0_43, %c2_44, %c2_45, %c0_46] : memref<2x18x18x4xf32, #tpu.memory_space<vmem>>, vector<1x16x16x4xf32>
    %31 = vector.shape_cast %30 : vector<1x16x16x4xf32> to vector<16x16x4xf32>
    %32 = vector.shape_cast %31 : vector<16x16x4xf32> to vector<256x4xf32>
    %33 = tpu.concatenate %8, %11, %14, %17, %20, %23, %26, %29, %32 in 1 : vector<256x4xf32>, vector<256x4xf32>, vector<256x4xf32>, vector<256x4xf32>, vector<256x4xf32>, vector<256x4xf32>, vector<256x4xf32>, vector<256x4xf32>, vector<256x4xf32> -> vector<256x36xf32>
    %c0_47 = arith.constant 0 : index
    %c0_48 = arith.constant 0 : index
    %34 = vector.load %arg2[%c0_47, %c0_48] : memref<36x8xf32, #tpu.memory_space<vmem>>, vector<36x8xf32>
    %cst_49 = arith.constant dense<0.000000e+00> : vector<256x8xf32>
    %35 = tpu.matmul %33, %34, %cst_49 {dimension_numbers = #tpu.dot_dimension_numbers<[1], [0], [0], [1], [0, 0, 1, 1], [], []>} : vector<256x36xf32>, vector<36x8xf32>, vector<256x8xf32> -> vector<256x8xf32>
    %c0_50 = arith.constant 0 : index
    %c0_51 = arith.constant 0 : index
    %36 = vector.load %arg3[%c0_50, %c0_51] : memref<1x8xf32, #tpu.memory_space<vmem>>, vector<1x8xf32>
    %37 = vector.broadcast %36 : vector<1x8xf32> to vector<256x8xf32>
    %38 = arith.addf %35, %37 : vector<256x8xf32>
    %c0_52 = arith.constant 0 : index
    %c0_53 = arith.constant 0 : index
    %c0_54 = arith.constant 0 : index
    %39 = vector.load %arg4[%c0_52, %c0_53, %c0_54] : memref<2x256x8xf32, #tpu.memory_space<vmem>>, vector<1x256x8xf32>
    %40 = vector.shape_cast %39 : vector<1x256x8xf32> to vector<256x8xf32>
    %41 = vector.shape_cast %38 : vector<256x8xf32> to vector<1x256x8xf32>
    tpu.vector_store %arg4[%c0_52, %c0_53, %c0_54], %41 {strides = array<i32>} : memref<2x256x8xf32, #tpu.memory_space<vmem>>, vector<1x256x8xf32>,
    %cst_55 = arith.constant dense<0.000000e+00> : vector<8xf32>
    %42 = vector.multi_reduction <add>, %38, %cst_55 [0] : vector<256x8xf32> to vector<8xf32>
    %43 = vector.shape_cast %42 : vector<8xf32> to vector<1x8xf32>
    %44 = arith.addf %4, %43 : vector<1x8xf32>
    %45 = arith.mulf %38, %38 : vector<256x8xf32>
    %cst_56 = arith.constant dense<0.000000e+00> : vector<8xf32>
    %46 = vector.multi_reduction <add>, %45, %cst_56 [0] : vector<256x8xf32> to vector<8xf32>
    %47 = vector.shape_cast %46 : vector<8xf32> to vector<1x8xf32>
    %48 = arith.addf %5, %47 : vector<1x8xf32>
    %c1_57 = arith.constant 1 : index
    %c0_58 = arith.constant 0 : index
    %c0_59 = arith.constant 0 : index
    %c0_60 = arith.constant 0 : index
    %49 = vector.load %arg7[%c1_57, %c0_58, %c0_59, %c0_60] : memref<2x18x18x4xf32, #tpu.memory_space<vmem>>, vector<1x16x16x4xf32>
    %50 = vector.shape_cast %49 : vector<1x16x16x4xf32> to vector<16x16x4xf32>
    %51 = vector.shape_cast %50 : vector<16x16x4xf32> to vector<256x4xf32>
    %c1_61 = arith.constant 1 : index
    %c0_62 = arith.constant 0 : index
    %c1_63 = arith.constant 1 : index
    %c0_64 = arith.constant 0 : index
    %52 = vector.load %arg7[%c1_61, %c0_62, %c1_63, %c0_64] : memref<2x18x18x4xf32, #tpu.memory_space<vmem>>, vector<1x16x16x4xf32>
    %53 = vector.shape_cast %52 : vector<1x16x16x4xf32> to vector<16x16x4xf32>
    %54 = vector.shape_cast %53 : vector<16x16x4xf32> to vector<256x4xf32>
    %c1_65 = arith.constant 1 : index
    %c0_66 = arith.constant 0 : index
    %c2_67 = arith.constant 2 : index
    %c0_68 = arith.constant 0 : index
    %55 = vector.load %arg7[%c1_65, %c0_66, %c2_67, %c0_68] : memref<2x18x18x4xf32, #tpu.memory_space<vmem>>, vector<1x16x16x4xf32>
    %56 = vector.shape_cast %55 : vector<1x16x16x4xf32> to vector<16x16x4xf32>
    %57 = vector.shape_cast %56 : vector<16x16x4xf32> to vector<256x4xf32>
    %c1_69 = arith.constant 1 : index
    %c1_70 = arith.constant 1 : index
    %c0_71 = arith.constant 0 : index
    %c0_72 = arith.constant 0 : index
    %58 = vector.load %arg7[%c1_69, %c1_70, %c0_71, %c0_72] : memref<2x18x18x4xf32, #tpu.memory_space<vmem>>, vector<1x16x16x4xf32>
    %59 = vector.shape_cast %58 : vector<1x16x16x4xf32> to vector<16x16x4xf32>
    %60 = vector.shape_cast %59 : vector<16x16x4xf32> to vector<256x4xf32>
    %c1_73 = arith.constant 1 : index
    %c1_74 = arith.constant 1 : index
    %c1_75 = arith.constant 1 : index
    %c0_76 = arith.constant 0 : index
    %61 = vector.load %arg7[%c1_73, %c1_74, %c1_75, %c0_76] : memref<2x18x18x4xf32, #tpu.memory_space<vmem>>, vector<1x16x16x4xf32>
    %62 = vector.shape_cast %61 : vector<1x16x16x4xf32> to vector<16x16x4xf32>
    %63 = vector.shape_cast %62 : vector<16x16x4xf32> to vector<256x4xf32>
    %c1_77 = arith.constant 1 : index
    %c1_78 = arith.constant 1 : index
    %c2_79 = arith.constant 2 : index
    %c0_80 = arith.constant 0 : index
    %64 = vector.load %arg7[%c1_77, %c1_78, %c2_79, %c0_80] : memref<2x18x18x4xf32, #tpu.memory_space<vmem>>, vector<1x16x16x4xf32>
    %65 = vector.shape_cast %64 : vector<1x16x16x4xf32> to vector<16x16x4xf32>
    %66 = vector.shape_cast %65 : vector<16x16x4xf32> to vector<256x4xf32>
    %c1_81 = arith.constant 1 : index
    %c2_82 = arith.constant 2 : index
    %c0_83 = arith.constant 0 : index
    %c0_84 = arith.constant 0 : index
    %67 = vector.load %arg7[%c1_81, %c2_82, %c0_83, %c0_84] : memref<2x18x18x4xf32, #tpu.memory_space<vmem>>, vector<1x16x16x4xf32>
    %68 = vector.shape_cast %67 : vector<1x16x16x4xf32> to vector<16x16x4xf32>
    %69 = vector.shape_cast %68 : vector<16x16x4xf32> to vector<256x4xf32>
    %c1_85 = arith.constant 1 : index
    %c2_86 = arith.constant 2 : index
    %c1_87 = arith.constant 1 : index
    %c0_88 = arith.constant 0 : index
    %70 = vector.load %arg7[%c1_85, %c2_86, %c1_87, %c0_88] : memref<2x18x18x4xf32, #tpu.memory_space<vmem>>, vector<1x16x16x4xf32>
    %71 = vector.shape_cast %70 : vector<1x16x16x4xf32> to vector<16x16x4xf32>
    %72 = vector.shape_cast %71 : vector<16x16x4xf32> to vector<256x4xf32>
    %c1_89 = arith.constant 1 : index
    %c2_90 = arith.constant 2 : index
    %c2_91 = arith.constant 2 : index
    %c0_92 = arith.constant 0 : index
    %73 = vector.load %arg7[%c1_89, %c2_90, %c2_91, %c0_92] : memref<2x18x18x4xf32, #tpu.memory_space<vmem>>, vector<1x16x16x4xf32>
    %74 = vector.shape_cast %73 : vector<1x16x16x4xf32> to vector<16x16x4xf32>
    %75 = vector.shape_cast %74 : vector<16x16x4xf32> to vector<256x4xf32>
    %76 = tpu.concatenate %51, %54, %57, %60, %63, %66, %69, %72, %75 in 1 : vector<256x4xf32>, vector<256x4xf32>, vector<256x4xf32>, vector<256x4xf32>, vector<256x4xf32>, vector<256x4xf32>, vector<256x4xf32>, vector<256x4xf32>, vector<256x4xf32> -> vector<256x36xf32>
    %c0_93 = arith.constant 0 : index
    %c0_94 = arith.constant 0 : index
    %77 = vector.load %arg2[%c0_93, %c0_94] : memref<36x8xf32, #tpu.memory_space<vmem>>, vector<36x8xf32>
    %cst_95 = arith.constant dense<0.000000e+00> : vector<256x8xf32>
    %78 = tpu.matmul %76, %77, %cst_95 {dimension_numbers = #tpu.dot_dimension_numbers<[1], [0], [0], [1], [0, 0, 1, 1], [], []>} : vector<256x36xf32>, vector<36x8xf32>, vector<256x8xf32> -> vector<256x8xf32>
    %c0_96 = arith.constant 0 : index
    %c0_97 = arith.constant 0 : index
    %79 = vector.load %arg3[%c0_96, %c0_97] : memref<1x8xf32, #tpu.memory_space<vmem>>, vector<1x8xf32>
    %80 = vector.broadcast %79 : vector<1x8xf32> to vector<256x8xf32>
    %81 = arith.addf %78, %80 : vector<256x8xf32>
    %c1_98 = arith.constant 1 : index
    %c0_99 = arith.constant 0 : index
    %c0_100 = arith.constant 0 : index
    %82 = vector.load %arg4[%c1_98, %c0_99, %c0_100] : memref<2x256x8xf32, #tpu.memory_space<vmem>>, vector<1x256x8xf32>
    %83 = vector.shape_cast %82 : vector<1x256x8xf32> to vector<256x8xf32>
    %84 = vector.shape_cast %81 : vector<256x8xf32> to vector<1x256x8xf32>
    tpu.vector_store %arg4[%c1_98, %c0_99, %c0_100], %84 {strides = array<i32>} : memref<2x256x8xf32, #tpu.memory_space<vmem>>, vector<1x256x8xf32>,
    %cst_101 = arith.constant dense<0.000000e+00> : vector<8xf32>
    %85 = vector.multi_reduction <add>, %81, %cst_101 [0] : vector<256x8xf32> to vector<8xf32>
    %86 = vector.shape_cast %85 : vector<8xf32> to vector<1x8xf32>
    %87 = arith.addf %44, %86 : vector<1x8xf32>
    %88 = arith.mulf %81, %81 : vector<256x8xf32>
    %cst_102 = arith.constant dense<0.000000e+00> : vector<8xf32>
    %89 = vector.multi_reduction <add>, %88, %cst_102 [0] : vector<256x8xf32> to vector<8xf32>
    %90 = vector.shape_cast %89 : vector<8xf32> to vector<1x8xf32>
    %91 = arith.addf %48, %90 : vector<1x8xf32>
    %92 = vector.shape_cast %87 : vector<1x8xf32> to vector<1x1x8xf32>
    %c0_103 = arith.constant 0 : index
    %c0_104 = arith.constant 0 : index
    %c0_105 = arith.constant 0 : index
    %93 = vector.load %arg5[%c0_103, %c0_104, %c0_105] : memref<1x1x8xf32, #tpu.memory_space<vmem>>, vector<1x1x8xf32>
    tpu.vector_store %arg5[%c0_103, %c0_104, %c0_105], %92 {strides = array<i32>} : memref<1x1x8xf32, #tpu.memory_space<vmem>>, vector<1x1x8xf32>,
    %94 = vector.shape_cast %91 : vector<1x8xf32> to vector<1x1x8xf32>
    %c0_106 = arith.constant 0 : index
    %c0_107 = arith.constant 0 : index
    %c0_108 = arith.constant 0 : index
    %95 = vector.load %arg6[%c0_106, %c0_107, %c0_108] : memref<1x1x8xf32, #tpu.memory_space<vmem>>, vector<1x1x8xf32>
    tpu.vector_store %arg6[%c0_106, %c0_107, %c0_108], %94 {strides = array<i32>} : memref<1x1x8xf32, #tpu.memory_space<vmem>>, vector<1x1x8xf32>,
    return
  }
  func.func @transform_0(%arg0: i32) -> (i32, i32, i32, i32) {
    %c0_i32 = arith.constant 0 : i32
    %c0_i32_0 = arith.constant 0 : i32
    %c0_i32_1 = arith.constant 0 : i32
    %c0_i32_2 = arith.constant 0 : i32
    return %arg0, %c0_i32, %c0_i32_0, %c0_i32_1 : i32, i32, i32, i32
  }
  func.func @transform_1(%arg0: i32) -> (i32, i32) {
    %c0_i32 = arith.constant 0 : i32
    %c0_i32_0 = arith.constant 0 : i32
    %c0_i32_1 = arith.constant 0 : i32
    return %c0_i32, %c0_i32_0 : i32, i32
  }
  func.func @transform_2(%arg0: i32) -> (i32, i32) {
    %c0_i32 = arith.constant 0 : i32
    %c0_i32_0 = arith.constant 0 : i32
    %c0_i32_1 = arith.constant 0 : i32
    return %c0_i32, %c0_i32_0 : i32, i32
  }
  func.func @transform_3(%arg0: i32) -> (i32, i32, i32) {
    %c0_i32 = arith.constant 0 : i32
    %c0_i32_0 = arith.constant 0 : i32
    %c0_i32_1 = arith.constant 0 : i32
    return %arg0, %c0_i32, %c0_i32_0 : i32, i32, i32
  }
  func.func @transform_4(%arg0: i32) -> (i32, i32, i32) {
    %c0_i32 = arith.constant 0 : i32
    %c0_i32_0 = arith.constant 0 : i32
    %c0_i32_1 = arith.constant 0 : i32
    return %arg0, %c0_i32, %c0_i32_0 : i32, i32, i32
  }
  func.func @transform_5(%arg0: i32) -> (i32, i32, i32) {
    %c0_i32 = arith.constant 0 : i32
    %c0_i32_0 = arith.constant 0 : i32
    %c0_i32_1 = arith.constant 0 : i32
    return %arg0, %c0_i32, %c0_i32_0 : i32, i32, i32
  }
}

module attributes {stable_mosaic.version = 11 : i64} {
  func.func @bn_relu_kernel(%arg0: i32, %arg1: memref<32x128xf32, #tpu.memory_space<vmem>>, %arg2: memref<1x128xf32, #tpu.memory_space<vmem>>, %arg3: memref<1x128xf32, #tpu.memory_space<vmem>>, %arg4: memref<32x128xf32, #tpu.memory_space<vmem>>) attributes {dimension_semantics = [#tpu.dimension_semantics<parallel>], iteration_bounds = array<i64: 1>, scalar_prefetch = 0 : i64, scratch_operands = 0 : i64, tpu.core_type = #tpu.core_type<tc>, window_params = [{transform_indices = @transform_0, window_bounds = array<i64: 32, 128>}, {pipeline_mode = #tpu.pipeline_mode<synchronous>, transform_indices = @transform_1, window_bounds = array<i64: 1, 128>}, {pipeline_mode = #tpu.pipeline_mode<synchronous>, transform_indices = @transform_2, window_bounds = array<i64: 1, 128>}, {transform_indices = @transform_3, window_bounds = array<i64: 32, 128>}]} {
    %c0 = arith.constant 0 : index
    %c0_0 = arith.constant 0 : index
    %0 = vector.load %arg1[%c0, %c0_0] : memref<32x128xf32, #tpu.memory_space<vmem>>, vector<32x128xf32>
    %c0_1 = arith.constant 0 : index
    %c0_2 = arith.constant 0 : index
    %1 = vector.load %arg2[%c0_1, %c0_2] : memref<1x128xf32, #tpu.memory_space<vmem>>, vector<1x128xf32>
    %2 = vector.broadcast %1 : vector<1x128xf32> to vector<32x128xf32>
    %3 = arith.mulf %0, %2 : vector<32x128xf32>
    %c0_3 = arith.constant 0 : index
    %c0_4 = arith.constant 0 : index
    %4 = vector.load %arg3[%c0_3, %c0_4] : memref<1x128xf32, #tpu.memory_space<vmem>>, vector<1x128xf32>
    %5 = vector.broadcast %4 : vector<1x128xf32> to vector<32x128xf32>
    %6 = arith.addf %3, %5 : vector<32x128xf32>
    %cst = arith.constant 0.000000e+00 : f32
    %7 = vector.broadcast %cst : f32 to vector<32x128xf32>
    %8 = arith.maximumf %6, %7 : vector<32x128xf32>
    %c0_5 = arith.constant 0 : index
    %c0_6 = arith.constant 0 : index
    %9 = vector.load %arg4[%c0_5, %c0_6] : memref<32x128xf32, #tpu.memory_space<vmem>>, vector<32x128xf32>
    tpu.vector_store %arg4[%c0_5, %c0_6], %8 {strides = array<i32>} : memref<32x128xf32, #tpu.memory_space<vmem>>, vector<32x128xf32>,
    return
  }
  func.func @transform_0(%arg0: i32) -> (i32, i32) {
    %c0_i32 = arith.constant 0 : i32
    %c0_i32_0 = arith.constant 0 : i32
    return %arg0, %c0_i32 : i32, i32
  }
  func.func @transform_1(%arg0: i32) -> (i32, i32) {
    %c0_i32 = arith.constant 0 : i32
    %c0_i32_0 = arith.constant 0 : i32
    %c0_i32_1 = arith.constant 0 : i32
    return %c0_i32, %c0_i32_0 : i32, i32
  }
  func.func @transform_2(%arg0: i32) -> (i32, i32) {
    %c0_i32 = arith.constant 0 : i32
    %c0_i32_0 = arith.constant 0 : i32
    %c0_i32_1 = arith.constant 0 : i32
    return %c0_i32, %c0_i32_0 : i32, i32
  }
  func.func @transform_3(%arg0: i32) -> (i32, i32) {
    %c0_i32 = arith.constant 0 : i32
    %c0_i32_0 = arith.constant 0 : i32
    return %arg0, %c0_i32 : i32, i32
  }
}

</mosaic_0001>

<llo_original>
// kernel: tile.18
$region0: #{tile.18}
  #allocation0 [shape = 's32[1]{0}', space=sflag, size = 0x4, scoped, tag = 'scoped memory for tile.18']
  %s0 = inlined_call_operand.vmem [shape: f32[8], index: 0, kind: input, shape index: {}]
  %s1 = inlined_call_operand.vmem [shape: f32[16,8], index: 1, kind: output, shape index: {}]
  // Predicated region
  $region2: #{tile.18} parent=0 // pred_check
    _
  $region3: #{tile.18} parent=0 // pred_check_branch
    %3 = sbr.rel (0) target = $region5
  $region4: #{tile.18} parent=0 // pred_region
    _
  $region5: #{tile.18} parent=0 // pred_fallthru
    _
  %v4 = vld [vmem:[%s0] ss:$0 sm:$0xff]
  %5 = vst [vmem:[%s1] sm:$0xff] %v4
  %s6 = scalar_lea.vmem %s1, 8
  %7 = vst [vmem:[%s6] sm:$0xff] %v4

// kernel: tile.19
$region0: #{tile.19}
  %s0 = inlined_call_operand.vmem [shape: f32[16,8], index: 0, kind: input, shape index: {}]
  %s1 = inlined_call_operand.vmem [shape: f32[1,128], index: 1, kind: output, shape index: {}]
  $region1: #{tile.19} parent=0
    #allocation0 [shape = 'u8[4096]{0}', space=vmem, size = 0x1000, scoped, tag = 'scoped mem for output reshape']
    %v2 = vld [vmem:[%s0] sm:$0x1]
    %vm3 = vcmask 64512
    %4 = vst.msk [vmem:[#allocation0] sm:$0x1] %vm3, %v2
    %s5 = scalar_lea.vmem %s0, 15
    %v6 = vld [vmem:[%s5] sm:$0x1]
    %7 = vrot.lane.b32.xlu0 %v6, 120
    %v8 = vpop.permute.xlu0 %7
    %vm9 = vcmask 1048512
    %10 = vst.msk [vmem:[#allocation0] sm:$0x1] %vm9, %v8
    %s11 = scalar_lea.vmem %s0, 14
    %v12 = vld [vmem:[%s11] sm:$0x1]
    %13 = vrot.lane.b32.xlu0 %v12, 112
    %v14 = vpop.permute.xlu0 %13
    %vm15 = vcmask 982912
    %16 = vst.msk [vmem:[#allocation0] sm:$0x1] %vm15, %v14
    %s17 = scalar_lea.vmem %s0, 13
    %v18 = vld [vmem:[%s17] sm:$0x1]
    %19 = vrot.lane.b32.xlu0 %v18, 104
    %v20 = vpop.permute.xlu0 %19
    %vm21 = vcmask 917312
    %22 = vst.msk [vmem:[#allocation0] sm:$0x1] %vm21, %v20
    %s23 = scalar_lea.vmem %s0, 12
    %v24 = vld [vmem:[%s23] sm:$0x1]
    %25 = vrot.lane.b32.xlu0 %v24, 96
    %v26 = vpop.permute.xlu0 %25
    %vm27 = vcmask 851712
    %28 = vst.msk [vmem:[#allocation0] sm:$0x1] %vm27, %v26
    %s29 = scalar_lea.vmem %s0, 11
    %v30 = vld [vmem:[%s29] sm:$0x1]
    %31 = vrot.lane.b32.xlu0 %v30, 88
    %v32 = vpop.permute.xlu0 %31
    %vm33 = vcmask 786112
    %34 = vst.msk [vmem:[#allocation0] sm:$0x1] %vm33, %v32
    %s35 = scalar_lea.vmem %s0, 10
    %v36 = vld [vmem:[%s35] sm:$0x1]
    %37 = vrot.lane.b32.xlu0 %v36, 80
    %v38 = vpop.permute.xlu0 %37
    %vm39 = vcmask 720512
    %40 = vst.msk [vmem:[#allocation0] sm:$0x1] %vm39, %v38
    %s41 = scalar_lea.vmem %s0, 9
    %v42 = vld [vmem:[%s41] sm:$0x1]
    %43 = vrot.lane.b32.xlu0 %v42, 72
    %v44 = vpop.permute.xlu0 %43
    %vm45 = vcmask 654912
    %46 = vst.msk [vmem:[#allocation0] sm:$0x1] %vm45, %v44
    %s47 = scalar_lea.vmem %s0, 8
    %v48 = vld [vmem:[%s47] sm:$0x1]
    %49 = vrot.lane.b32.xlu0 %v48, 64
    %v50 = vpop.permute.xlu0 %49
    %vm51 = vcmask 589312
    %52 = vst.msk [vmem:[#allocation0] sm:$0x1] %vm51, %v50
    %s53 = scalar_lea.vmem %s0, 7
    %v54 = vld [vmem:[%s53] sm:$0x1]
    %55 = vrot.lane.b32.xlu0 %v54, 56
    %v56 = vpop.permute.xlu0 %55
    %vm57 = vcmask 523712
    %58 = vst.msk [vmem:[#allocation0] sm:$0x1] %vm57, %v56
    %s59 = scalar_lea.vmem %s0, 6
    %v60 = vld [vmem:[%s59] sm:$0x1]
    %61 = vrot.lane.b32.xlu0 %v60, 48
    %v62 = vpop.permute.xlu0 %61
    %vm63 = vcmask 458112
    %64 = vst.msk [vmem:[#allocation0] sm:$0x1] %vm63, %v62
    %s65 = scalar_lea.vmem %s0, 5
    %v66 = vld [vmem:[%s65] sm:$0x1]
    %67 = vrot.lane.b32.xlu0 %v66, 40
    %v68 = vpop.permute.xlu0 %67
    %vm69 = vcmask 392512
    %70 = vst.msk [vmem:[#allocation0] sm:$0x1] %vm69, %v68
    %s71 = scalar_lea.vmem %s0, 4
    %v72 = vld [vmem:[%s71] sm:$0x1]
    %73 = vrot.lane.b32.xlu0 %v72, 32
    %v74 = vpop.permute.xlu0 %73
    %vm75 = vcmask 326912
    %76 = vst.msk [vmem:[#allocation0] sm:$0x1] %vm75, %v74
    %s77 = scalar_lea.vmem %s0, 3
    %v78 = vld [vmem:[%s77] sm:$0x1]
    %79 = vrot.lane.b32.xlu0 %v78, 24
    %v80 = vpop.permute.xlu0 %79
    %vm81 = vcmask 261312
    %82 = vst.msk [vmem:[#allocation0] sm:$0x1] %vm81, %v80
    %s83 = scalar_lea.vmem %s0, 2
    %v84 = vld [vmem:[%s83] sm:$0x1]
    %85 = vrot.lane.b32.xlu0 %v84, 16
    %v86 = vpop.permute.xlu0 %85
    %vm87 = vcmask 195712
    %88 = vst.msk [vmem:[#allocation0] sm:$0x1] %vm87, %v86
    %s89 = scalar_lea.vmem %s0, 1
    %v90 = vld [vmem:[%s89] sm:$0x1]
    %91 = vrot.lane.b32.xlu0 %v90, 8
    %v92 = vpop.permute.xlu0 %91
    %vm93 = vcmask 130112
    %94 = vst.msk [vmem:[#allocation0] sm:$0x1] %vm93, %v92
    %s96 = ssub.s32 2, 1
    %v97 = vld [vmem:[#allocation0] sm:%s96]
    %s99 = ssub.s32 2, 1
    %100 = vst [vmem:[%s1] sm:%s99] %v97

// kernel: cbn_forward.3
$region0: #{cbn_forward.3}
  #allocation0 [shape = 'u32[]', space=smem, size = 0x4, offset = 0x4, fixed_abs, tag = 'smem constant byte address 0x4 - core index']
  #allocation1 [shape = 'u32[72,128]{1,0:T(1,128)}', space=vmem, size = 0x9000, scoped, tag = 'internal scratch']
  %s0 = inlined_call_operand.vmem [shape: f32[32,128], index: 0, kind: input, shape index: {}, may-alias: {0,3}]
  %s1 = inlined_call_operand.vmem [shape: f32[1,128], index: 1, kind: input, shape index: {}]
  %s2 = inlined_call_operand.vmem [shape: f32[1,128], index: 2, kind: input, shape index: {}]
  %s3 = inlined_call_operand.vmem [shape: f32[32,128], index: 3, kind: output, shape index: {}, may-alias: {0,3}]
  %s4 = sld [smem:[#allocation0]]
  $region22: #{cbn_forward.3} parent=0
    _
  %s6 = ssub.s32 1, %s4
  %s7 = scalar_select 0, %s6, %s4
  // Predicated region
  $region2: #{cbn_forward.3} parent=0 // pred_check
    _
  $region3: #{cbn_forward.3} parent=0 // pred_check_branch
    %9 = sbr.rel (0) target = $region5
  $region4: #{cbn_forward.3} parent=0 // pred_region
    _
  $region5: #{cbn_forward.3} parent=0 // pred_fallthru
    _
  // Predicated region
  $region6: #{cbn_forward.3} parent=0 // pred_check
    _
  $region7: #{cbn_forward.3} parent=0 // pred_check_branch
    %11 = sbr.rel (0) target = $region9
  $region8: #{cbn_forward.3} parent=0 // pred_region
    _
  $region9: #{cbn_forward.3} parent=0 // pred_fallthru
    _
  // Predicated region
  $region10: #{cbn_forward.3} parent=0 // pred_check
    _
  $region11: #{cbn_forward.3} parent=0 // pred_check_branch
    %13 = sbr.rel (0) target = $region13
  $region12: #{cbn_forward.3} parent=0 // pred_region
    _
  $region13: #{cbn_forward.3} parent=0 // pred_fallthru
    _
  %v14 = vld [vmem:[%s0] sm:$0xff]
  %v15 = vld [vmem:[%s0 + $0x8] sm:$0xff]
  %v16 = vld [vmem:[%s0 + $0x10] sm:$0xff]
  %v17 = vld [vmem:[%s0 + $0x18] sm:$0xff]
  %v18 = vld [vmem:[%s1] sm:$0x1]
  %v20 = vperm.slane %v18, 0
  %v22 = vmul.f32 %v14, %v20
  %v23 = vmul.f32 %v15, %v20
  %v24 = vmul.f32 %v16, %v20
  %v25 = vmul.f32 %v17, %v20
  %v26 = vld [vmem:[%s2] sm:$0x1]
  %v28 = vperm.slane %v26, 0
  %v30 = vadd.f32 %v22, %v28
  %v31 = vadd.f32 %v23, %v28
  %v32 = vadd.f32 %v24, %v28
  %v33 = vadd.f32 %v25, %v28
  %v34 = vmax.f32 %v30, 0.0
  %v35 = vmax.f32 %v31, 0.0
  %v36 = vmax.f32 %v32, 0.0
  %v37 = vmax.f32 %v33, 0.0
  %38 = vst [vmem:[%s3] sm:$0xff] %v34
  %39 = vst [vmem:[%s3 + $0x8] sm:$0xff] %v35
  %40 = vst [vmem:[%s3 + $0x10] sm:$0xff] %v36
  %41 = vst [vmem:[%s3 + $0x18] sm:$0xff] %v37
  // Predicated region
  $region14: #{cbn_forward.3} parent=0 // pred_check
    _
  $region15: #{cbn_forward.3} parent=0 // pred_check_branch
    %43 = sbr.rel (0) target = $region17
  $region16: #{cbn_forward.3} parent=0 // pred_region
    _
  $region17: #{cbn_forward.3} parent=0 // pred_fallthru
    _
  // Predicated region
  $region18: #{cbn_forward.3} parent=0 // pred_check
    _
  $region19: #{cbn_forward.3} parent=0 // pred_check_branch
    %45 = sbr.rel (0) target = $region21
  $region20: #{cbn_forward.3} parent=0 // pred_region
    _
  $region21: #{cbn_forward.3} parent=0 // pred_fallthru
    _

// kernel: cbn_forward.2
$region0: #{cbn_forward.2}
  #allocation0 [shape = 'u32[]', space=smem, size = 0x4, offset = 0x4, fixed_abs, tag = 'smem constant byte address 0x4 - core index']
  #allocation1 [shape = 'u32[72,128]{1,0:T(1,128)}', space=vmem, size = 0x9000, scoped, tag = 'internal scratch']
  #allocation2 [shape = 'f32[2,18,18,4]{3,2,1,0:T(8,128)}', space=vmem, size = 0x6c000, scoped, tag = 'scratch operand']
  %s0 = inlined_call_operand.vmem [shape: f32[2,16,16,4], index: 0, kind: input, shape index: {}]
  %s1 = inlined_call_operand.vmem [shape: f32[36,8], index: 1, kind: input, shape index: {}]
  %s2 = inlined_call_operand.vmem [shape: f32[1,8], index: 2, kind: input, shape index: {}]
  %s3 = inlined_call_operand.vmem [shape: f32[2,256,8], index: 3, kind: output, shape index: {0}]
  %s4 = inlined_call_operand.vmem [shape: f32[1,1,8], index: 4, kind: output, shape index: {1}]
  %s5 = inlined_call_operand.vmem [shape: f32[1,1,8], index: 5, kind: output, shape index: {2}]
  %6 = xla_tuple %s3, %s4, %s5
  %s7 = sld [smem:[#allocation0]]
  $region38: #{cbn_forward.2} parent=0
    _
  %s9 = ssub.s32 1, %s7
  %s10 = scalar_select 0, %s9, %s7
  // Predicated region
  $region2: #{cbn_forward.2} parent=0 // pred_check
    _
  $region3: #{cbn_forward.2} parent=0 // pred_check_branch
    %12 = sbr.rel (0) target = $region5
  $region4: #{cbn_forward.2} parent=0 // pred_region
    _
  $region5: #{cbn_forward.2} parent=0 // pred_fallthru
    _
  // Predicated region
  $region6: #{cbn_forward.2} parent=0 // pred_check
    _
  $region7: #{cbn_forward.2} parent=0 // pred_check_branch
    %14 = sbr.rel (0) target = $region9
  $region8: #{cbn_forward.2} parent=0 // pred_region
    _
  $region9: #{cbn_forward.2} parent=0 // pred_fallthru
    _
  // Predicated region
  $region10: #{cbn_forward.2} parent=0 // pred_check
    _
  $region11: #{cbn_forward.2} parent=0 // pred_check_branch
    %16 = sbr.rel (0) target = $region13
  $region12: #{cbn_forward.2} parent=0 // pred_region
    _
  $region13: #{cbn_forward.2} parent=0 // pred_fallthru
    _
  %vm17 = vcmask 31744
  %18 = vst.msk [vmem:[#allocation2] sm:$0xff] %vm17, 0.0
  %19 = vst.msk [vmem:[#allocation2 + $0x8] sm:$0xff] %vm17, 0.0
  %vm20 = vcmask 25600
  %21 = vst.msk [vmem:[#allocation2 + $0x10] sm:$0x3] %vm20, 0.0
  %22 = vst.msk [vmem:[#allocation2 + $0x18] sm:$0xff] %vm17, 0.0
  %23 = vst.msk [vmem:[#allocation2 + $0x20] sm:$0xff] %vm17, 0.0
  %24 = vst.msk [vmem:[#allocation2 + $0x28] sm:$0x3] %vm20, 0.0
  %25 = vst.msk [vmem:[#allocation2 + $0x30] sm:$0xff] %vm17, 0.0
  %26 = vst.msk [vmem:[#allocation2 + $0x38] sm:$0xff] %vm17, 0.0
  %27 = vst.msk [vmem:[#allocation2 + $0x40] sm:$0x3] %vm20, 0.0
  %28 = vst.msk [vmem:[#allocation2 + $0x48] sm:$0xff] %vm17, 0.0
  %29 = vst.msk [vmem:[#allocation2 + $0x50] sm:$0xff] %vm17, 0.0
  %30 = vst.msk [vmem:[#allocation2 + $0x58] sm:$0x3] %vm20, 0.0
  %31 = vst.msk [vmem:[#allocation2 + $0x60] sm:$0xff] %vm17, 0.0
  %32 = vst.msk [vmem:[#allocation2 + $0x68] sm:$0xff] %vm17, 0.0
  %33 = vst.msk [vmem:[#allocation2 + $0x70] sm:$0x3] %vm20, 0.0
  %34 = vst.msk [vmem:[#allocation2 + $0x78] sm:$0xff] %vm17, 0.0
  %35 = vst.msk [vmem:[#allocation2 + $0x80] sm:$0xff] %vm17, 0.0
  %36 = vst.msk [vmem:[#allocation2 + $0x88] sm:$0x3] %vm20, 0.0
  %37 = vst.msk [vmem:[#allocation2 + $0x90] sm:$0xff] %vm17, 0.0
  %38 = vst.msk [vmem:[#allocation2 + $0x98] sm:$0xff] %vm17, 0.0
  %39 = vst.msk [vmem:[#allocation2 + $0xa0] sm:$0x3] %vm20, 0.0
  %40 = vst.msk [vmem:[#allocation2 + $0xa8] sm:$0xff] %vm17, 0.0
  %41 = vst.msk [vmem:[#allocation2 + $0xb0] sm:$0xff] %vm17, 0.0
  %42 = vst.msk [vmem:[#allocation2 + $0xb8] sm:$0x3] %vm20, 0.0
  %43 = vst.msk [vmem:[#allocation2 + $0xc0] sm:$0xff] %vm17, 0.0
  %44 = vst.msk [vmem:[#allocation2 + $0xc8] sm:$0xff] %vm17, 0.0
  %45 = vst.msk [vmem:[#allocation2 + $0xd0] sm:$0x3] %vm20, 0.0
  %46 = vst.msk [vmem:[#allocation2 + $0xd8] sm:$0xff] %vm17, 0.0
  %47 = vst.msk [vmem:[#allocation2 + $0xe0] sm:$0xff] %vm17, 0.0
  %48 = vst.msk [vmem:[#allocation2 + $0xe8] sm:$0x3] %vm20, 0.0
  %49 = vst.msk [vmem:[#allocation2 + $0xf0] sm:$0xff] %vm17, 0.0
  %50 = vst.msk [vmem:[#allocation2 + $0xf8] sm:$0xff] %vm17, 0.0
  %51 = vst.msk [vmem:[#allocation2 + $0x100] sm:$0x3] %vm20, 0.0
  %52 = vst.msk [vmem:[#allocation2 + $0x108] sm:$0xff] %vm17, 0.0
  %53 = vst.msk [vmem:[#allocation2 + $0x110] sm:$0xff] %vm17, 0.0
  %54 = vst.msk [vmem:[#allocation2 + $0x118] sm:$0x3] %vm20, 0.0
  %55 = vst.msk [vmem:[#allocation2 + $0x120] sm:$0xff] %vm17, 0.0
  %56 = vst.msk [vmem:[#allocation2 + $0x128] sm:$0xff] %vm17, 0.0
  %57 = vst.msk [vmem:[#allocation2 + $0x130] sm:$0x3] %vm20, 0.0
  %58 = vst.msk [vmem:[#allocation2 + $0x138] sm:$0xff] %vm17, 0.0
  %59 = vst.msk [vmem:[#allocation2 + $0x140] sm:$0xff] %vm17, 0.0
  %60 = vst.msk [vmem:[#allocation2 + $0x148] sm:$0x3] %vm20, 0.0
  %61 = vst.msk [vmem:[#allocation2 + $0x150] sm:$0xff] %vm17, 0.0
  %62 = vst.msk [vmem:[#allocation2 + $0x158] sm:$0xff] %vm17, 0.0
  %63 = vst.msk [vmem:[#allocation2 + $0x160] sm:$0x3] %vm20, 0.0
  %64 = vst.msk [vmem:[#allocation2 + $0x168] sm:$0xff] %vm17, 0.0
  %65 = vst.msk [vmem:[#allocation2 + $0x170] sm:$0xff] %vm17, 0.0
  %66 = vst.msk [vmem:[#allocation2 + $0x178] sm:$0x3] %vm20, 0.0
  %67 = vst.msk [vmem:[#allocation2 + $0x180] sm:$0xff] %vm17, 0.0
  %68 = vst.msk [vmem:[#allocation2 + $0x188] sm:$0xff] %vm17, 0.0
  %69 = vst.msk [vmem:[#allocation2 + $0x190] sm:$0x3] %vm20, 0.0
  %70 = vst.msk [vmem:[#allocation2 + $0x198] sm:$0xff] %vm17, 0.0
  %71 = vst.msk [vmem:[#allocation2 + $0x1a0] sm:$0xff] %vm17, 0.0
  %72 = vst.msk [vmem:[#allocation2 + $0x1a8] sm:$0x3] %vm20, 0.0
  %73 = vst.msk [vmem:[#allocation2 + $0x1b0] sm:$0xff] %vm17, 0.0
  %74 = vst.msk [vmem:[#allocation2 + $0x1b8] sm:$0xff] %vm17, 0.0
  %75 = vst.msk [vmem:[#allocation2 + $0x1c0] sm:$0x3] %vm20, 0.0
  %76 = vst.msk [vmem:[#allocation2 + $0x1c8] sm:$0xff] %vm17, 0.0
  %77 = vst.msk [vmem:[#allocation2 + $0x1d0] sm:$0xff] %vm17, 0.0
  %78 = vst.msk [vmem:[#allocation2 + $0x1d8] sm:$0x3] %vm20, 0.0
  %79 = vst.msk [vmem:[#allocation2 + $0x1e0] sm:$0xff] %vm17, 0.0
  %80 = vst.msk [vmem:[#allocation2 + $0x1e8] sm:$0xff] %vm17, 0.0
  %81 = vst.msk [vmem:[#allocation2 + $0x1f0] sm:$0x3] %vm20, 0.0
  %82 = vst.msk [vmem:[#allocation2 + $0x1f8] sm:$0xff] %vm17, 0.0
  %83 = vst.msk [vmem:[#allocation2 + $0x200] sm:$0xff] %vm17, 0.0
  %84 = vst.msk [vmem:[#allocation2 + $0x208] sm:$0x3] %vm20, 0.0
  %85 = vst.msk [vmem:[#allocation2 + $0x210] sm:$0xff] %vm17, 0.0
  %86 = vst.msk [vmem:[#allocation2 + $0x218] sm:$0xff] %vm17, 0.0
  %87 = vst.msk [vmem:[#allocation2 + $0x220] sm:$0x3] %vm20, 0.0
  %88 = vst.msk [vmem:[#allocation2 + $0x228] sm:$0xff] %vm17, 0.0
  %89 = vst.msk [vmem:[#allocation2 + $0x230] sm:$0xff] %vm17, 0.0
  %90 = vst.msk [vmem:[#allocation2 + $0x238] sm:$0x3] %vm20, 0.0
  %91 = vst.msk [vmem:[#allocation2 + $0x240] sm:$0xff] %vm17, 0.0
  %92 = vst.msk [vmem:[#allocation2 + $0x248] sm:$0xff] %vm17, 0.0
  %93 = vst.msk [vmem:[#allocation2 + $0x250] sm:$0x3] %vm20, 0.0
  %94 = vst.msk [vmem:[#allocation2 + $0x258] sm:$0xff] %vm17, 0.0
  %95 = vst.msk [vmem:[#allocation2 + $0x260] sm:$0xff] %vm17, 0.0
  %96 = vst.msk [vmem:[#allocation2 + $0x268] sm:$0x3] %vm20, 0.0
  %97 = vst.msk [vmem:[#allocation2 + $0x270] sm:$0xff] %vm17, 0.0
  %98 = vst.msk [vmem:[#allocation2 + $0x278] sm:$0xff] %vm17, 0.0
  %99 = vst.msk [vmem:[#allocation2 + $0x280] sm:$0x3] %vm20, 0.0
  %100 = vst.msk [vmem:[#allocation2 + $0x288] sm:$0xff] %vm17, 0.0
  %101 = vst.msk [vmem:[#allocation2 + $0x290] sm:$0xff] %vm17, 0.0
  %102 = vst.msk [vmem:[#allocation2 + $0x298] sm:$0x3] %vm20, 0.0
  %103 = vst.msk [vmem:[#allocation2 + $0x2a0] sm:$0xff] %vm17, 0.0
  %104 = vst.msk [vmem:[#allocation2 + $0x2a8] sm:$0xff] %vm17, 0.0
  %105 = vst.msk [vmem:[#allocation2 + $0x2b0] sm:$0x3] %vm20, 0.0
  %106 = vst.msk [vmem:[#allocation2 + $0x2b8] sm:$0xff] %vm17, 0.0
  %107 = vst.msk [vmem:[#allocation2 + $0x2c0] sm:$0xff] %vm17, 0.0
  %108 = vst.msk [vmem:[#allocation2 + $0x2c8] sm:$0x3] %vm20, 0.0
  %109 = vst.msk [vmem:[#allocation2 + $0x2d0] sm:$0xff] %vm17, 0.0
  %110 = vst.msk [vmem:[#allocation2 + $0x2d8] sm:$0xff] %vm17, 0.0
  %111 = vst.msk [vmem:[#allocation2 + $0x2e0] sm:$0x3] %vm20, 0.0
  %112 = vst.msk [vmem:[#allocation2 + $0x2e8] sm:$0xff] %vm17, 0.0
  %113 = vst.msk [vmem:[#allocation2 + $0x2f0] sm:$0xff] %vm17, 0.0
  %114 = vst.msk [vmem:[#allocation2 + $0x2f8] sm:$0x3] %vm20, 0.0
  %115 = vst.msk [vmem:[#allocation2 + $0x300] sm:$0xff] %vm17, 0.0
  %116 = vst.msk [vmem:[#allocation2 + $0x308] sm:$0xff] %vm17, 0.0
  %117 = vst.msk [vmem:[#allocation2 + $0x310] sm:$0x3] %vm20, 0.0
  %118 = vst.msk [vmem:[#allocation2 + $0x318] sm:$0xff] %vm17, 0.0
  %119 = vst.msk [vmem:[#allocation2 + $0x320] sm:$0xff] %vm17, 0.0
  %120 = vst.msk [vmem:[#allocation2 + $0x328] sm:$0x3] %vm20, 0.0
  %121 = vst.msk [vmem:[#allocation2 + $0x330] sm:$0xff] %vm17, 0.0
  %122 = vst.msk [vmem:[#allocation2 + $0x338] sm:$0xff] %vm17, 0.0
  %123 = vst.msk [vmem:[#allocation2 + $0x340] sm:$0x3] %vm20, 0.0
  %124 = vst.msk [vmem:[#allocation2 + $0x348] sm:$0xff] %vm17, 0.0
  %125 = vst.msk [vmem:[#allocation2 + $0x350] sm:$0xff] %vm17, 0.0
  %126 = vst.msk [vmem:[#allocation2 + $0x358] sm:$0x3] %vm20, 0.0
  %v127 = vld [vmem:[%s0] sm:$0xff]
  %v128 = vld [vmem:[%s0 + $0x8] sm:$0xff]
  %v129 = vld [vmem:[%s0 + $0x10] sm:$0xff]
  %v130 = vld [vmem:[%s0 + $0x18] sm:$0xff]
  %v131 = vld [vmem:[%s0 + $0x20] sm:$0xff]
  %v132 = vld [vmem:[%s0 + $0x28] sm:$0xff]
  %v133 = vld [vmem:[%s0 + $0x30] sm:$0xff]
  %v134 = vld [vmem:[%s0 + $0x38] sm:$0xff]
  %v135 = vld [vmem:[%s0 + $0x40] sm:$0xff]
  %v136 = vld [vmem:[%s0 + $0x48] sm:$0xff]
  %v137 = vld [vmem:[%s0 + $0x50] sm:$0xff]
  %v138 = vld [vmem:[%s0 + $0x58] sm:$0xff]
  %v139 = vld [vmem:[%s0 + $0x60] sm:$0xff]
  %v140 = vld [vmem:[%s0 + $0x68] sm:$0xff]
  %v141 = vld [vmem:[%s0 + $0x70] sm:$0xff]
  %v142 = vld [vmem:[%s0 + $0x78] sm:$0xff]
  %v143 = vld [vmem:[%s0 + $0x80] sm:$0xff]
  %v144 = vld [vmem:[%s0 + $0x88] sm:$0xff]
  %v145 = vld [vmem:[%s0 + $0x90] sm:$0xff]
  %v146 = vld [vmem:[%s0 + $0x98] sm:$0xff]
  %v147 = vld [vmem:[%s0 + $0xa0] sm:$0xff]
  %v148 = vld [vmem:[%s0 + $0xa8] sm:$0xff]
  %v149 = vld [vmem:[%s0 + $0xb0] sm:$0xff]
  %v150 = vld [vmem:[%s0 + $0xb8] sm:$0xff]
  %v151 = vld [vmem:[%s0 + $0xc0] sm:$0xff]
  %v152 = vld [vmem:[%s0 + $0xc8] sm:$0xff]
  %v153 = vld [vmem:[%s0 + $0xd0] sm:$0xff]
  %v154 = vld [vmem:[%s0 + $0xd8] sm:$0xff]
  %v155 = vld [vmem:[%s0 + $0xe0] sm:$0xff]
  %v156 = vld [vmem:[%s0 + $0xe8] sm:$0xff]
  %v157 = vld [vmem:[%s0 + $0xf0] sm:$0xff]
  %v158 = vld [vmem:[%s0 + $0xf8] sm:$0xff]
  %v159 = vld [vmem:[%s0 + $0x100] sm:$0xff]
  %v160 = vld [vmem:[%s0 + $0x108] sm:$0xff]
  %v161 = vld [vmem:[%s0 + $0x110] sm:$0xff]
  %v162 = vld [vmem:[%s0 + $0x118] sm:$0xff]
  %v163 = vld [vmem:[%s0 + $0x120] sm:$0xff]
  %v164 = vld [vmem:[%s0 + $0x128] sm:$0xff]
  %v165 = vld [vmem:[%s0 + $0x130] sm:$0xff]
  %v166 = vld [vmem:[%s0 + $0x138] sm:$0xff]
  %v167 = vld [vmem:[%s0 + $0x140] sm:$0xff]
  %v168 = vld [vmem:[%s0 + $0x148] sm:$0xff]
  %v169 = vld [vmem:[%s0 + $0x150] sm:$0xff]
  %v170 = vld [vmem:[%s0 + $0x158] sm:$0xff]
  %v171 = vld [vmem:[%s0 + $0x160] sm:$0xff]
  %v172 = vld [vmem:[%s0 + $0x168] sm:$0xff]
  %v173 = vld [vmem:[%s0 + $0x170] sm:$0xff]
  %v174 = vld [vmem:[%s0 + $0x178] sm:$0xff]
  %v175 = vld [vmem:[%s0 + $0x180] sm:$0xff]
  %v176 = vld [vmem:[%s0 + $0x188] sm:$0xff]
  %v177 = vld [vmem:[%s0 + $0x190] sm:$0xff]
  %v178 = vld [vmem:[%s0 + $0x198] sm:$0xff]
  %v179 = vld [vmem:[%s0 + $0x1a0] sm:$0xff]
  %v180 = vld [vmem:[%s0 + $0x1a8] sm:$0xff]
  %v181 = vld [vmem:[%s0 + $0x1b0] sm:$0xff]
  %v182 = vld [vmem:[%s0 + $0x1b8] sm:$0xff]
  %v183 = vld [vmem:[%s0 + $0x1c0] sm:$0xff]
  %v184 = vld [vmem:[%s0 + $0x1c8] sm:$0xff]
  %v185 = vld [vmem:[%s0 + $0x1d0] sm:$0xff]
  %v186 = vld [vmem:[%s0 + $0x1d8] sm:$0xff]
  %v187 = vld [vmem:[%s0 + $0x1e0] sm:$0xff]
  %v188 = vld [vmem:[%s0 + $0x1e8] sm:$0xff]
  %v189 = vld [vmem:[%s0 + $0x1f0] sm:$0xff]
  %v190 = vld [vmem:[%s0 + $0x1f8] sm:$0xff]
  %s191 = scalar_lea.vmem [#allocation2], 24
  %192 = vst.msk [vmem:[%s191 + $0x1] sm:$0xff] %vm17, %v127
  %193 = vst.msk [vmem:[%s191 + $0x9] sm:$0xff] %vm17, %v128
  %194 = vst.msk [vmem:[%s191 + $0x19] sm:$0xff] %vm17, %v129
  %195 = vst.msk [vmem:[%s191 + $0x21] sm:$0xff] %vm17, %v130
  %196 = vst.msk [vmem:[%s191 + $0x31] sm:$0xff] %vm17, %v131
  %197 = vst.msk [vmem:[%s191 + $0x39] sm:$0xff] %vm17, %v132
  %198 = vst.msk [vmem:[%s191 + $0x49] sm:$0xff] %vm17, %v133
  %199 = vst.msk [vmem:[%s191 + $0x51] sm:$0xff] %vm17, %v134
  %200 = vst.msk [vmem:[%s191 + $0x61] sm:$0xff] %vm17, %v135
  %201 = vst.msk [vmem:[%s191 + $0x69] sm:$0xff] %vm17, %v136
  %202 = vst.msk [vmem:[%s191 + $0x79] sm:$0xff] %vm17, %v137
  %203 = vst.msk [vmem:[%s191 + $0x81] sm:$0xff] %vm17, %v138
  %204 = vst.msk [vmem:[%s191 + $0x91] sm:$0xff] %vm17, %v139
  %205 = vst.msk [vmem:[%s191 + $0x99] sm:$0xff] %vm17, %v140
  %206 = vst.msk [vmem:[%s191 + $0xa9] sm:$0xff] %vm17, %v141
  %207 = vst.msk [vmem:[%s191 + $0xb1] sm:$0xff] %vm17, %v142
  %208 = vst.msk [vmem:[%s191 + $0xc1] sm:$0xff] %vm17, %v143
  %209 = vst.msk [vmem:[%s191 + $0xc9] sm:$0xff] %vm17, %v144
  %210 = vst.msk [vmem:[%s191 + $0xd9] sm:$0xff] %vm17, %v145
  %211 = vst.msk [vmem:[%s191 + $0xe1] sm:$0xff] %vm17, %v146
  %212 = vst.msk [vmem:[%s191 + $0xf1] sm:$0xff] %vm17, %v147
  %213 = vst.msk [vmem:[%s191 + $0xf9] sm:$0xff] %vm17, %v148
  %214 = vst.msk [vmem:[%s191 + $0x109] sm:$0xff] %vm17, %v149
  %215 = vst.msk [vmem:[%s191 + $0x111] sm:$0xff] %vm17, %v150
  %216 = vst.msk [vmem:[%s191 + $0x121] sm:$0xff] %vm17, %v151
  %217 = vst.msk [vmem:[%s191 + $0x129] sm:$0xff] %vm17, %v152
  %218 = vst.msk [vmem:[%s191 + $0x139] sm:$0xff] %vm17, %v153
  %219 = vst.msk [vmem:[%s191 + $0x141] sm:$0xff] %vm17, %v154
  %220 = vst.msk [vmem:[%s191 + $0x151] sm:$0xff] %vm17, %v155
  %221 = vst.msk [vmem:[%s191 + $0x159] sm:$0xff] %vm17, %v156
  %222 = vst.msk [vmem:[%s191 + $0x169] sm:$0xff] %vm17, %v157
  %223 = vst.msk [vmem:[%s191 + $0x171] sm:$0xff] %vm17, %v158
  %224 = vst.msk [vmem:[%s191 + $0x1b1] sm:$0xff] %vm17, %v159
  %225 = vst.msk [vmem:[%s191 + $0x1b9] sm:$0xff] %vm17, %v160
  %226 = vst.msk [vmem:[%s191 + $0x1c9] sm:$0xff] %vm17, %v161
  %227 = vst.msk [vmem:[%s191 + $0x1d1] sm:$0xff] %vm17, %v162
  %228 = vst.msk [vmem:[%s191 + $0x1e1] sm:$0xff] %vm17, %v163
  %229 = vst.msk [vmem:[%s191 + $0x1e9] sm:$0xff] %vm17, %v164
  %230 = vst.msk [vmem:[%s191 + $0x1f9] sm:$0xff] %vm17, %v165
  %231 = vst.msk [vmem:[%s191 + $0x201] sm:$0xff] %vm17, %v166
  %232 = vst.msk [vmem:[%s191 + $0x211] sm:$0xff] %vm17, %v167
  %233 = vst.msk [vmem:[%s191 + $0x219] sm:$0xff] %vm17, %v168
  %234 = vst.msk [vmem:[%s191 + $0x229] sm:$0xff] %vm17, %v169
  %235 = vst.msk [vmem:[%s191 + $0x231] sm:$0xff] %vm17, %v170
  %236 = vst.msk [vmem:[%s191 + $0x241] sm:$0xff] %vm17, %v171
  %237 = vst.msk [vmem:[%s191 + $0x249] sm:$0xff] %vm17, %v172
  %238 = vst.msk [vmem:[%s191 + $0x259] sm:$0xff] %vm17, %v173
  %239 = vst.msk [vmem:[%s191 + $0x261] sm:$0xff] %vm17, %v174
  %240 = vst.msk [vmem:[%s191 + $0x271] sm:$0xff] %vm17, %v175
  %241 = vst.msk [vmem:[%s191 + $0x279] sm:$0xff] %vm17, %v176
  %242 = vst.msk [vmem:[%s191 + $0x289] sm:$0xff] %vm17, %v177
  %243 = vst.msk [vmem:[%s191 + $0x291] sm:$0xff] %vm17, %v178
  %244 = vst.msk [vmem:[%s191 + $0x2a1] sm:$0xff] %vm17, %v179
  %245 = vst.msk [vmem:[%s191 + $0x2a9] sm:$0xff] %vm17, %v180
  %246 = vst.msk [vmem:[%s191 + $0x2b9] sm:$0xff] %vm17, %v181
  %247 = vst.msk [vmem:[%s191 + $0x2c1] sm:$0xff] %vm17, %v182
  %248 = vst.msk [vmem:[%s191 + $0x2d1] sm:$0xff] %vm17, %v183
  %249 = vst.msk [vmem:[%s191 + $0x2d9] sm:$0xff] %vm17, %v184
  %250 = vst.msk [vmem:[%s191 + $0x2e9] sm:$0xff] %vm17, %v185
  %251 = vst.msk [vmem:[%s191 + $0x2f1] sm:$0xff] %vm17, %v186
  %252 = vst.msk [vmem:[%s191 + $0x301] sm:$0xff] %vm17, %v187
  %253 = vst.msk [vmem:[%s191 + $0x309] sm:$0xff] %vm17, %v188
  %254 = vst.msk [vmem:[%s191 + $0x319] sm:$0xff] %vm17, %v189
  %255 = vst.msk [vmem:[%s191 + $0x321] sm:$0xff] %vm17, %v190
  %v256 = vld [vmem:[#allocation2] sm:$0xff]
  %v257 = vld [vmem:[#allocation2 + $0x8] sm:$0xff]
  %v258 = vld [vmem:[#allocation2 + $0x18] sm:$0xff]
  %v259 = vld [vmem:[#allocation2 + $0x20] sm:$0xff]
  %v260 = vld [vmem:[#allocation2 + $0x30] sm:$0xff]
  %v261 = vld [vmem:[#allocation2 + $0x38] sm:$0xff]
  %v262 = vld [vmem:[#allocation2 + $0x48] sm:$0xff]
  %v263 = vld [vmem:[#allocation2 + $0x50] sm:$0xff]
  %v264 = vld [vmem:[#allocation2 + $0x60] sm:$0xff]
  %v265 = vld [vmem:[#allocation2 + $0x68] sm:$0xff]
  %v266 = vld [vmem:[#allocation2 + $0x78] sm:$0xff]
  %v267 = vld [vmem:[#allocation2 + $0x80] sm:$0xff]
  %v268 = vld [vmem:[#allocation2 + $0x90] sm:$0xff]
  %v269 = vld [vmem:[#allocation2 + $0x98] sm:$0xff]
  %v270 = vld [vmem:[#allocation2 + $0xa8] sm:$0xff]
  %v271 = vld [vmem:[#allocation2 + $0xb0] sm:$0xff]
  %v272 = vld [vmem:[#allocation2 + $0xc0] sm:$0xff]
  %v273 = vld [vmem:[#allocation2 + $0xc8] sm:$0xff]
  %v274 = vld [vmem:[#allocation2 + $0xd8] sm:$0xff]
  %v275 = vld [vmem:[#allocation2 + $0xe0] sm:$0xff]
  %v276 = vld [vmem:[#allocation2 + $0xf0] sm:$0xff]
  %v277 = vld [vmem:[#allocation2 + $0xf8] sm:$0xff]
  %v278 = vld [vmem:[#allocation2 + $0x108] sm:$0xff]
  %v279 = vld [vmem:[#allocation2 + $0x110] sm:$0xff]
  %v280 = vld [vmem:[#allocation2 + $0x120] sm:$0xff]
  %v281 = vld [vmem:[#allocation2 + $0x128] sm:$0xff]
  %v282 = vld [vmem:[#allocation2 + $0x138] sm:$0xff]
  %v283 = vld [vmem:[#allocation2 + $0x140] sm:$0xff]
  %v284 = vld [vmem:[#allocation2 + $0x150] sm:$0xff]
  %v285 = vld [vmem:[#allocation2 + $0x158] sm:$0xff]
  %v286 = vld [vmem:[#allocation2 + $0x168] sm:$0xff]
  %v287 = vld [vmem:[#allocation2 + $0x170] sm:$0xff]
  %v288 = vld [vmem:[#allocation2 + $0x1] sm:$0xff]
  %v289 = vld [vmem:[#allocation2 + $0x9] sm:$0xff]
  %v290 = vld [vmem:[#allocation2 + $0x19] sm:$0xff]
  %v291 = vld [vmem:[#allocation2 + $0x21] sm:$0xff]
  %v292 = vld [vmem:[#allocation2 + $0x31] sm:$0xff]
  %v293 = vld [vmem:[#allocation2 + $0x39] sm:$0xff]
  %v294 = vld [vmem:[#allocation2 + $0x49] sm:$0xff]
  %v295 = vld [vmem:[#allocation2 + $0x51] sm:$0xff]
  %v296 = vld [vmem:[#allocation2 + $0x61] sm:$0xff]
  %v297 = vld [vmem:[#allocation2 + $0x69] sm:$0xff]
  %v298 = vld [vmem:[#allocation2 + $0x79] sm:$0xff]
  %v299 = vld [vmem:[#allocation2 + $0x81] sm:$0xff]
  %v300 = vld [vmem:[#allocation2 + $0x91] sm:$0xff]
  %v301 = vld [vmem:[#allocation2 + $0x99] sm:$0xff]
  %v302 = vld [vmem:[#allocation2 + $0xa9] sm:$0xff]
  %v303 = vld [vmem:[#allocation2 + $0xb1] sm:$0xff]
  %v304 = vld [vmem:[#allocation2 + $0xc1] sm:$0xff]
  %v305 = vld [vmem:[#allocation2 + $0xc9] sm:$0xff]
  %v306 = vld [vmem:[#allocation2 + $0xd9] sm:$0xff]
  %v307 = vld [vmem:[#allocation2 + $0xe1] sm:$0xff]
  %v308 = vld [vmem:[#allocation2 + $0xf1] sm:$0xff]
  %v309 = vld [vmem:[#allocation2 + $0xf9] sm:$0xff]
  %v310 = vld [vmem:[#allocation2 + $0x109] sm:$0xff]
  %v311 = vld [vmem:[#allocation2 + $0x111] sm:$0xff]
  %v312 = vld [vmem:[#allocation2 + $0x121] sm:$0xff]
  %v313 = vld [vmem:[#allocation2 + $0x129] sm:$0xff]
  %v314 = vld [vmem:[#allocation2 + $0x139] sm:$0xff]
  %v315 = vld [vmem:[#allocation2 + $0x141] sm:$0xff]
  %v316 = vld [vmem:[#allocation2 + $0x151] sm:$0xff]
  %v317 = vld [vmem:[#allocation2 + $0x159] sm:$0xff]
  %v318 = vld [vmem:[#allocation2 + $0x169] sm:$0xff]
  %v319 = vld [vmem:[#allocation2 + $0x171] sm:$0xff]
  %v320 = vld [vmem:[#allocation2 + $0x2] sm:$0xff]
  %v321 = vld [vmem:[#allocation2 + $0xa] sm:$0xff]
  %v322 = vld [vmem:[#allocation2 + $0x1a] sm:$0xff]
  %v323 = vld [vmem:[#allocation2 + $0x22] sm:$0xff]
  %v324 = vld [vmem:[#allocation2 + $0x32] sm:$0xff]
  %v325 = vld [vmem:[#allocation2 + $0x3a] sm:$0xff]
  %v326 = vld [vmem:[#allocation2 + $0x4a] sm:$0xff]
  %v327 = vld [vmem:[#allocation2 + $0x52] sm:$0xff]
  %v328 = vld [vmem:[#allocation2 + $0x62] sm:$0xff]
  %v329 = vld [vmem:[#allocation2 + $0x6a] sm:$0xff]
  %v330 = vld [vmem:[#allocation2 + $0x7a] sm:$0xff]
  %v331 = vld [vmem:[#allocation2 + $0x82] sm:$0xff]
  %v332 = vld [vmem:[#allocation2 + $0x92] sm:$0xff]
  %v333 = vld [vmem:[#allocation2 + $0x9a] sm:$0xff]
  %v334 = vld [vmem:[#allocation2 + $0xaa] sm:$0xff]
  %v335 = vld [vmem:[#allocation2 + $0xb2] sm:$0xff]
  %v336 = vld [vmem:[#allocation2 + $0xc2] sm:$0xff]
  %v337 = vld [vmem:[#allocation2 + $0xca] sm:$0xff]
  %v338 = vld [vmem:[#allocation2 + $0xda] sm:$0xff]
  %v339 = vld [vmem:[#allocation2 + $0xe2] sm:$0xff]
  %v340 = vld [vmem:[#allocation2 + $0xf2] sm:$0xff]
  %v341 = vld [vmem:[#allocation2 + $0xfa] sm:$0xff]
  %v342 = vld [vmem:[#allocation2 + $0x10a] sm:$0xff]
  %v343 = vld [vmem:[#allocation2 + $0x112] sm:$0xff]
  %v344 = vld [vmem:[#allocation2 + $0x122] sm:$0xff]
  %v345 = vld [vmem:[#allocation2 + $0x12a] sm:$0xff]
  %v346 = vld [vmem:[#allocation2 + $0x13a] sm:$0xff]
  %v347 = vld [vmem:[#allocation2 + $0x142] sm:$0xff]
  %v348 = vld [vmem:[#allocation2 + $0x152] sm:$0xff]
  %v349 = vld [vmem:[#allocation2 + $0x15a] sm:$0xff]
  %v350 = vld [vmem:[#allocation2 + $0x16a] sm:$0xff]
  %v351 = vld [vmem:[#allocation2 + $0x172] sm:$0xff]
  %v352 = vld [vmem:[%s191] sm:$0xff]
  %v353 = vld [vmem:[%s191 + $0x8] sm:$0xff]
  %v354 = vld [vmem:[%s191 + $0x18] sm:$0xff]
  %v355 = vld [vmem:[%s191 + $0x20] sm:$0xff]
  %v356 = vld [vmem:[%s191 + $0x30] sm:$0xff]
  %v357 = vld [vmem:[%s191 + $0x38] sm:$0xff]
  %v358 = vld [vmem:[%s191 + $0x48] sm:$0xff]
  %v359 = vld [vmem:[%s191 + $0x50] sm:$0xff]
  %v360 = vld [vmem:[%s191 + $0x60] sm:$0xff]
  %v361 = vld [vmem:[%s191 + $0x68] sm:$0xff]
  %v362 = vld [vmem:[%s191 + $0x78] sm:$0xff]
  %v363 = vld [vmem:[%s191 + $0x80] sm:$0xff]
  %v364 = vld [vmem:[%s191 + $0x90] sm:$0xff]
  %v365 = vld [vmem:[%s191 + $0x98] sm:$0xff]
  %v366 = vld [vmem:[%s191 + $0xa8] sm:$0xff]
  %v367 = vld [vmem:[%s191 + $0xb0] sm:$0xff]
  %v368 = vld [vmem:[%s191 + $0xc0] sm:$0xff]
  %v369 = vld [vmem:[%s191 + $0xc8] sm:$0xff]
  %v370 = vld [vmem:[%s191 + $0xd8] sm:$0xff]
  %v371 = vld [vmem:[%s191 + $0xe0] sm:$0xff]
  %v372 = vld [vmem:[%s191 + $0xf0] sm:$0xff]
  %v373 = vld [vmem:[%s191 + $0xf8] sm:$0xff]
  %v374 = vld [vmem:[%s191 + $0x108] sm:$0xff]
  %v375 = vld [vmem:[%s191 + $0x110] sm:$0xff]
  %v376 = vld [vmem:[%s191 + $0x120] sm:$0xff]
  %v377 = vld [vmem:[%s191 + $0x128] sm:$0xff]
  %v378 = vld [vmem:[%s191 + $0x138] sm:$0xff]
  %v379 = vld [vmem:[%s191 + $0x140] sm:$0xff]
  %v380 = vld [vmem:[%s191 + $0x150] sm:$0xff]
  %v381 = vld [vmem:[%s191 + $0x158] sm:$0xff]
  %v382 = vld [vmem:[%s191 + $0x168] sm:$0xff]
  %v383 = vld [vmem:[%s191 + $0x170] sm:$0xff]
  %v384 = vld [vmem:[%s191 + $0x1] sm:$0xff]
  %v385 = vld [vmem:[%s191 + $0x9] sm:$0xff]
  %v386 = vld [vmem:[%s191 + $0x19] sm:$0xff]
  %v387 = vld [vmem:[%s191 + $0x21] sm:$0xff]
  %v388 = vld [vmem:[%s191 + $0x31] sm:$0xff]
  %v389 = vld [vmem:[%s191 + $0x39] sm:$0xff]
  %v390 = vld [vmem:[%s191 + $0x49] sm:$0xff]
  %v391 = vld [vmem:[%s191 + $0x51] sm:$0xff]
  %v392 = vld [vmem:[%s191 + $0x61] sm:$0xff]
  %v393 = vld [vmem:[%s191 + $0x69] sm:$0xff]
  %v394 = vld [vmem:[%s191 + $0x79] sm:$0xff]
  %v395 = vld [vmem:[%s191 + $0x81] sm:$0xff]
  %v396 = vld [vmem:[%s191 + $0x91] sm:$0xff]
  %v397 = vld [vmem:[%s191 + $0x99] sm:$0xff]
  %v398 = vld [vmem:[%s191 + $0xa9] sm:$0xff]
  %v399 = vld [vmem:[%s191 + $0xb1] sm:$0xff]
  %v400 = vld [vmem:[%s191 + $0xc1] sm:$0xff]
  %v401 = vld [vmem:[%s191 + $0xc9] sm:$0xff]
  %v402 = vld [vmem:[%s191 + $0xd9] sm:$0xff]
  %v403 = vld [vmem:[%s191 + $0xe1] sm:$0xff]
  %v404 = vld [vmem:[%s191 + $0xf1] sm:$0xff]
  %v405 = vld [vmem:[%s191 + $0xf9] sm:$0xff]
  %v406 = vld [vmem:[%s191 + $0x109] sm:$0xff]
  %v407 = vld [vmem:[%s191 + $0x111] sm:$0xff]
  %v408 = vld [vmem:[%s191 + $0x121] sm:$0xff]
  %v409 = vld [vmem:[%s191 + $0x129] sm:$0xff]
  %v410 = vld [vmem:[%s191 + $0x139] sm:$0xff]
  %v411 = vld [vmem:[%s191 + $0x141] sm:$0xff]
  %v412 = vld [vmem:[%s191 + $0x151] sm:$0xff]
  %v413 = vld [vmem:[%s191 + $0x159] sm:$0xff]
  %v414 = vld [vmem:[%s191 + $0x169] sm:$0xff]
  %v415 = vld [vmem:[%s191 + $0x171] sm:$0xff]
  %v416 = vld [vmem:[%s191 + $0x2] sm:$0xff]
  %v417 = vld [vmem:[%s191 + $0xa] sm:$0xff]
  %v418 = vld [vmem:[%s191 + $0x1a] sm:$0xff]
  %v419 = vld [vmem:[%s191 + $0x22] sm:$0xff]
  %v420 = vld [vmem:[%s191 + $0x32] sm:$0xff]
  %v421 = vld [vmem:[%s191 + $0x3a] sm:$0xff]
  %v422 = vld [vmem:[%s191 + $0x4a] sm:$0xff]
  %v423 = vld [vmem:[%s191 + $0x52] sm:$0xff]
  %v424 = vld [vmem:[%s191 + $0x62] sm:$0xff]
  %v425 = vld [vmem:[%s191 + $0x6a] sm:$0xff]
  %v426 = vld [vmem:[%s191 + $0x7a] sm:$0xff]
  %v427 = vld [vmem:[%s191 + $0x82] sm:$0xff]
  %v428 = vld [vmem:[%s191 + $0x92] sm:$0xff]
  %v429 = vld [vmem:[%s191 + $0x9a] sm:$0xff]
  %v430 = vld [vmem:[%s191 + $0xaa] sm:$0xff]
  %v431 = vld [vmem:[%s191 + $0xb2] sm:$0xff]
  %v432 = vld [vmem:[%s191 + $0xc2] sm:$0xff]
  %v433 = vld [vmem:[%s191 + $0xca] sm:$0xff]
  %v434 = vld [vmem:[%s191 + $0xda] sm:$0xff]
  %v435 = vld [vmem:[%s191 + $0xe2] sm:$0xff]
  %v436 = vld [vmem:[%s191 + $0xf2] sm:$0xff]
  %v437 = vld [vmem:[%s191 + $0xfa] sm:$0xff]
  %v438 = vld [vmem:[%s191 + $0x10a] sm:$0xff]
  %v439 = vld [vmem:[%s191 + $0x112] sm:$0xff]
  %v440 = vld [vmem:[%s191 + $0x122] sm:$0xff]
  %v441 = vld [vmem:[%s191 + $0x12a] sm:$0xff]
  %v442 = vld [vmem:[%s191 + $0x13a] sm:$0xff]
  %v443 = vld [vmem:[%s191 + $0x142] sm:$0xff]
  %v444 = vld [vmem:[%s191 + $0x152] sm:$0xff]
  %v445 = vld [vmem:[%s191 + $0x15a] sm:$0xff]
  %v446 = vld [vmem:[%s191 + $0x16a] sm:$0xff]
  %v447 = vld [vmem:[%s191 + $0x172] sm:$0xff]
  %s448 = scalar_lea.vmem [#allocation2], 48
  %v449 = vld [vmem:[%s448] sm:$0xff]
  %v450 = vld [vmem:[%s448 + $0x8] sm:$0xff]
  %v451 = vld [vmem:[%s448 + $0x18] sm:$0xff]
  %v452 = vld [vmem:[%s448 + $0x20] sm:$0xff]
  %v453 = vld [vmem:[%s448 + $0x30] sm:$0xff]
  %v454 = vld [vmem:[%s448 + $0x38] sm:$0xff]
  %v455 = vld [vmem:[%s448 + $0x48] sm:$0xff]
  %v456 = vld [vmem:[%s448 + $0x50] sm:$0xff]
  %v457 = vld [vmem:[%s448 + $0x60] sm:$0xff]
  %v458 = vld [vmem:[%s448 + $0x68] sm:$0xff]
  %v459 = vld [vmem:[%s448 + $0x78] sm:$0xff]
  %v460 = vld [vmem:[%s448 + $0x80] sm:$0xff]
  %v461 = vld [vmem:[%s448 + $0x90] sm:$0xff]
  %v462 = vld [vmem:[%s448 + $0x98] sm:$0xff]
  %v463 = vld [vmem:[%s448 + $0xa8] sm:$0xff]
  %v464 = vld [vmem:[%s448 + $0xb0] sm:$0xff]
  %v465 = vld [vmem:[%s448 + $0xc0] sm:$0xff]
  %v466 = vld [vmem:[%s448 + $0xc8] sm:$0xff]
  %v467 = vld [vmem:[%s448 + $0xd8] sm:$0xff]
  %v468 = vld [vmem:[%s448 + $0xe0] sm:$0xff]
  %v469 = vld [vmem:[%s448 + $0xf0] sm:$0xff]
  %v470 = vld [vmem:[%s448 + $0xf8] sm:$0xff]
  %v471 = vld [vmem:[%s448 + $0x108] sm:$0xff]
  %v472 = vld [vmem:[%s448 + $0x110] sm:$0xff]
  %v473 = vld [vmem:[%s448 + $0x120] sm:$0xff]
  %v474 = vld [vmem:[%s448 + $0x128] sm:$0xff]
  %v475 = vld [vmem:[%s448 + $0x138] sm:$0xff]
  %v476 = vld [vmem:[%s448 + $0x140] sm:$0xff]
  %v477 = vld [vmem:[%s448 + $0x150] sm:$0xff]
  %v478 = vld [vmem:[%s448 + $0x158] sm:$0xff]
  %v479 = vld [vmem:[%s448 + $0x168] sm:$0xff]
  %v480 = vld [vmem:[%s448 + $0x170] sm:$0xff]
  %v481 = vld [vmem:[%s448 + $0x1] sm:$0xff]
  %v482 = vld [vmem:[%s448 + $0x9] sm:$0xff]
  %v483 = vld [vmem:[%s448 + $0x19] sm:$0xff]
  %v484 = vld [vmem:[%s448 + $0x21] sm:$0xff]
  %v485 = vld [vmem:[%s448 + $0x31] sm:$0xff]
  %v486 = vld [vmem:[%s448 + $0x39] sm:$0xff]
  %v487 = vld [vmem:[%s448 + $0x49] sm:$0xff]
  %v488 = vld [vmem:[%s448 + $0x51] sm:$0xff]
  %v489 = vld [vmem:[%s448 + $0x61] sm:$0xff]
  %v490 = vld [vmem:[%s448 + $0x69] sm:$0xff]
  %v491 = vld [vmem:[%s448 + $0x79] sm:$0xff]
  %v492 = vld [vmem:[%s448 + $0x81] sm:$0xff]
  %v493 = vld [vmem:[%s448 + $0x91] sm:$0xff]
  %v494 = vld [vmem:[%s448 + $0x99] sm:$0xff]
  %v495 = vld [vmem:[%s448 + $0xa9] sm:$0xff]
  %v496 = vld [vmem:[%s448 + $0xb1] sm:$0xff]
  %v497 = vld [vmem:[%s448 + $0xc1] sm:$0xff]
  %v498 = vld [vmem:[%s448 + $0xc9] sm:$0xff]
  %v499 = vld [vmem:[%s448 + $0xd9] sm:$0xff]
  %v500 = vld [vmem:[%s448 + $0xe1] sm:$0xff]
  %v501 = vld [vmem:[%s448 + $0xf1] sm:$0xff]
  %v502 = vld [vmem:[%s448 + $0xf9] sm:$0xff]
  %v503 = vld [vmem:[%s448 + $0x109] sm:$0xff]
  %v504 = vld [vmem:[%s448 + $0x111] sm:$0xff]
  %v505 = vld [vmem:[%s448 + $0x121] sm:$0xff]
  %v506 = vld [vmem:[%s448 + $0x129] sm:$0xff]
  %v507 = vld [vmem:[%s448 + $0x139] sm:$0xff]
  %v508 = vld [vmem:[%s448 + $0x141] sm:$0xff]
  %v509 = vld [vmem:[%s448 + $0x151] sm:$0xff]
  %v510 = vld [vmem:[%s448 + $0x159] sm:$0xff]
  %v511 = vld [vmem:[%s448 + $0x169] sm:$0xff]
  %v512 = vld [vmem:[%s448 + $0x171] sm:$0xff]
  %v513 = vld [vmem:[%s448 + $0x2] sm:$0xff]
  %v514 = vld [vmem:[%s448 + $0xa] sm:$0xff]
  %v515 = vld [vmem:[%s448 + $0x1a] sm:$0xff]
  %v516 = vld [vmem:[%s448 + $0x22] sm:$0xff]
  %v517 = vld [vmem:[%s448 + $0x32] sm:$0xff]
  %v518 = vld [vmem:[%s448 + $0x3a] sm:$0xff]
  %v519 = vld [vmem:[%s448 + $0x4a] sm:$0xff]
  %v520 = vld [vmem:[%s448 + $0x52] sm:$0xff]
  %v521 = vld [vmem:[%s448 + $0x62] sm:$0xff]
  %v522 = vld [vmem:[%s448 + $0x6a] sm:$0xff]
  %v523 = vld [vmem:[%s448 + $0x7a] sm:$0xff]
  %v524 = vld [vmem:[%s448 + $0x82] sm:$0xff]
  %v525 = vld [vmem:[%s448 + $0x92] sm:$0xff]
  %v526 = vld [vmem:[%s448 + $0x9a] sm:$0xff]
  %v527 = vld [vmem:[%s448 + $0xaa] sm:$0xff]
  %v528 = vld [vmem:[%s448 + $0xb2] sm:$0xff]
  %v529 = vld [vmem:[%s448 + $0xc2] sm:$0xff]
  %v530 = vld [vmem:[%s448 + $0xca] sm:$0xff]
  %v531 = vld [vmem:[%s448 + $0xda] sm:$0xff]
  %v532 = vld [vmem:[%s448 + $0xe2] sm:$0xff]
  %v533 = vld [vmem:[%s448 + $0xf2] sm:$0xff]
  %v534 = vld [vmem:[%s448 + $0xfa] sm:$0xff]
  %v535 = vld [vmem:[%s448 + $0x10a] sm:$0xff]
  %v536 = vld [vmem:[%s448 + $0x112] sm:$0xff]
  %v537 = vld [vmem:[%s448 + $0x122] sm:$0xff]
  %v538 = vld [vmem:[%s448 + $0x12a] sm:$0xff]
  %v539 = vld [vmem:[%s448 + $0x13a] sm:$0xff]
  %v540 = vld [vmem:[%s448 + $0x142] sm:$0xff]
  %v541 = vld [vmem:[%s448 + $0x152] sm:$0xff]
  %v542 = vld [vmem:[%s448 + $0x15a] sm:$0xff]
  %v543 = vld [vmem:[%s448 + $0x16a] sm:$0xff]
  %v544 = vld [vmem:[%s448 + $0x172] sm:$0xff]
  %577 = vrot.lane.b32.xlu0 %v288, 4
  %v578 = vpop.permute.xlu0 %577
  %579 = vrot.lane.b32.xlu0 %v289, 4
  %v580 = vpop.permute.xlu0 %579
  %581 = vrot.lane.b32.xlu0 %v290, 4
  %v582 = vpop.permute.xlu0 %581
  %583 = vrot.lane.b32.xlu0 %v291, 4
  %v584 = vpop.permute.xlu0 %583
  %585 = vrot.lane.b32.xlu0 %v292, 4
  %v586 = vpop.permute.xlu0 %585
  %587 = vrot.lane.b32.xlu0 %v293, 4
  %v588 = vpop.permute.xlu0 %587
  %589 = vrot.lane.b32.xlu0 %v294, 4
  %v590 = vpop.permute.xlu0 %589
  %591 = vrot.lane.b32.xlu0 %v295, 4
  %v592 = vpop.permute.xlu0 %591
  %593 = vrot.lane.b32.xlu0 %v296, 4
  %v594 = vpop.permute.xlu0 %593
  %595 = vrot.lane.b32.xlu0 %v297, 4
  %v596 = vpop.permute.xlu0 %595
  %597 = vrot.lane.b32.xlu0 %v298, 4
  %v598 = vpop.permute.xlu0 %597
  %599 = vrot.lane.b32.xlu0 %v299, 4
  %v600 = vpop.permute.xlu0 %599
  %601 = vrot.lane.b32.xlu0 %v300, 4
  %v602 = vpop.permute.xlu0 %601
  %603 = vrot.lane.b32.xlu0 %v301, 4
  %v604 = vpop.permute.xlu0 %603
  %605 = vrot.lane.b32.xlu0 %v302, 4
  %v606 = vpop.permute.xlu0 %605
  %607 = vrot.lane.b32.xlu0 %v303, 4
  %v608 = vpop.permute.xlu0 %607
  %609 = vrot.lane.b32.xlu0 %v304, 4
  %v610 = vpop.permute.xlu0 %609
  %611 = vrot.lane.b32.xlu0 %v305, 4
  %v612 = vpop.permute.xlu0 %611
  %613 = vrot.lane.b32.xlu0 %v306, 4
  %v614 = vpop.permute.xlu0 %613
  %615 = vrot.lane.b32.xlu0 %v307, 4
  %v616 = vpop.permute.xlu0 %615
  %617 = vrot.lane.b32.xlu0 %v308, 4
  %v618 = vpop.permute.xlu0 %617
  %619 = vrot.lane.b32.xlu0 %v309, 4
  %v620 = vpop.permute.xlu0 %619
  %621 = vrot.lane.b32.xlu0 %v310, 4
  %v622 = vpop.permute.xlu0 %621
  %623 = vrot.lane.b32.xlu0 %v311, 4
  %v624 = vpop.permute.xlu0 %623
  %625 = vrot.lane.b32.xlu0 %v312, 4
  %v626 = vpop.permute.xlu0 %625
  %627 = vrot.lane.b32.xlu0 %v313, 4
  %v628 = vpop.permute.xlu0 %627
  %629 = vrot.lane.b32.xlu0 %v314, 4
  %v630 = vpop.permute.xlu0 %629
  %631 = vrot.lane.b32.xlu0 %v315, 4
  %v632 = vpop.permute.xlu0 %631
  %633 = vrot.lane.b32.xlu0 %v316, 4
  %v634 = vpop.permute.xlu0 %633
  %635 = vrot.lane.b32.xlu0 %v317, 4
  %v636 = vpop.permute.xlu0 %635
  %637 = vrot.lane.b32.xlu0 %v318, 4
  %v638 = vpop.permute.xlu0 %637
  %639 = vrot.lane.b32.xlu0 %v319, 4
  %v640 = vpop.permute.xlu0 %639
  %705 = vrot.lane.b32.xlu0 %v320, 8
  %v706 = vpop.permute.xlu0 %705
  %707 = vrot.lane.b32.xlu0 %v321, 8
  %v708 = vpop.permute.xlu0 %707
  %709 = vrot.lane.b32.xlu0 %v322, 8
  %v710 = vpop.permute.xlu0 %709
  %711 = vrot.lane.b32.xlu0 %v323, 8
  %v712 = vpop.permute.xlu0 %711
  %713 = vrot.lane.b32.xlu0 %v324, 8
  %v714 = vpop.permute.xlu0 %713
  %715 = vrot.lane.b32.xlu0 %v325, 8
  %v716 = vpop.permute.xlu0 %715
  %717 = vrot.lane.b32.xlu0 %v326, 8
  %v718 = vpop.permute.xlu0 %717
  %719 = vrot.lane.b32.xlu0 %v327, 8
  %v720 = vpop.permute.xlu0 %719
  %721 = vrot.lane.b32.xlu0 %v328, 8
  %v722 = vpop.permute.xlu0 %721
  %723 = vrot.lane.b32.xlu0 %v329, 8
  %v724 = vpop.permute.xlu0 %723
  %725 = vrot.lane.b32.xlu0 %v330, 8
  %v726 = vpop.permute.xlu0 %725
  %727 = vrot.lane.b32.xlu0 %v331, 8
  %v728 = vpop.permute.xlu0 %727
  %729 = vrot.lane.b32.xlu0 %v332, 8
  %v730 = vpop.permute.xlu0 %729
  %731 = vrot.lane.b32.xlu0 %v333, 8
  %v732 = vpop.permute.xlu0 %731
  %733 = vrot.lane.b32.xlu0 %v334, 8
  %v734 = vpop.permute.xlu0 %733
  %735 = vrot.lane.b32.xlu0 %v335, 8
  %v736 = vpop.permute.xlu0 %735
  %737 = vrot.lane.b32.xlu0 %v336, 8
  %v738 = vpop.permute.xlu0 %737
  %739 = vrot.lane.b32.xlu0 %v337, 8
  %v740 = vpop.permute.xlu0 %739
  %741 = vrot.lane.b32.xlu0 %v338, 8
  %v742 = vpop.permute.xlu0 %741
  %743 = vrot.lane.b32.xlu0 %v339, 8
  %v744 = vpop.permute.xlu0 %743
  %745 = vrot.lane.b32.xlu0 %v340, 8
  %v746 = vpop.permute.xlu0 %745
  %747 = vrot.lane.b32.xlu0 %v341, 8
  %v748 = vpop.permute.xlu0 %747
  %749 = vrot.lane.b32.xlu0 %v342, 8
  %v750 = vpop.permute.xlu0 %749
  %751 = vrot.lane.b32.xlu0 %v343, 8
  %v752 = vpop.permute.xlu0 %751
  %753 = vrot.lane.b32.xlu0 %v344, 8
  %v754 = vpop.permute.xlu0 %753
  %755 = vrot.lane.b32.xlu0 %v345, 8
  %v756 = vpop.permute.xlu0 %755
  %757 = vrot.lane.b32.xlu0 %v346, 8
  %v758 = vpop.permute.xlu0 %757
  %759 = vrot.lane.b32.xlu0 %v347, 8
  %v760 = vpop.permute.xlu0 %759
  %761 = vrot.lane.b32.xlu0 %v348, 8
  %v762 = vpop.permute.xlu0 %761
  %763 = vrot.lane.b32.xlu0 %v349, 8
  %v764 = vpop.permute.xlu0 %763
  %765 = vrot.lane.b32.xlu0 %v350, 8
  %v766 = vpop.permute.xlu0 %765
  %767 = vrot.lane.b32.xlu0 %v351, 8
  %v768 = vpop.permute.xlu0 %767
  %833 = vrot.lane.b32.xlu0 %v352, 12
  %v834 = vpop.permute.xlu0 %833
  %835 = vrot.lane.b32.xlu0 %v353, 12
  %v836 = vpop.permute.xlu0 %835
  %837 = vrot.lane.b32.xlu0 %v354, 12
  %v838 = vpop.permute.xlu0 %837
  %839 = vrot.lane.b32.xlu0 %v355, 12
  %v840 = vpop.permute.xlu0 %839
  %841 = vrot.lane.b32.xlu0 %v356, 12
  %v842 = vpop.permute.xlu0 %841
  %843 = vrot.lane.b32.xlu0 %v357, 12
  %v844 = vpop.permute.xlu0 %843
  %845 = vrot.lane.b32.xlu0 %v358, 12
  %v846 = vpop.permute.xlu0 %845
  %847 = vrot.lane.b32.xlu0 %v359, 12
  %v848 = vpop.permute.xlu0 %847
  %849 = vrot.lane.b32.xlu0 %v360, 12
  %v850 = vpop.permute.xlu0 %849
  %851 = vrot.lane.b32.xlu0 %v361, 12
  %v852 = vpop.permute.xlu0 %851
  %853 = vrot.lane.b32.xlu0 %v362, 12
  %v854 = vpop.permute.xlu0 %853
  %855 = vrot.lane.b32.xlu0 %v363, 12
  %v856 = vpop.permute.xlu0 %855
  %857 = vrot.lane.b32.xlu0 %v364, 12
  %v858 = vpop.permute.xlu0 %857
  %859 = vrot.lane.b32.xlu0 %v365, 12
  %v860 = vpop.permute.xlu0 %859
  %861 = vrot.lane.b32.xlu0 %v366, 12
  %v862 = vpop.permute.xlu0 %861
  %863 = vrot.lane.b32.xlu0 %v367, 12
  %v864 = vpop.permute.xlu0 %863
  %865 = vrot.lane.b32.xlu0 %v368, 12
  %v866 = vpop.permute.xlu0 %865
  %867 = vrot.lane.b32.xlu0 %v369, 12
  %v868 = vpop.permute.xlu0 %867
  %869 = vrot.lane.b32.xlu0 %v370, 12
  %v870 = vpop.permute.xlu0 %869
  %871 = vrot.lane.b32.xlu0 %v371, 12
  %v872 = vpop.permute.xlu0 %871
  %873 = vrot.lane.b32.xlu0 %v372, 12
  %v874 = vpop.permute.xlu0 %873
  %875 = vrot.lane.b32.xlu0 %v373, 12
  %v876 = vpop.permute.xlu0 %875
  %877 = vrot.lane.b32.xlu0 %v374, 12
  %v878 = vpop.permute.xlu0 %877
  %879 = vrot.lane.b32.xlu0 %v375, 12
  %v880 = vpop.permute.xlu0 %879
  %881 = vrot.lane.b32.xlu0 %v376, 12
  %v882 = vpop.permute.xlu0 %881
  %883 = vrot.lane.b32.xlu0 %v377, 12
  %v884 = vpop.permute.xlu0 %883
  %885 = vrot.lane.b32.xlu0 %v378, 12
  %v886 = vpop.permute.xlu0 %885
  %887 = vrot.lane.b32.xlu0 %v379, 12
  %v888 = vpop.permute.xlu0 %887
  %889 = vrot.lane.b32.xlu0 %v380, 12
  %v890 = vpop.permute.xlu0 %889
  %891 = vrot.lane.b32.xlu0 %v381, 12
  %v892 = vpop.permute.xlu0 %891
  %893 = vrot.lane.b32.xlu0 %v382, 12
  %v894 = vpop.permute.xlu0 %893
  %895 = vrot.lane.b32.xlu0 %v383, 12
  %v896 = vpop.permute.xlu0 %895
  %961 = vrot.lane.b32.xlu0 %v384, 16
  %v962 = vpop.permute.xlu0 %961
  %963 = vrot.lane.b32.xlu0 %v385, 16
  %v964 = vpop.permute.xlu0 %963
  %965 = vrot.lane.b32.xlu0 %v386, 16
  %v966 = vpop.permute.xlu0 %965
  %967 = vrot.lane.b32.xlu0 %v387, 16
  %v968 = vpop.permute.xlu0 %967
  %969 = vrot.lane.b32.xlu0 %v388, 16
  %v970 = vpop.permute.xlu0 %969
  %971 = vrot.lane.b32.xlu0 %v389, 16
  %v972 = vpop.permute.xlu0 %971
  %973 = vrot.lane.b32.xlu0 %v390, 16
  %v974 = vpop.permute.xlu0 %973
  %975 = vrot.lane.b32.xlu0 %v391, 16
  %v976 = vpop.permute.xlu0 %975
  %977 = vrot.lane.b32.xlu0 %v392, 16
  %v978 = vpop.permute.xlu0 %977
  %979 = vrot.lane.b32.xlu0 %v393, 16
  %v980 = vpop.permute.xlu0 %979
  %981 = vrot.lane.b32.xlu0 %v394, 16
  %v982 = vpop.permute.xlu0 %981
  %983 = vrot.lane.b32.xlu0 %v395, 16
  %v984 = vpop.permute.xlu0 %983
  %985 = vrot.lane.b32.xlu0 %v396, 16
  %v986 = vpop.permute.xlu0 %985
  %987 = vrot.lane.b32.xlu0 %v397, 16
  %v988 = vpop.permute.xlu0 %987
  %989 = vrot.lane.b32.xlu0 %v398, 16
  %v990 = vpop.permute.xlu0 %989
  %991 = vrot.lane.b32.xlu0 %v399, 16
  %v992 = vpop.permute.xlu0 %991
  %993 = vrot.lane.b32.xlu0 %v400, 16
  %v994 = vpop.permute.xlu0 %993
  %995 = vrot.lane.b32.xlu0 %v401, 16
  %v996 = vpop.permute.xlu0 %995
  %997 = vrot.lane.b32.xlu0 %v402, 16
  %v998 = vpop.permute.xlu0 %997
  %999 = vrot.lane.b32.xlu0 %v403, 16
  %v1000 = vpop.permute.xlu0 %999
  %1001 = vrot.lane.b32.xlu0 %v404, 16
  %v1002 = vpop.permute.xlu0 %1001
  %1003 = vrot.lane.b32.xlu0 %v405, 16
  %v1004 = vpop.permute.xlu0 %1003
  %1005 = vrot.lane.b32.xlu0 %v406, 16
  %v1006 = vpop.permute.xlu0 %1005
  %1007 = vrot.lane.b32.xlu0 %v407, 16
  %v1008 = vpop.permute.xlu0 %1007
  %1009 = vrot.lane.b32.xlu0 %v408, 16
  %v1010 = vpop.permute.xlu0 %1009
  %1011 = vrot.lane.b32.xlu0 %v409, 16
  %v1012 = vpop.permute.xlu0 %1011
  %1013 = vrot.lane.b32.xlu0 %v410, 16
  %v1014 = vpop.permute.xlu0 %1013
  %1015 = vrot.lane.b32.xlu0 %v411, 16
  %v1016 = vpop.permute.xlu0 %1015
  %1017 = vrot.lane.b32.xlu0 %v412, 16
  %v1018 = vpop.permute.xlu0 %1017
  %1019 = vrot.lane.b32.xlu0 %v413, 16
  %v1020 = vpop.permute.xlu0 %1019
  %1021 = vrot.lane.b32.xlu0 %v414, 16
  %v1022 = vpop.permute.xlu0 %1021
  %1023 = vrot.lane.b32.xlu0 %v415, 16
  %v1024 = vpop.permute.xlu0 %1023
  %1089 = vrot.lane.b32.xlu0 %v416, 20
  %v1090 = vpop.permute.xlu0 %1089
  %1091 = vrot.lane.b32.xlu0 %v417, 20
  %v1092 = vpop.permute.xlu0 %1091
  %1093 = vrot.lane.b32.xlu0 %v418, 20
  %v1094 = vpop.permute.xlu0 %1093
  %1095 = vrot.lane.b32.xlu0 %v419, 20
  %v1096 = vpop.permute.xlu0 %1095
  %1097 = vrot.lane.b32.xlu0 %v420, 20
  %v1098 = vpop.permute.xlu0 %1097
  %1099 = vrot.lane.b32.xlu0 %v421, 20
  %v1100 = vpop.permute.xlu0 %1099
  %1101 = vrot.lane.b32.xlu0 %v422, 20
  %v1102 = vpop.permute.xlu0 %1101
  %1103 = vrot.lane.b32.xlu0 %v423, 20
  %v1104 = vpop.permute.xlu0 %1103
  %1105 = vrot.lane.b32.xlu0 %v424, 20
  %v1106 = vpop.permute.xlu0 %1105
  %1107 = vrot.lane.b32.xlu0 %v425, 20
  %v1108 = vpop.permute.xlu0 %1107
  %1109 = vrot.lane.b32.xlu0 %v426, 20
  %v1110 = vpop.permute.xlu0 %1109
  %1111 = vrot.lane.b32.xlu0 %v427, 20
  %v1112 = vpop.permute.xlu0 %1111
  %1113 = vrot.lane.b32.xlu0 %v428, 20
  %v1114 = vpop.permute.xlu0 %1113
  %1115 = vrot.lane.b32.xlu0 %v429, 20
  %v1116 = vpop.permute.xlu0 %1115
  %1117 = vrot.lane.b32.xlu0 %v430, 20
  %v1118 = vpop.permute.xlu0 %1117
  %1119 = vrot.lane.b32.xlu0 %v431, 20
  %v1120 = vpop.permute.xlu0 %1119
  %1121 = vrot.lane.b32.xlu0 %v432, 20
  %v1122 = vpop.permute.xlu0 %1121
  %1123 = vrot.lane.b32.xlu0 %v433, 20
  %v1124 = vpop.permute.xlu0 %1123
  %1125 = vrot.lane.b32.xlu0 %v434, 20
  %v1126 = vpop.permute.xlu0 %1125
  %1127 = vrot.lane.b32.xlu0 %v435, 20
  %v1128 = vpop.permute.xlu0 %1127
  %1129 = vrot.lane.b32.xlu0 %v436, 20
  %v1130 = vpop.permute.xlu0 %1129
  %1131 = vrot.lane.b32.xlu0 %v437, 20
  %v1132 = vpop.permute.xlu0 %1131
  %1133 = vrot.lane.b32.xlu0 %v438, 20
  %v1134 = vpop.permute.xlu0 %1133
  %1135 = vrot.lane.b32.xlu0 %v439, 20
  %v1136 = vpop.permute.xlu0 %1135
  %1137 = vrot.lane.b32.xlu0 %v440, 20
  %v1138 = vpop.permute.xlu0 %1137
  %1139 = vrot.lane.b32.xlu0 %v441, 20
  %v1140 = vpop.permute.xlu0 %1139
  %1141 = vrot.lane.b32.xlu0 %v442, 20
  %v1142 = vpop.permute.xlu0 %1141
  %1143 = vrot.lane.b32.xlu0 %v443, 20
  %v1144 = vpop.permute.xlu0 %1143
  %1145 = vrot.lane.b32.xlu0 %v444, 20
  %v1146 = vpop.permute.xlu0 %1145
  %1147 = vrot.lane.b32.xlu0 %v445, 20
  %v1148 = vpop.permute.xlu0 %1147
  %1149 = vrot.lane.b32.xlu0 %v446, 20
  %v1150 = vpop.permute.xlu0 %1149
  %1151 = vrot.lane.b32.xlu0 %v447, 20
  %v1152 = vpop.permute.xlu0 %1151
  %1217 = vrot.lane.b32.xlu0 %v449, 24
  %v1218 = vpop.permute.xlu0 %1217
  %1219 = vrot.lane.b32.xlu0 %v450, 24
  %v1220 = vpop.permute.xlu0 %1219
  %1221 = vrot.lane.b32.xlu0 %v451, 24
  %v1222 = vpop.permute.xlu0 %1221
  %1223 = vrot.lane.b32.xlu0 %v452, 24
  %v1224 = vpop.permute.xlu0 %1223
  %1225 = vrot.lane.b32.xlu0 %v453, 24
  %v1226 = vpop.permute.xlu0 %1225
  %1227 = vrot.lane.b32.xlu0 %v454, 24
  %v1228 = vpop.permute.xlu0 %1227
  %1229 = vrot.lane.b32.xlu0 %v455, 24
  %v1230 = vpop.permute.xlu0 %1229
  %1231 = vrot.lane.b32.xlu0 %v456, 24
  %v1232 = vpop.permute.xlu0 %1231
  %1233 = vrot.lane.b32.xlu0 %v457, 24
  %v1234 = vpop.permute.xlu0 %1233
  %1235 = vrot.lane.b32.xlu0 %v458, 24
  %v1236 = vpop.permute.xlu0 %1235
  %1237 = vrot.lane.b32.xlu0 %v459, 24
  %v1238 = vpop.permute.xlu0 %1237
  %1239 = vrot.lane.b32.xlu0 %v460, 24
  %v1240 = vpop.permute.xlu0 %1239
  %1241 = vrot.lane.b32.xlu0 %v461, 24
  %v1242 = vpop.permute.xlu0 %1241
  %1243 = vrot.lane.b32.xlu0 %v462, 24
  %v1244 = vpop.permute.xlu0 %1243
  %1245 = vrot.lane.b32.xlu0 %v463, 24
  %v1246 = vpop.permute.xlu0 %1245
  %1247 = vrot.lane.b32.xlu0 %v464, 24
  %v1248 = vpop.permute.xlu0 %1247
  %1249 = vrot.lane.b32.xlu0 %v465, 24
  %v1250 = vpop.permute.xlu0 %1249
  %1251 = vrot.lane.b32.xlu0 %v466, 24
  %v1252 = vpop.permute.xlu0 %1251
  %1253 = vrot.lane.b32.xlu0 %v467, 24
  %v1254 = vpop.permute.xlu0 %1253
  %1255 = vrot.lane.b32.xlu0 %v468, 24
  %v1256 = vpop.permute.xlu0 %1255
  %1257 = vrot.lane.b32.xlu0 %v469, 24
  %v1258 = vpop.permute.xlu0 %1257
  %1259 = vrot.lane.b32.xlu0 %v470, 24
  %v1260 = vpop.permute.xlu0 %1259
  %1261 = vrot.lane.b32.xlu0 %v471, 24
  %v1262 = vpop.permute.xlu0 %1261
  %1263 = vrot.lane.b32.xlu0 %v472, 24
  %v1264 = vpop.permute.xlu0 %1263
  %1265 = vrot.lane.b32.xlu0 %v473, 24
  %v1266 = vpop.permute.xlu0 %1265
  %1267 = vrot.lane.b32.xlu0 %v474, 24
  %v1268 = vpop.permute.xlu0 %1267
  %1269 = vrot.lane.b32.xlu0 %v475, 24
  %v1270 = vpop.permute.xlu0 %1269
  %1271 = vrot.lane.b32.xlu0 %v476, 24
  %v1272 = vpop.permute.xlu0 %1271
  %1273 = vrot.lane.b32.xlu0 %v477, 24
  %v1274 = vpop.permute.xlu0 %1273
  %1275 = vrot.lane.b32.xlu0 %v478, 24
  %v1276 = vpop.permute.xlu0 %1275
  %1277 = vrot.lane.b32.xlu0 %v479, 24
  %v1278 = vpop.permute.xlu0 %1277
  %1279 = vrot.lane.b32.xlu0 %v480, 24
  %v1280 = vpop.permute.xlu0 %1279
  %1345 = vrot.lane.b32.xlu0 %v481, 28
  %v1346 = vpop.permute.xlu0 %1345
  %1347 = vrot.lane.b32.xlu0 %v482, 28
  %v1348 = vpop.permute.xlu0 %1347
  %1349 = vrot.lane.b32.xlu0 %v483, 28
  %v1350 = vpop.permute.xlu0 %1349
  %1351 = vrot.lane.b32.xlu0 %v484, 28
  %v1352 = vpop.permute.xlu0 %1351
  %1353 = vrot.lane.b32.xlu0 %v485, 28
  %v1354 = vpop.permute.xlu0 %1353
  %1355 = vrot.lane.b32.xlu0 %v486, 28
  %v1356 = vpop.permute.xlu0 %1355
  %1357 = vrot.lane.b32.xlu0 %v487, 28
  %v1358 = vpop.permute.xlu0 %1357
  %1359 = vrot.lane.b32.xlu0 %v488, 28
  %v1360 = vpop.permute.xlu0 %1359
  %1361 = vrot.lane.b32.xlu0 %v489, 28
  %v1362 = vpop.permute.xlu0 %1361
  %1363 = vrot.lane.b32.xlu0 %v490, 28
  %v1364 = vpop.permute.xlu0 %1363
  %1365 = vrot.lane.b32.xlu0 %v491, 28
  %v1366 = vpop.permute.xlu0 %1365
  %1367 = vrot.lane.b32.xlu0 %v492, 28
  %v1368 = vpop.permute.xlu0 %1367
  %1369 = vrot.lane.b32.xlu0 %v493, 28
  %v1370 = vpop.permute.xlu0 %1369
  %1371 = vrot.lane.b32.xlu0 %v494, 28
  %v1372 = vpop.permute.xlu0 %1371
  %1373 = vrot.lane.b32.xlu0 %v495, 28
  %v1374 = vpop.permute.xlu0 %1373
  %1375 = vrot.lane.b32.xlu0 %v496, 28
  %v1376 = vpop.permute.xlu0 %1375
  %1377 = vrot.lane.b32.xlu0 %v497, 28
  %v1378 = vpop.permute.xlu0 %1377
  %1379 = vrot.lane.b32.xlu0 %v498, 28
  %v1380 = vpop.permute.xlu0 %1379
  %1381 = vrot.lane.b32.xlu0 %v499, 28
  %v1382 = vpop.permute.xlu0 %1381
  %1383 = vrot.lane.b32.xlu0 %v500, 28
  %v1384 = vpop.permute.xlu0 %1383
  %1385 = vrot.lane.b32.xlu0 %v501, 28
  %v1386 = vpop.permute.xlu0 %1385
  %1387 = vrot.lane.b32.xlu0 %v502, 28
  %v1388 = vpop.permute.xlu0 %1387
  %1389 = vrot.lane.b32.xlu0 %v503, 28
  %v1390 = vpop.permute.xlu0 %1389
  %1391 = vrot.lane.b32.xlu0 %v504, 28
  %v1392 = vpop.permute.xlu0 %1391
  %1393 = vrot.lane.b32.xlu0 %v505, 28
  %v1394 = vpop.permute.xlu0 %1393
  %1395 = vrot.lane.b32.xlu0 %v506, 28
  %v1396 = vpop.permute.xlu0 %1395
  %1397 = vrot.lane.b32.xlu0 %v507, 28
  %v1398 = vpop.permute.xlu0 %1397
  %1399 = vrot.lane.b32.xlu0 %v508, 28
  %v1400 = vpop.permute.xlu0 %1399
  %1401 = vrot.lane.b32.xlu0 %v509, 28
  %v1402 = vpop.permute.xlu0 %1401
  %1403 = vrot.lane.b32.xlu0 %v510, 28
  %v1404 = vpop.permute.xlu0 %1403
  %1405 = vrot.lane.b32.xlu0 %v511, 28
  %v1406 = vpop.permute.xlu0 %1405
  %1407 = vrot.lane.b32.xlu0 %v512, 28
  %v1408 = vpop.permute.xlu0 %1407
  %1473 = vrot.lane.b32.xlu0 %v513, 32
  %v1474 = vpop.permute.xlu0 %1473
  %1475 = vrot.lane.b32.xlu0 %v514, 32
  %v1476 = vpop.permute.xlu0 %1475
  %1477 = vrot.lane.b32.xlu0 %v515, 32
  %v1478 = vpop.permute.xlu0 %1477
  %1479 = vrot.lane.b32.xlu0 %v516, 32
  %v1480 = vpop.permute.xlu0 %1479
  %1481 = vrot.lane.b32.xlu0 %v517, 32
  %v1482 = vpop.permute.xlu0 %1481
  %1483 = vrot.lane.b32.xlu0 %v518, 32
  %v1484 = vpop.permute.xlu0 %1483
  %1485 = vrot.lane.b32.xlu0 %v519, 32
  %v1486 = vpop.permute.xlu0 %1485
  %1487 = vrot.lane.b32.xlu0 %v520, 32
  %v1488 = vpop.permute.xlu0 %1487
  %1489 = vrot.lane.b32.xlu0 %v521, 32
  %v1490 = vpop.permute.xlu0 %1489
  %1491 = vrot.lane.b32.xlu0 %v522, 32
  %v1492 = vpop.permute.xlu0 %1491
  %1493 = vrot.lane.b32.xlu0 %v523, 32
  %v1494 = vpop.permute.xlu0 %1493
  %1495 = vrot.lane.b32.xlu0 %v524, 32
  %v1496 = vpop.permute.xlu0 %1495
  %1497 = vrot.lane.b32.xlu0 %v525, 32
  %v1498 = vpop.permute.xlu0 %1497
  %1499 = vrot.lane.b32.xlu0 %v526, 32
  %v1500 = vpop.permute.xlu0 %1499
  %1501 = vrot.lane.b32.xlu0 %v527, 32
  %v1502 = vpop.permute.xlu0 %1501
  %1503 = vrot.lane.b32.xlu0 %v528, 32
  %v1504 = vpop.permute.xlu0 %1503
  %1505 = vrot.lane.b32.xlu0 %v529, 32
  %v1506 = vpop.permute.xlu0 %1505
  %1507 = vrot.lane.b32.xlu0 %v530, 32
  %v1508 = vpop.permute.xlu0 %1507
  %1509 = vrot.lane.b32.xlu0 %v531, 32
  %v1510 = vpop.permute.xlu0 %1509
  %1511 = vrot.lane.b32.xlu0 %v532, 32
  %v1512 = vpop.permute.xlu0 %1511
  %1513 = vrot.lane.b32.xlu0 %v533, 32
  %v1514 = vpop.permute.xlu0 %1513
  %1515 = vrot.lane.b32.xlu0 %v534, 32
  %v1516 = vpop.permute.xlu0 %1515
  %1517 = vrot.lane.b32.xlu0 %v535, 32
  %v1518 = vpop.permute.xlu0 %1517
  %1519 = vrot.lane.b32.xlu0 %v536, 32
  %v1520 = vpop.permute.xlu0 %1519
  %1521 = vrot.lane.b32.xlu0 %v537, 32
  %v1522 = vpop.permute.xlu0 %1521
  %1523 = vrot.lane.b32.xlu0 %v538, 32
  %v1524 = vpop.permute.xlu0 %1523
  %1525 = vrot.lane.b32.xlu0 %v539, 32
  %v1526 = vpop.permute.xlu0 %1525
  %1527 = vrot.lane.b32.xlu0 %v540, 32
  %v1528 = vpop.permute.xlu0 %1527
  %1529 = vrot.lane.b32.xlu0 %v541, 32
  %v1530 = vpop.permute.xlu0 %1529
  %1531 = vrot.lane.b32.xlu0 %v542, 32
  %v1532 = vpop.permute.xlu0 %1531
  %1533 = vrot.lane.b32.xlu0 %v543, 32
  %v1534 = vpop.permute.xlu0 %1533
  %1535 = vrot.lane.b32.xlu0 %v544, 32
  %v1536 = vpop.permute.xlu0 %1535
  %v1569 = vsel %vm17, %v256, %v578
  %v1570 = vsel %vm17, %v257, %v580
  %v1571 = vsel %vm17, %v258, %v582
  %v1572 = vsel %vm17, %v259, %v584
  %v1573 = vsel %vm17, %v260, %v586
  %v1574 = vsel %vm17, %v261, %v588
  %v1575 = vsel %vm17, %v262, %v590
  %v1576 = vsel %vm17, %v263, %v592
  %v1577 = vsel %vm17, %v264, %v594
  %v1578 = vsel %vm17, %v265, %v596
  %v1579 = vsel %vm17, %v266, %v598
  %v1580 = vsel %vm17, %v267, %v600
  %v1581 = vsel %vm17, %v268, %v602
  %v1582 = vsel %vm17, %v269, %v604
  %v1583 = vsel %vm17, %v270, %v606
  %v1584 = vsel %vm17, %v271, %v608
  %v1585 = vsel %vm17, %v272, %v610
  %v1586 = vsel %vm17, %v273, %v612
  %v1587 = vsel %vm17, %v274, %v614
  %v1588 = vsel %vm17, %v275, %v616
  %v1589 = vsel %vm17, %v276, %v618
  %v1590 = vsel %vm17, %v277, %v620
  %v1591 = vsel %vm17, %v278, %v622
  %v1592 = vsel %vm17, %v279, %v624
  %v1593 = vsel %vm17, %v280, %v626
  %v1594 = vsel %vm17, %v281, %v628
  %v1595 = vsel %vm17, %v282, %v630
  %v1596 = vsel %vm17, %v283, %v632
  %v1597 = vsel %vm17, %v284, %v634
  %v1598 = vsel %vm17, %v285, %v636
  %v1599 = vsel %vm17, %v286, %v638
  %v1600 = vsel %vm17, %v287, %v640
  %vm1601 = vcmask 64512
  %v1602 = vsel %vm1601, %v1569, %v706
  %v1603 = vsel %vm1601, %v1570, %v708
  %v1604 = vsel %vm1601, %v1571, %v710
  %v1605 = vsel %vm1601, %v1572, %v712
  %v1606 = vsel %vm1601, %v1573, %v714
  %v1607 = vsel %vm1601, %v1574, %v716
  %v1608 = vsel %vm1601, %v1575, %v718
  %v1609 = vsel %vm1601, %v1576, %v720
  %v1610 = vsel %vm1601, %v1577, %v722
  %v1611 = vsel %vm1601, %v1578, %v724
  %v1612 = vsel %vm1601, %v1579, %v726
  %v1613 = vsel %vm1601, %v1580, %v728
  %v1614 = vsel %vm1601, %v1581, %v730
  %v1615 = vsel %vm1601, %v1582, %v732
  %v1616 = vsel %vm1601, %v1583, %v734
  %v1617 = vsel %vm1601, %v1584, %v736
  %v1618 = vsel %vm1601, %v1585, %v738
  %v1619 = vsel %vm1601, %v1586, %v740
  %v1620 = vsel %vm1601, %v1587, %v742
  %v1621 = vsel %vm1601, %v1588, %v744
  %v1622 = vsel %vm1601, %v1589, %v746
  %v1623 = vsel %vm1601, %v1590, %v748
  %v1624 = vsel %vm1601, %v1591, %v750
  %v1625 = vsel %vm1601, %v1592, %v752
  %v1626 = vsel %vm1601, %v1593, %v754
  %v1627 = vsel %vm1601, %v1594, %v756
  %v1628 = vsel %vm1601, %v1595, %v758
  %v1629 = vsel %vm1601, %v1596, %v760
  %v1630 = vsel %vm1601, %v1597, %v762
  %v1631 = vsel %vm1601, %v1598, %v764
  %v1632 = vsel %vm1601, %v1599, %v766
  %v1633 = vsel %vm1601, %v1600, %v768
  %vm1634 = vcmask 97280
  %v1635 = vsel %vm1634, %v1602, %v834
  %v1636 = vsel %vm1634, %v1603, %v836
  %v1637 = vsel %vm1634, %v1604, %v838
  %v1638 = vsel %vm1634, %v1605, %v840
  %v1639 = vsel %vm1634, %v1606, %v842
  %v1640 = vsel %vm1634, %v1607, %v844
  %v1641 = vsel %vm1634, %v1608, %v846
  %v1642 = vsel %vm1634, %v1609, %v848
  %v1643 = vsel %vm1634, %v1610, %v850
  %v1644 = vsel %vm1634, %v1611, %v852
  %v1645 = vsel %vm1634, %v1612, %v854
  %v1646 = vsel %vm1634, %v1613, %v856
  %v1647 = vsel %vm1634, %v1614, %v858
  %v1648 = vsel %vm1634, %v1615, %v860
  %v1649 = vsel %vm1634, %v1616, %v862
  %v1650 = vsel %vm1634, %v1617, %v864
  %v1651 = vsel %vm1634, %v1618, %v866
  %v1652 = vsel %vm1634, %v1619, %v868
  %v1653 = vsel %vm1634, %v1620, %v870
  %v1654 = vsel %vm1634, %v1621, %v872
  %v1655 = vsel %vm1634, %v1622, %v874
  %v1656 = vsel %vm1634, %v1623, %v876
  %v1657 = vsel %vm1634, %v1624, %v878
  %v1658 = vsel %vm1634, %v1625, %v880
  %v1659 = vsel %vm1634, %v1626, %v882
  %v1660 = vsel %vm1634, %v1627, %v884
  %v1661 = vsel %vm1634, %v1628, %v886
  %v1662 = vsel %vm1634, %v1629, %v888
  %v1663 = vsel %vm1634, %v1630, %v890
  %v1664 = vsel %vm1634, %v1631, %v892
  %v1665 = vsel %vm1634, %v1632, %v894
  %v1666 = vsel %vm1634, %v1633, %v896
  %vm1667 = vcmask 130048
  %v1668 = vsel %vm1667, %v1635, %v962
  %v1669 = vsel %vm1667, %v1636, %v964
  %v1670 = vsel %vm1667, %v1637, %v966
  %v1671 = vsel %vm1667, %v1638, %v968
  %v1672 = vsel %vm1667, %v1639, %v970
  %v1673 = vsel %vm1667, %v1640, %v972
  %v1674 = vsel %vm1667, %v1641, %v974
  %v1675 = vsel %vm1667, %v1642, %v976
  %v1676 = vsel %vm1667, %v1643, %v978
  %v1677 = vsel %vm1667, %v1644, %v980
  %v1678 = vsel %vm1667, %v1645, %v982
  %v1679 = vsel %vm1667, %v1646, %v984
  %v1680 = vsel %vm1667, %v1647, %v986
  %v1681 = vsel %vm1667, %v1648, %v988
  %v1682 = vsel %vm1667, %v1649, %v990
  %v1683 = vsel %vm1667, %v1650, %v992
  %v1684 = vsel %vm1667, %v1651, %v994
  %v1685 = vsel %vm1667, %v1652, %v996
  %v1686 = vsel %vm1667, %v1653, %v998
  %v1687 = vsel %vm1667, %v1654, %v1000
  %v1688 = vsel %vm1667, %v1655, %v1002
  %v1689 = vsel %vm1667, %v1656, %v1004
  %v1690 = vsel %vm1667, %v1657, %v1006
  %v1691 = vsel %vm1667, %v1658, %v1008
  %v1692 = vsel %vm1667, %v1659, %v1010
  %v1693 = vsel %vm1667, %v1660, %v1012
  %v1694 = vsel %vm1667, %v1661, %v1014
  %v1695 = vsel %vm1667, %v1662, %v1016
  %v1696 = vsel %vm1667, %v1663, %v1018
  %v1697 = vsel %vm1667, %v1664, %v1020
  %v1698 = vsel %vm1667, %v1665, %v1022
  %v1699 = vsel %vm1667, %v1666, %v1024
  %vm1700 = vcmask 162816
  %v1701 = vsel %vm1700, %v1668, %v1090
  %v1702 = vsel %vm1700, %v1669, %v1092
  %v1703 = vsel %vm1700, %v1670, %v1094
  %v1704 = vsel %vm1700, %v1671, %v1096
  %v1705 = vsel %vm1700, %v1672, %v1098
  %v1706 = vsel %vm1700, %v1673, %v1100
  %v1707 = vsel %vm1700, %v1674, %v1102
  %v1708 = vsel %vm1700, %v1675, %v1104
  %v1709 = vsel %vm1700, %v1676, %v1106
  %v1710 = vsel %vm1700, %v1677, %v1108
  %v1711 = vsel %vm1700, %v1678, %v1110
  %v1712 = vsel %vm1700, %v1679, %v1112
  %v1713 = vsel %vm1700, %v1680, %v1114
  %v1714 = vsel %vm1700, %v1681, %v1116
  %v1715 = vsel %vm1700, %v1682, %v1118
  %v1716 = vsel %vm1700, %v1683, %v1120
  %v1717 = vsel %vm1700, %v1684, %v1122
  %v1718 = vsel %vm1700, %v1685, %v1124
  %v1719 = vsel %vm1700, %v1686, %v1126
  %v1720 = vsel %vm1700, %v1687, %v1128
  %v1721 = vsel %vm1700, %v1688, %v1130
  %v1722 = vsel %vm1700, %v1689, %v1132
  %v1723 = vsel %vm1700, %v1690, %v1134
  %v1724 = vsel %vm1700, %v1691, %v1136
  %v1725 = vsel %vm1700, %v1692, %v1138
  %v1726 = vsel %vm1700, %v1693, %v1140
  %v1727 = vsel %vm1700, %v1694, %v1142
  %v1728 = vsel %vm1700, %v1695, %v1144
  %v1729 = vsel %vm1700, %v1696, %v1146
  %v1730 = vsel %vm1700, %v1697, %v1148
  %v1731 = vsel %vm1700, %v1698, %v1150
  %v1732 = vsel %vm1700, %v1699, %v1152
  %vm1733 = vcmask 195584
  %v1734 = vsel %vm1733, %v1701, %v1218
  %v1735 = vsel %vm1733, %v1702, %v1220
  %v1736 = vsel %vm1733, %v1703, %v1222
  %v1737 = vsel %vm1733, %v1704, %v1224
  %v1738 = vsel %vm1733, %v1705, %v1226
  %v1739 = vsel %vm1733, %v1706, %v1228
  %v1740 = vsel %vm1733, %v1707, %v1230
  %v1741 = vsel %vm1733, %v1708, %v1232
  %v1742 = vsel %vm1733, %v1709, %v1234
  %v1743 = vsel %vm1733, %v1710, %v1236
  %v1744 = vsel %vm1733, %v1711, %v1238
  %v1745 = vsel %vm1733, %v1712, %v1240
  %v1746 = vsel %vm1733, %v1713, %v1242
  %v1747 = vsel %vm1733, %v1714, %v1244
  %v1748 = vsel %vm1733, %v1715, %v1246
  %v1749 = vsel %vm1733, %v1716, %v1248
  %v1750 = vsel %vm1733, %v1717, %v1250
  %v1751 = vsel %vm1733, %v1718, %v1252
  %v1752 = vsel %vm1733, %v1719, %v1254
  %v1753 = vsel %vm1733, %v1720, %v1256
  %v1754 = vsel %vm1733, %v1721, %v1258
  %v1755 = vsel %vm1733, %v1722, %v1260
  %v1756 = vsel %vm1733, %v1723, %v1262
  %v1757 = vsel %vm1733, %v1724, %v1264
  %v1758 = vsel %vm1733, %v1725, %v1266
  %v1759 = vsel %vm1733, %v1726, %v1268
  %v1760 = vsel %vm1733, %v1727, %v1270
  %v1761 = vsel %vm1733, %v1728, %v1272
  %v1762 = vsel %vm1733, %v1729, %v1274
  %v1763 = vsel %vm1733, %v1730, %v1276
  %v1764 = vsel %vm1733, %v1731, %v1278
  %v1765 = vsel %vm1733, %v1732, %v1280
  %vm1766 = vcmask 228352
  %v1767 = vsel %vm1766, %v1734, %v1346
  %v1768 = vsel %vm1766, %v1735, %v1348
  %v1769 = vsel %vm1766, %v1736, %v1350
  %v1770 = vsel %vm1766, %v1737, %v1352
  %v1771 = vsel %vm1766, %v1738, %v1354
  %v1772 = vsel %vm1766, %v1739, %v1356
  %v1773 = vsel %vm1766, %v1740, %v1358
  %v1774 = vsel %vm1766, %v1741, %v1360
  %v1775 = vsel %vm1766, %v1742, %v1362
  %v1776 = vsel %vm1766, %v1743, %v1364
  %v1777 = vsel %vm1766, %v1744, %v1366
  %v1778 = vsel %vm1766, %v1745, %v1368
  %v1779 = vsel %vm1766, %v1746, %v1370
  %v1780 = vsel %vm1766, %v1747, %v1372
  %v1781 = vsel %vm1766, %v1748, %v1374
  %v1782 = vsel %vm1766, %v1749, %v1376
  %v1783 = vsel %vm1766, %v1750, %v1378
  %v1784 = vsel %vm1766, %v1751, %v1380
  %v1785 = vsel %vm1766, %v1752, %v1382
  %v1786 = vsel %vm1766, %v1753, %v1384
  %v1787 = vsel %vm1766, %v1754, %v1386
  %v1788 = vsel %vm1766, %v1755, %v1388
  %v1789 = vsel %vm1766, %v1756, %v1390
  %v1790 = vsel %vm1766, %v1757, %v1392
  %v1791 = vsel %vm1766, %v1758, %v1394
  %v1792 = vsel %vm1766, %v1759, %v1396
  %v1793 = vsel %vm1766, %v1760, %v1398
  %v1794 = vsel %vm1766, %v1761, %v1400
  %v1795 = vsel %vm1766, %v1762, %v1402
  %v1796 = vsel %vm1766, %v1763, %v1404
  %v1797 = vsel %vm1766, %v1764, %v1406
  %v1798 = vsel %vm1766, %v1765, %v1408
  %vm1799 = vcmask 261120
  %v1800 = vsel %vm1799, %v1767, %v1474
  %v1801 = vsel %vm1799, %v1768, %v1476
  %v1802 = vsel %vm1799, %v1769, %v1478
  %v1803 = vsel %vm1799, %v1770, %v1480
  %v1804 = vsel %vm1799, %v1771, %v1482
  %v1805 = vsel %vm1799, %v1772, %v1484
  %v1806 = vsel %vm1799, %v1773, %v1486
  %v1807 = vsel %vm1799, %v1774, %v1488
  %v1808 = vsel %vm1799, %v1775, %v1490
  %v1809 = vsel %vm1799, %v1776, %v1492
  %v1810 = vsel %vm1799, %v1777, %v1494
  %v1811 = vsel %vm1799, %v1778, %v1496
  %v1812 = vsel %vm1799, %v1779, %v1498
  %v1813 = vsel %vm1799, %v1780, %v1500
  %v1814 = vsel %vm1799, %v1781, %v1502
  %v1815 = vsel %vm1799, %v1782, %v1504
  %v1816 = vsel %vm1799, %v1783, %v1506
  %v1817 = vsel %vm1799, %v1784, %v1508
  %v1818 = vsel %vm1799, %v1785, %v1510
  %v1819 = vsel %vm1799, %v1786, %v1512
  %v1820 = vsel %vm1799, %v1787, %v1514
  %v1821 = vsel %vm1799, %v1788, %v1516
  %v1822 = vsel %vm1799, %v1789, %v1518
  %v1823 = vsel %vm1799, %v1790, %v1520
  %v1824 = vsel %vm1799, %v1791, %v1522
  %v1825 = vsel %vm1799, %v1792, %v1524
  %v1826 = vsel %vm1799, %v1793, %v1526
  %v1827 = vsel %vm1799, %v1794, %v1528
  %v1828 = vsel %vm1799, %v1795, %v1530
  %v1829 = vsel %vm1799, %v1796, %v1532
  %v1830 = vsel %vm1799, %v1797, %v1534
  %v1831 = vsel %vm1799, %v1798, %v1536
  %v1832 = vld [vmem:[%s1] sm:$0xff]
  %v1833 = vld [vmem:[%s1 + $0x8] sm:$0xff]
  %v1834 = vld [vmem:[%s1 + $0x10] sm:$0xff]
  %v1835 = vld [vmem:[%s1 + $0x18] sm:$0xff]
  %v1836 = vld [vmem:[%s1 + $0x20] sm:$0xf]
  %v1837 = vld [vmem:[%s2] sm:$0x1]
  %v1839 = vperm.slane %v1837, 0
  %vm1841 = vcmask 293888
  %v1843 = vsel %vm1841, %v1800, 0
  %v1846 = vsel %vm1841, %v1801, 0
  %v1849 = vsel %vm1841, %v1802, 0
  %v1852 = vsel %vm1841, %v1803, 0
  %v1855 = vsel %vm1841, %v1804, 0
  %v1858 = vsel %vm1841, %v1805, 0
  %v1861 = vsel %vm1841, %v1806, 0
  %v1864 = vsel %vm1841, %v1807, 0
  %v1867 = vsel %vm1841, %v1808, 0
  %v1870 = vsel %vm1841, %v1809, 0
  %v1873 = vsel %vm1841, %v1810, 0
  %v1876 = vsel %vm1841, %v1811, 0
  %v1879 = vsel %vm1841, %v1812, 0
  %v1882 = vsel %vm1841, %v1813, 0
  %v1885 = vsel %vm1841, %v1814, 0
  %v1888 = vsel %vm1841, %v1815, 0
  %v1891 = vsel %vm1841, %v1816, 0
  %v1894 = vsel %vm1841, %v1817, 0
  %v1897 = vsel %vm1841, %v1818, 0
  %v1900 = vsel %vm1841, %v1819, 0
  %v1903 = vsel %vm1841, %v1820, 0
  %v1906 = vsel %vm1841, %v1821, 0
  %v1909 = vsel %vm1841, %v1822, 0
  %v1912 = vsel %vm1841, %v1823, 0
  %v1915 = vsel %vm1841, %v1824, 0
  %v1918 = vsel %vm1841, %v1825, 0
  %v1921 = vsel %vm1841, %v1826, 0
  %v1924 = vsel %vm1841, %v1827, 0
  %v1927 = vsel %vm1841, %v1828, 0
  %v1930 = vsel %vm1841, %v1829, 0
  %v1933 = vsel %vm1841, %v1830, 0
  %v1936 = vsel %vm1841, %v1831, 0
  %vm1938 = vcmask 1043456
  %v1940 = vsel %vm1938, %v1836, 0
  %1942 = vmatpush.msra.mxu0 0.0
  %1943 = vmatpush.msra.mxu0 0.0
  %1944 = vmatpush.msra.mxu0 0.0
  %1945 = vmatpush.msra.mxu0 0.0
  %1946 = vmatpush.msra.mxu0 0.0
  %1947 = vmatpush.msra.mxu0 0.0
  %1948 = vmatpush.msra.mxu0 0.0
  %1949 = vmatpush.msra.mxu0 0.0
  %1950 = vmatpush.msra.mxu0 0.0
  %1951 = vmatpush.msra.mxu0 0.0
  %1952 = vmatpush.msra.mxu0 0.0
  %1953 = vmatpush.msra.mxu0 %v1940
  %1954 = vmatpush.msra.mxu0 %v1835
  %1955 = vmatpush.msra.mxu0 %v1834
  %1956 = vmatpush.msra.mxu0 %v1833
  %1957 = vmatpush.msra.mxu0 %v1832
  %1958 = vmatmul.f32.gmra.mxu0 %v1843
  %v1959 = vpop.f32.mrf.mxu0
  %v1960 = vadd.f32 %v1839, %v1959
  %1961 = vmatmul.f32.gmra.mxu0 %v1846
  %v1962 = vpop.f32.mrf.mxu0
  %v1963 = vadd.f32 %v1839, %v1962
  %1964 = vmatmul.f32.gmra.mxu0 %v1849
  %v1965 = vpop.f32.mrf.mxu0
  %v1966 = vadd.f32 %v1839, %v1965
  %1967 = vmatmul.f32.gmra.mxu0 %v1852
  %v1968 = vpop.f32.mrf.mxu0
  %v1969 = vadd.f32 %v1839, %v1968
  %1970 = vmatmul.f32.gmra.mxu0 %v1855
  %v1971 = vpop.f32.mrf.mxu0
  %v1972 = vadd.f32 %v1839, %v1971
  %1973 = vmatmul.f32.gmra.mxu0 %v1858
  %v1974 = vpop.f32.mrf.mxu0
  %v1975 = vadd.f32 %v1839, %v1974
  %1976 = vmatmul.f32.gmra.mxu0 %v1861
  %v1977 = vpop.f32.mrf.mxu0
  %v1978 = vadd.f32 %v1839, %v1977
  %1979 = vmatmul.f32.gmra.mxu0 %v1864
  %v1980 = vpop.f32.mrf.mxu0
  %v1981 = vadd.f32 %v1839, %v1980
  %1982 = vmatmul.f32.gmra.mxu0 %v1867
  %v1983 = vpop.f32.mrf.mxu0
  %v1984 = vadd.f32 %v1839, %v1983
  %1985 = vmatmul.f32.gmra.mxu0 %v1870
  %v1986 = vpop.f32.mrf.mxu0
  %v1987 = vadd.f32 %v1839, %v1986
  %1988 = vmatmul.f32.gmra.mxu0 %v1873
  %v1989 = vpop.f32.mrf.mxu0
  %v1990 = vadd.f32 %v1839, %v1989
  %1991 = vmatmul.f32.gmra.mxu0 %v1876
  %v1992 = vpop.f32.mrf.mxu0
  %v1993 = vadd.f32 %v1839, %v1992
  %1994 = vmatmul.f32.gmra.mxu0 %v1879
  %v1995 = vpop.f32.mrf.mxu0
  %v1996 = vadd.f32 %v1839, %v1995
  %1997 = vmatmul.f32.gmra.mxu0 %v1882
  %v1998 = vpop.f32.mrf.mxu0
  %v1999 = vadd.f32 %v1839, %v1998
  %2000 = vmatmul.f32.gmra.mxu0 %v1885
  %v2001 = vpop.f32.mrf.mxu0
  %v2002 = vadd.f32 %v1839, %v2001
  %2003 = vmatmul.f32.gmra.mxu0 %v1888
  %v2004 = vpop.f32.mrf.mxu0
  %v2005 = vadd.f32 %v1839, %v2004
  %2006 = vmatmul.f32.gmra.mxu0 %v1891
  %v2007 = vpop.f32.mrf.mxu0
  %v2008 = vadd.f32 %v1839, %v2007
  %2009 = vmatmul.f32.gmra.mxu0 %v1894
  %v2010 = vpop.f32.mrf.mxu0
  %v2011 = vadd.f32 %v1839, %v2010
  %2012 = vmatmul.f32.gmra.mxu0 %v1897
  %v2013 = vpop.f32.mrf.mxu0
  %v2014 = vadd.f32 %v1839, %v2013
  %2015 = vmatmul.f32.gmra.mxu0 %v1900
  %v2016 = vpop.f32.mrf.mxu0
  %v2017 = vadd.f32 %v1839, %v2016
  %2018 = vmatmul.f32.gmra.mxu0 %v1903
  %v2019 = vpop.f32.mrf.mxu0
  %v2020 = vadd.f32 %v1839, %v2019
  %2021 = vmatmul.f32.gmra.mxu0 %v1906
  %v2022 = vpop.f32.mrf.mxu0
  %v2023 = vadd.f32 %v1839, %v2022
  %2024 = vmatmul.f32.gmra.mxu0 %v1909
  %v2025 = vpop.f32.mrf.mxu0
  %v2026 = vadd.f32 %v1839, %v2025
  %2027 = vmatmul.f32.gmra.mxu0 %v1912
  %v2028 = vpop.f32.mrf.mxu0
  %v2029 = vadd.f32 %v1839, %v2028
  %2030 = vmatmul.f32.gmra.mxu0 %v1915
  %v2031 = vpop.f32.mrf.mxu0
  %v2032 = vadd.f32 %v1839, %v2031
  %2033 = vmatmul.f32.gmra.mxu0 %v1918
  %v2034 = vpop.f32.mrf.mxu0
  %v2035 = vadd.f32 %v1839, %v2034
  %2036 = vmatmul.f32.gmra.mxu0 %v1921
  %v2037 = vpop.f32.mrf.mxu0
  %v2038 = vadd.f32 %v1839, %v2037
  %2039 = vmatmul.f32.gmra.mxu0 %v1924
  %v2040 = vpop.f32.mrf.mxu0
  %v2041 = vadd.f32 %v1839, %v2040
  %2042 = vmatmul.f32.gmra.mxu0 %v1927
  %v2043 = vpop.f32.mrf.mxu0
  %v2044 = vadd.f32 %v1839, %v2043
  %2045 = vmatmul.f32.gmra.mxu0 %v1930
  %v2046 = vpop.f32.mrf.mxu0
  %v2047 = vadd.f32 %v1839, %v2046
  %2048 = vmatmul.f32.gmra.mxu0 %v1933
  %v2049 = vpop.f32.mrf.mxu0
  %v2050 = vadd.f32 %v1839, %v2049
  %2051 = vmatmul.f32.gmra.mxu0 %v1936
  %v2052 = vpop.f32.mrf.mxu0
  %v2053 = vadd.f32 %v1839, %v2052
  %2054 = vdwg.mxu0
  %2055 = vst.msk [vmem:[%s3] sm:$0xff] %vm1601, %v1960
  %2056 = vst.msk [vmem:[%s3 + $0x8] sm:$0xff] %vm1601, %v1963
  %2057 = vst.msk [vmem:[%s3 + $0x10] sm:$0xff] %vm1601, %v1966
  %2058 = vst.msk [vmem:[%s3 + $0x18] sm:$0xff] %vm1601, %v1969
  %2059 = vst.msk [vmem:[%s3 + $0x20] sm:$0xff] %vm1601, %v1972
  %2060 = vst.msk [vmem:[%s3 + $0x28] sm:$0xff] %vm1601, %v1975
  %2061 = vst.msk [vmem:[%s3 + $0x30] sm:$0xff] %vm1601, %v1978
  %2062 = vst.msk [vmem:[%s3 + $0x38] sm:$0xff] %vm1601, %v1981
  %2063 = vst.msk [vmem:[%s3 + $0x40] sm:$0xff] %vm1601, %v1984
  %2064 = vst.msk [vmem:[%s3 + $0x48] sm:$0xff] %vm1601, %v1987
  %2065 = vst.msk [vmem:[%s3 + $0x50] sm:$0xff] %vm1601, %v1990
  %2066 = vst.msk [vmem:[%s3 + $0x58] sm:$0xff] %vm1601, %v1993
  %2067 = vst.msk [vmem:[%s3 + $0x60] sm:$0xff] %vm1601, %v1996
  %2068 = vst.msk [vmem:[%s3 + $0x68] sm:$0xff] %vm1601, %v1999
  %2069 = vst.msk [vmem:[%s3 + $0x70] sm:$0xff] %vm1601, %v2002
  %2070 = vst.msk [vmem:[%s3 + $0x78] sm:$0xff] %vm1601, %v2005
  %2071 = vst.msk [vmem:[%s3 + $0x80] sm:$0xff] %vm1601, %v2008
  %2072 = vst.msk [vmem:[%s3 + $0x88] sm:$0xff] %vm1601, %v2011
  %2073 = vst.msk [vmem:[%s3 + $0x90] sm:$0xff] %vm1601, %v2014
  %2074 = vst.msk [vmem:[%s3 + $0x98] sm:$0xff] %vm1601, %v2017
  %2075 = vst.msk [vmem:[%s3 + $0xa0] sm:$0xff] %vm1601, %v2020
  %2076 = vst.msk [vmem:[%s3 + $0xa8] sm:$0xff] %vm1601, %v2023
  %2077 = vst.msk [vmem:[%s3 + $0xb0] sm:$0xff] %vm1601, %v2026
  %2078 = vst.msk [vmem:[%s3 + $0xb8] sm:$0xff] %vm1601, %v2029
  %2079 = vst.msk [vmem:[%s3 + $0xc0] sm:$0xff] %vm1601, %v2032
  %2080 = vst.msk [vmem:[%s3 + $0xc8] sm:$0xff] %vm1601, %v2035
  %2081 = vst.msk [vmem:[%s3 + $0xd0] sm:$0xff] %vm1601, %v2038
  %2082 = vst.msk [vmem:[%s3 + $0xd8] sm:$0xff] %vm1601, %v2041
  %2083 = vst.msk [vmem:[%s3 + $0xe0] sm:$0xff] %vm1601, %v2044
  %2084 = vst.msk [vmem:[%s3 + $0xe8] sm:$0xff] %vm1601, %v2047
  %2085 = vst.msk [vmem:[%s3 + $0xf0] sm:$0xff] %vm1601, %v2050
  %2086 = vst.msk [vmem:[%s3 + $0xf8] sm:$0xff] %vm1601, %v2053
  %v2087 = vsel %vm1601, %v1960, 0.0
  %v2088 = vsel %vm1601, %v1963, 0.0
  %v2089 = vadd.f32 %v2087, %v2088
  %v2090 = vsel %vm1601, %v1966, 0.0
  %v2091 = vadd.f32 %v2089, %v2090
  %v2092 = vsel %vm1601, %v1969, 0.0
  %v2093 = vadd.f32 %v2091, %v2092
  %v2094 = vsel %vm1601, %v1972, 0.0
  %v2095 = vadd.f32 %v2093, %v2094
  %v2096 = vsel %vm1601, %v1975, 0.0
  %v2097 = vadd.f32 %v2095, %v2096
  %v2098 = vsel %vm1601, %v1978, 0.0
  %v2099 = vadd.f32 %v2097, %v2098
  %v2100 = vsel %vm1601, %v1981, 0.0
  %v2101 = vadd.f32 %v2099, %v2100
  %v2102 = vsel %vm1601, %v1984, 0.0
  %v2103 = vadd.f32 %v2101, %v2102
  %v2104 = vsel %vm1601, %v1987, 0.0
  %v2105 = vadd.f32 %v2103, %v2104
  %v2106 = vsel %vm1601, %v1990, 0.0
  %v2107 = vadd.f32 %v2105, %v2106
  %v2108 = vsel %vm1601, %v1993, 0.0
  %v2109 = vadd.f32 %v2107, %v2108
  %v2110 = vsel %vm1601, %v1996, 0.0
  %v2111 = vadd.f32 %v2109, %v2110
  %v2112 = vsel %vm1601, %v1999, 0.0
  %v2113 = vadd.f32 %v2111, %v2112
  %v2114 = vsel %vm1601, %v2002, 0.0
  %v2115 = vadd.f32 %v2113, %v2114
  %v2116 = vsel %vm1601, %v2005, 0.0
  %v2117 = vadd.f32 %v2115, %v2116
  %v2118 = vsel %vm1601, %v2008, 0.0
  %v2119 = vadd.f32 %v2117, %v2118
  %v2120 = vsel %vm1601, %v2011, 0.0
  %v2121 = vadd.f32 %v2119, %v2120
  %v2122 = vsel %vm1601, %v2014, 0.0
  %v2123 = vadd.f32 %v2121, %v2122
  %v2124 = vsel %vm1601, %v2017, 0.0
  %v2125 = vadd.f32 %v2123, %v2124
  %v2126 = vsel %vm1601, %v2020, 0.0
  %v2127 = vadd.f32 %v2125, %v2126
  %v2128 = vsel %vm1601, %v2023, 0.0
  %v2129 = vadd.f32 %v2127, %v2128
  %v2130 = vsel %vm1601, %v2026, 0.0
  %v2131 = vadd.f32 %v2129, %v2130
  %v2132 = vsel %vm1601, %v2029, 0.0
  %v2133 = vadd.f32 %v2131, %v2132
  %v2134 = vsel %vm1601, %v2032, 0.0
  %v2135 = vadd.f32 %v2133, %v2134
  %v2136 = vsel %vm1601, %v2035, 0.0
  %v2137 = vadd.f32 %v2135, %v2136
  %v2138 = vsel %vm1601, %v2038, 0.0
  %v2139 = vadd.f32 %v2137, %v2138
  %v2140 = vsel %vm1601, %v2041, 0.0
  %v2141 = vadd.f32 %v2139, %v2140
  %v2142 = vsel %vm1601, %v2044, 0.0
  %v2143 = vadd.f32 %v2141, %v2142
  %v2144 = vsel %vm1601, %v2047, 0.0
  %v2145 = vadd.f32 %v2143, %v2144
  %v2146 = vsel %vm1601, %v2050, 0.0
  %v2147 = vadd.f32 %v2145, %v2146
  %v2148 = vsel %vm1601, %v2053, 0.0
  %v2149 = vadd.f32 %v2147, %v2148
  %v2150 = vrot.slane %v2149, 4
  %v2151 = vadd.f32 %v2149, %v2150
  %v2152 = vrot.slane %v2151, 2
  %v2153 = vadd.f32 %v2151, %v2152
  %v2154 = vrot.slane %v2153, 1
  %v2155 = vadd.f32 %v2153, %v2154
  %v2156 = vadd.f32 %v2155, 0.0
  %v2157 = vmul.f32 %v1960, %v1960
  %v2158 = vmul.f32 %v1963, %v1963
  %v2159 = vmul.f32 %v1966, %v1966
  %v2160 = vmul.f32 %v1969, %v1969
  %v2161 = vmul.f32 %v1972, %v1972
  %v2162 = vmul.f32 %v1975, %v1975
  %v2163 = vmul.f32 %v1978, %v1978
  %v2164 = vmul.f32 %v1981, %v1981
  %v2165 = vmul.f32 %v1984, %v1984
  %v2166 = vmul.f32 %v1987, %v1987
  %v2167 = vmul.f32 %v1990, %v1990
  %v2168 = vmul.f32 %v1993, %v1993
  %v2169 = vmul.f32 %v1996, %v1996
  %v2170 = vmul.f32 %v1999, %v1999
  %v2171 = vmul.f32 %v2002, %v2002
  %v2172 = vmul.f32 %v2005, %v2005
  %v2173 = vmul.f32 %v2008, %v2008
  %v2174 = vmul.f32 %v2011, %v2011
  %v2175 = vmul.f32 %v2014, %v2014
  %v2176 = vmul.f32 %v2017, %v2017
  %v2177 = vmul.f32 %v2020, %v2020
  %v2178 = vmul.f32 %v2023, %v2023
  %v2179 = vmul.f32 %v2026, %v2026
  %v2180 = vmul.f32 %v2029, %v2029
  %v2181 = vmul.f32 %v2032, %v2032
  %v2182 = vmul.f32 %v2035, %v2035
  %v2183 = vmul.f32 %v2038, %v2038
  %v2184 = vmul.f32 %v2041, %v2041
  %v2185 = vmul.f32 %v2044, %v2044
  %v2186 = vmul.f32 %v2047, %v2047
  %v2187 = vmul.f32 %v2050, %v2050
  %v2188 = vmul.f32 %v2053, %v2053
  %v2189 = vsel %vm1601, %v2157, 0.0
  %v2190 = vsel %vm1601, %v2158, 0.0
  %v2191 = vadd.f32 %v2189, %v2190
  %v2192 = vsel %vm1601, %v2159, 0.0
  %v2193 = vadd.f32 %v2191, %v2192
  %v2194 = vsel %vm1601, %v2160, 0.0
  %v2195 = vadd.f32 %v2193, %v2194
  %v2196 = vsel %vm1601, %v2161, 0.0
  %v2197 = vadd.f32 %v2195, %v2196
  %v2198 = vsel %vm1601, %v2162, 0.0
  %v2199 = vadd.f32 %v2197, %v2198
  %v2200 = vsel %vm1601, %v2163, 0.0
  %v2201 = vadd.f32 %v2199, %v2200
  %v2202 = vsel %vm1601, %v2164, 0.0
  %v2203 = vadd.f32 %v2201, %v2202
  %v2204 = vsel %vm1601, %v2165, 0.0
  %v2205 = vadd.f32 %v2203, %v2204
  %v2206 = vsel %vm1601, %v2166, 0.0
  %v2207 = vadd.f32 %v2205, %v2206
  %v2208 = vsel %vm1601, %v2167, 0.0
  %v2209 = vadd.f32 %v2207, %v2208
  %v2210 = vsel %vm1601, %v2168, 0.0
  %v2211 = vadd.f32 %v2209, %v2210
  %v2212 = vsel %vm1601, %v2169, 0.0
  %v2213 = vadd.f32 %v2211, %v2212
  %v2214 = vsel %vm1601, %v2170, 0.0
  %v2215 = vadd.f32 %v2213, %v2214
  %v2216 = vsel %vm1601, %v2171, 0.0
  %v2217 = vadd.f32 %v2215, %v2216
  %v2218 = vsel %vm1601, %v2172, 0.0
  %v2219 = vadd.f32 %v2217, %v2218
  %v2220 = vsel %vm1601, %v2173, 0.0
  %v2221 = vadd.f32 %v2219, %v2220
  %v2222 = vsel %vm1601, %v2174, 0.0
  %v2223 = vadd.f32 %v2221, %v2222
  %v2224 = vsel %vm1601, %v2175, 0.0
  %v2225 = vadd.f32 %v2223, %v2224
  %v2226 = vsel %vm1601, %v2176, 0.0
  %v2227 = vadd.f32 %v2225, %v2226
  %v2228 = vsel %vm1601, %v2177, 0.0
  %v2229 = vadd.f32 %v2227, %v2228
  %v2230 = vsel %vm1601, %v2178, 0.0
  %v2231 = vadd.f32 %v2229, %v2230
  %v2232 = vsel %vm1601, %v2179, 0.0
  %v2233 = vadd.f32 %v2231, %v2232
  %v2234 = vsel %vm1601, %v2180, 0.0
  %v2235 = vadd.f32 %v2233, %v2234
  %v2236 = vsel %vm1601, %v2181, 0.0
  %v2237 = vadd.f32 %v2235, %v2236
  %v2238 = vsel %vm1601, %v2182, 0.0
  %v2239 = vadd.f32 %v2237, %v2238
  %v2240 = vsel %vm1601, %v2183, 0.0
  %v2241 = vadd.f32 %v2239, %v2240
  %v2242 = vsel %vm1601, %v2184, 0.0
  %v2243 = vadd.f32 %v2241, %v2242
  %v2244 = vsel %vm1601, %v2185, 0.0
  %v2245 = vadd.f32 %v2243, %v2244
  %v2246 = vsel %vm1601, %v2186, 0.0
  %v2247 = vadd.f32 %v2245, %v2246
  %v2248 = vsel %vm1601, %v2187, 0.0
  %v2249 = vadd.f32 %v2247, %v2248
  %v2250 = vsel %vm1601, %v2188, 0.0
  %v2251 = vadd.f32 %v2249, %v2250
  %v2252 = vrot.slane %v2251, 4
  %v2253 = vadd.f32 %v2251, %v2252
  %v2254 = vrot.slane %v2253, 2
  %v2255 = vadd.f32 %v2253, %v2254
  %v2256 = vrot.slane %v2255, 1
  %v2257 = vadd.f32 %v2255, %v2256
  %v2258 = vadd.f32 %v2257, 0.0
  %s2259 = scalar_lea.vmem [#allocation2], 432
  %v2260 = vld [vmem:[%s2259] sm:$0xff]
  %v2261 = vld [vmem:[%s2259 + $0x8] sm:$0xff]
  %v2262 = vld [vmem:[%s2259 + $0x18] sm:$0xff]
  %v2263 = vld [vmem:[%s2259 + $0x20] sm:$0xff]
  %v2264 = vld [vmem:[%s2259 + $0x30] sm:$0xff]
  %v2265 = vld [vmem:[%s2259 + $0x38] sm:$0xff]
  %v2266 = vld [vmem:[%s2259 + $0x48] sm:$0xff]
  %v2267 = vld [vmem:[%s2259 + $0x50] sm:$0xff]
  %v2268 = vld [vmem:[%s2259 + $0x60] sm:$0xff]
  %v2269 = vld [vmem:[%s2259 + $0x68] sm:$0xff]
  %v2270 = vld [vmem:[%s2259 + $0x78] sm:$0xff]
  %v2271 = vld [vmem:[%s2259 + $0x80] sm:$0xff]
  %v2272 = vld [vmem:[%s2259 + $0x90] sm:$0xff]
  %v2273 = vld [vmem:[%s2259 + $0x98] sm:$0xff]
  %v2274 = vld [vmem:[%s2259 + $0xa8] sm:$0xff]
  %v2275 = vld [vmem:[%s2259 + $0xb0] sm:$0xff]
  %v2276 = vld [vmem:[%s2259 + $0xc0] sm:$0xff]
  %v2277 = vld [vmem:[%s2259 + $0xc8] sm:$0xff]
  %v2278 = vld [vmem:[%s2259 + $0xd8] sm:$0xff]
  %v2279 = vld [vmem:[%s2259 + $0xe0] sm:$0xff]
  %v2280 = vld [vmem:[%s2259 + $0xf0] sm:$0xff]
  %v2281 = vld [vmem:[%s2259 + $0xf8] sm:$0xff]
  %v2282 = vld [vmem:[%s2259 + $0x108] sm:$0xff]
  %v2283 = vld [vmem:[%s2259 + $0x110] sm:$0xff]
  %v2284 = vld [vmem:[%s2259 + $0x120] sm:$0xff]
  %v2285 = vld [vmem:[%s2259 + $0x128] sm:$0xff]
  %v2286 = vld [vmem:[%s2259 + $0x138] sm:$0xff]
  %v2287 = vld [vmem:[%s2259 + $0x140] sm:$0xff]
  %v2288 = vld [vmem:[%s2259 + $0x150] sm:$0xff]
  %v2289 = vld [vmem:[%s2259 + $0x158] sm:$0xff]
  %v2290 = vld [vmem:[%s2259 + $0x168] sm:$0xff]
  %v2291 = vld [vmem:[%s2259 + $0x170] sm:$0xff]
  %v2292 = vld [vmem:[%s2259 + $0x1] sm:$0xff]
  %v2293 = vld [vmem:[%s2259 + $0x9] sm:$0xff]
  %v2294 = vld [vmem:[%s2259 + $0x19] sm:$0xff]
  %v2295 = vld [vmem:[%s2259 + $0x21] sm:$0xff]
  %v2296 = vld [vmem:[%s2259 + $0x31] sm:$0xff]
  %v2297 = vld [vmem:[%s2259 + $0x39] sm:$0xff]
  %v2298 = vld [vmem:[%s2259 + $0x49] sm:$0xff]
  %v2299 = vld [vmem:[%s2259 + $0x51] sm:$0xff]
  %v2300 = vld [vmem:[%s2259 + $0x61] sm:$0xff]
  %v2301 = vld [vmem:[%s2259 + $0x69] sm:$0xff]
  %v2302 = vld [vmem:[%s2259 + $0x79] sm:$0xff]
  %v2303 = vld [vmem:[%s2259 + $0x81] sm:$0xff]
  %v2304 = vld [vmem:[%s2259 + $0x91] sm:$0xff]
  %v2305 = vld [vmem:[%s2259 + $0x99] sm:$0xff]
  %v2306 = vld [vmem:[%s2259 + $0xa9] sm:$0xff]
  %v2307 = vld [vmem:[%s2259 + $0xb1] sm:$0xff]
  %v2308 = vld [vmem:[%s2259 + $0xc1] sm:$0xff]
  %v2309 = vld [vmem:[%s2259 + $0xc9] sm:$0xff]
  %v2310 = vld [vmem:[%s2259 + $0xd9] sm:$0xff]
  %v2311 = vld [vmem:[%s2259 + $0xe1] sm:$0xff]
  %v2312 = vld [vmem:[%s2259 + $0xf1] sm:$0xff]
  %v2313 = vld [vmem:[%s2259 + $0xf9] sm:$0xff]
  %v2314 = vld [vmem:[%s2259 + $0x109] sm:$0xff]
  %v2315 = vld [vmem:[%s2259 + $0x111] sm:$0xff]
  %v2316 = vld [vmem:[%s2259 + $0x121] sm:$0xff]
  %v2317 = vld [vmem:[%s2259 + $0x129] sm:$0xff]
  %v2318 = vld [vmem:[%s2259 + $0x139] sm:$0xff]
  %v2319 = vld [vmem:[%s2259 + $0x141] sm:$0xff]
  %v2320 = vld [vmem:[%s2259 + $0x151] sm:$0xff]
  %v2321 = vld [vmem:[%s2259 + $0x159] sm:$0xff]
  %v2322 = vld [vmem:[%s2259 + $0x169] sm:$0xff]
  %v2323 = vld [vmem:[%s2259 + $0x171] sm:$0xff]
  %v2324 = vld [vmem:[%s2259 + $0x2] sm:$0xff]
  %v2325 = vld [vmem:[%s2259 + $0xa] sm:$0xff]
  %v2326 = vld [vmem:[%s2259 + $0x1a] sm:$0xff]
  %v2327 = vld [vmem:[%s2259 + $0x22] sm:$0xff]
  %v2328 = vld [vmem:[%s2259 + $0x32] sm:$0xff]
  %v2329 = vld [vmem:[%s2259 + $0x3a] sm:$0xff]
  %v2330 = vld [vmem:[%s2259 + $0x4a] sm:$0xff]
  %v2331 = vld [vmem:[%s2259 + $0x52] sm:$0xff]
  %v2332 = vld [vmem:[%s2259 + $0x62] sm:$0xff]
  %v2333 = vld [vmem:[%s2259 + $0x6a] sm:$0xff]
  %v2334 = vld [vmem:[%s2259 + $0x7a] sm:$0xff]
  %v2335 = vld [vmem:[%s2259 + $0x82] sm:$0xff]
  %v2336 = vld [vmem:[%s2259 + $0x92] sm:$0xff]
  %v2337 = vld [vmem:[%s2259 + $0x9a] sm:$0xff]
  %v2338 = vld [vmem:[%s2259 + $0xaa] sm:$0xff]
  %v2339 = vld [vmem:[%s2259 + $0xb2] sm:$0xff]
  %v2340 = vld [vmem:[%s2259 + $0xc2] sm:$0xff]
  %v2341 = vld [vmem:[%s2259 + $0xca] sm:$0xff]
  %v2342 = vld [vmem:[%s2259 + $0xda] sm:$0xff]
  %v2343 = vld [vmem:[%s2259 + $0xe2] sm:$0xff]
  %v2344 = vld [vmem:[%s2259 + $0xf2] sm:$0xff]
  %v2345 = vld [vmem:[%s2259 + $0xfa] sm:$0xff]
  %v2346 = vld [vmem:[%s2259 + $0x10a] sm:$0xff]
  %v2347 = vld [vmem:[%s2259 + $0x112] sm:$0xff]
  %v2348 = vld [vmem:[%s2259 + $0x122] sm:$0xff]
  %v2349 = vld [vmem:[%s2259 + $0x12a] sm:$0xff]
  %v2350 = vld [vmem:[%s2259 + $0x13a] sm:$0xff]
  %v2351 = vld [vmem:[%s2259 + $0x142] sm:$0xff]
  %v2352 = vld [vmem:[%s2259 + $0x152] sm:$0xff]
  %v2353 = vld [vmem:[%s2259 + $0x15a] sm:$0xff]
  %v2354 = vld [vmem:[%s2259 + $0x16a] sm:$0xff]
  %v2355 = vld [vmem:[%s2259 + $0x172] sm:$0xff]
  %s2356 = scalar_lea.vmem [#allocation2], 456
  %v2357 = vld [vmem:[%s2356] sm:$0xff]
  %v2358 = vld [vmem:[%s2356 + $0x8] sm:$0xff]
  %v2359 = vld [vmem:[%s2356 + $0x18] sm:$0xff]
  %v2360 = vld [vmem:[%s2356 + $0x20] sm:$0xff]
  %v2361 = vld [vmem:[%s2356 + $0x30] sm:$0xff]
  %v2362 = vld [vmem:[%s2356 + $0x38] sm:$0xff]
  %v2363 = vld [vmem:[%s2356 + $0x48] sm:$0xff]
  %v2364 = vld [vmem:[%s2356 + $0x50] sm:$0xff]
  %v2365 = vld [vmem:[%s2356 + $0x60] sm:$0xff]
  %v2366 = vld [vmem:[%s2356 + $0x68] sm:$0xff]
  %v2367 = vld [vmem:[%s2356 + $0x78] sm:$0xff]
  %v2368 = vld [vmem:[%s2356 + $0x80] sm:$0xff]
  %v2369 = vld [vmem:[%s2356 + $0x90] sm:$0xff]
  %v2370 = vld [vmem:[%s2356 + $0x98] sm:$0xff]
  %v2371 = vld [vmem:[%s2356 + $0xa8] sm:$0xff]
  %v2372 = vld [vmem:[%s2356 + $0xb0] sm:$0xff]
  %v2373 = vld [vmem:[%s2356 + $0xc0] sm:$0xff]
  %v2374 = vld [vmem:[%s2356 + $0xc8] sm:$0xff]
  %v2375 = vld [vmem:[%s2356 + $0xd8] sm:$0xff]
  %v2376 = vld [vmem:[%s2356 + $0xe0] sm:$0xff]
  %v2377 = vld [vmem:[%s2356 + $0xf0] sm:$0xff]
  %v2378 = vld [vmem:[%s2356 + $0xf8] sm:$0xff]
  %v2379 = vld [vmem:[%s2356 + $0x108] sm:$0xff]
  %v2380 = vld [vmem:[%s2356 + $0x110] sm:$0xff]
  %v2381 = vld [vmem:[%s2356 + $0x120] sm:$0xff]
  %v2382 = vld [vmem:[%s2356 + $0x128] sm:$0xff]
  %v2383 = vld [vmem:[%s2356 + $0x138] sm:$0xff]
  %v2384 = vld [vmem:[%s2356 + $0x140] sm:$0xff]
  %v2385 = vld [vmem:[%s2356 + $0x150] sm:$0xff]
  %v2386 = vld [vmem:[%s2356 + $0x158] sm:$0xff]
  %v2387 = vld [vmem:[%s2356 + $0x168] sm:$0xff]
  %v2388 = vld [vmem:[%s2356 + $0x170] sm:$0xff]
  %v2389 = vld [vmem:[%s2356 + $0x1] sm:$0xff]
  %v2390 = vld [vmem:[%s2356 + $0x9] sm:$0xff]
  %v2391 = vld [vmem:[%s2356 + $0x19] sm:$0xff]
  %v2392 = vld [vmem:[%s2356 + $0x21] sm:$0xff]
  %v2393 = vld [vmem:[%s2356 + $0x31] sm:$0xff]
  %v2394 = vld [vmem:[%s2356 + $0x39] sm:$0xff]
  %v2395 = vld [vmem:[%s2356 + $0x49] sm:$0xff]
  %v2396 = vld [vmem:[%s2356 + $0x51] sm:$0xff]
  %v2397 = vld [vmem:[%s2356 + $0x61] sm:$0xff]
  %v2398 = vld [vmem:[%s2356 + $0x69] sm:$0xff]
  %v2399 = vld [vmem:[%s2356 + $0x79] sm:$0xff]
  %v2400 = vld [vmem:[%s2356 + $0x81] sm:$0xff]
  %v2401 = vld [vmem:[%s2356 + $0x91] sm:$0xff]
  %v2402 = vld [vmem:[%s2356 + $0x99] sm:$0xff]
  %v2403 = vld [vmem:[%s2356 + $0xa9] sm:$0xff]
  %v2404 = vld [vmem:[%s2356 + $0xb1] sm:$0xff]
  %v2405 = vld [vmem:[%s2356 + $0xc1] sm:$0xff]
  %v2406 = vld [vmem:[%s2356 + $0xc9] sm:$0xff]
  %v2407 = vld [vmem:[%s2356 + $0xd9] sm:$0xff]
  %v2408 = vld [vmem:[%s2356 + $0xe1] sm:$0xff]
  %v2409 = vld [vmem:[%s2356 + $0xf1] sm:$0xff]
  %v2410 = vld [vmem:[%s2356 + $0xf9] sm:$0xff]
  %v2411 = vld [vmem:[%s2356 + $0x109] sm:$0xff]
  %v2412 = vld [vmem:[%s2356 + $0x111] sm:$0xff]
  %v2413 = vld [vmem:[%s2356 + $0x121] sm:$0xff]
  %v2414 = vld [vmem:[%s2356 + $0x129] sm:$0xff]
  %v2415 = vld [vmem:[%s2356 + $0x139] sm:$0xff]
  %v2416 = vld [vmem:[%s2356 + $0x141] sm:$0xff]
  %v2417 = vld [vmem:[%s2356 + $0x151] sm:$0xff]
  %v2418 = vld [vmem:[%s2356 + $0x159] sm:$0xff]
  %v2419 = vld [vmem:[%s2356 + $0x169] sm:$0xff]
  %v2420 = vld [vmem:[%s2356 + $0x171] sm:$0xff]
  %v2421 = vld [vmem:[%s2356 + $0x2] sm:$0xff]
  %v2422 = vld [vmem:[%s2356 + $0xa] sm:$0xff]
  %v2423 = vld [vmem:[%s2356 + $0x1a] sm:$0xff]
  %v2424 = vld [vmem:[%s2356 + $0x22] sm:$0xff]
  %v2425 = vld [vmem:[%s2356 + $0x32] sm:$0xff]
  %v2426 = vld [vmem:[%s2356 + $0x3a] sm:$0xff]
  %v2427 = vld [vmem:[%s2356 + $0x4a] sm:$0xff]
  %v2428 = vld [vmem:[%s2356 + $0x52] sm:$0xff]
  %v2429 = vld [vmem:[%s2356 + $0x62] sm:$0xff]
  %v2430 = vld [vmem:[%s2356 + $0x6a] sm:$0xff]
  %v2431 = vld [vmem:[%s2356 + $0x7a] sm:$0xff]
  %v2432 = vld [vmem:[%s2356 + $0x82] sm:$0xff]
  %v2433 = vld [vmem:[%s2356 + $0x92] sm:$0xff]
  %v2434 = vld [vmem:[%s2356 + $0x9a] sm:$0xff]
  %v2435 = vld [vmem:[%s2356 + $0xaa] sm:$0xff]
  %v2436 = vld [vmem:[%s2356 + $0xb2] sm:$0xff]
  %v2437 = vld [vmem:[%s2356 + $0xc2] sm:$0xff]
  %v2438 = vld [vmem:[%s2356 + $0xca] sm:$0xff]
  %v2439 = vld [vmem:[%s2356 + $0xda] sm:$0xff]
  %v2440 = vld [vmem:[%s2356 + $0xe2] sm:$0xff]
  %v2441 = vld [vmem:[%s2356 + $0xf2] sm:$0xff]
  %v2442 = vld [vmem:[%s2356 + $0xfa] sm:$0xff]
  %v2443 = vld [vmem:[%s2356 + $0x10a] sm:$0xff]
  %v2444 = vld [vmem:[%s2356 + $0x112] sm:$0xff]
  %v2445 = vld [vmem:[%s2356 + $0x122] sm:$0xff]
  %v2446 = vld [vmem:[%s2356 + $0x12a] sm:$0xff]
  %v2447 = vld [vmem:[%s2356 + $0x13a] sm:$0xff]
  %v2448 = vld [vmem:[%s2356 + $0x142] sm:$0xff]
  %v2449 = vld [vmem:[%s2356 + $0x152] sm:$0xff]
  %v2450 = vld [vmem:[%s2356 + $0x15a] sm:$0xff]
  %v2451 = vld [vmem:[%s2356 + $0x16a] sm:$0xff]
  %v2452 = vld [vmem:[%s2356 + $0x172] sm:$0xff]
  %s2453 = scalar_lea.vmem [#allocation2], 480
  %v2454 = vld [vmem:[%s2453] sm:$0xff]
  %v2455 = vld [vmem:[%s2453 + $0x8] sm:$0xff]
  %v2456 = vld [vmem:[%s2453 + $0x18] sm:$0xff]
  %v2457 = vld [vmem:[%s2453 + $0x20] sm:$0xff]
  %v2458 = vld [vmem:[%s2453 + $0x30] sm:$0xff]
  %v2459 = vld [vmem:[%s2453 + $0x38] sm:$0xff]
  %v2460 = vld [vmem:[%s2453 + $0x48] sm:$0xff]
  %v2461 = vld [vmem:[%s2453 + $0x50] sm:$0xff]
  %v2462 = vld [vmem:[%s2453 + $0x60] sm:$0xff]
  %v2463 = vld [vmem:[%s2453 + $0x68] sm:$0xff]
  %v2464 = vld [vmem:[%s2453 + $0x78] sm:$0xff]
  %v2465 = vld [vmem:[%s2453 + $0x80] sm:$0xff]
  %v2466 = vld [vmem:[%s2453 + $0x90] sm:$0xff]
  %v2467 = vld [vmem:[%s2453 + $0x98] sm:$0xff]
  %v2468 = vld [vmem:[%s2453 + $0xa8] sm:$0xff]
  %v2469 = vld [vmem:[%s2453 + $0xb0] sm:$0xff]
  %v2470 = vld [vmem:[%s2453 + $0xc0] sm:$0xff]
  %v2471 = vld [vmem:[%s2453 + $0xc8] sm:$0xff]
  %v2472 = vld [vmem:[%s2453 + $0xd8] sm:$0xff]
  %v2473 = vld [vmem:[%s2453 + $0xe0] sm:$0xff]
  %v2474 = vld [vmem:[%s2453 + $0xf0] sm:$0xff]
  %v2475 = vld [vmem:[%s2453 + $0xf8] sm:$0xff]
  %v2476 = vld [vmem:[%s2453 + $0x108] sm:$0xff]
  %v2477 = vld [vmem:[%s2453 + $0x110] sm:$0xff]
  %v2478 = vld [vmem:[%s2453 + $0x120] sm:$0xff]
  %v2479 = vld [vmem:[%s2453 + $0x128] sm:$0xff]
  %v2480 = vld [vmem:[%s2453 + $0x138] sm:$0xff]
  %v2481 = vld [vmem:[%s2453 + $0x140] sm:$0xff]
  %v2482 = vld [vmem:[%s2453 + $0x150] sm:$0xff]
  %v2483 = vld [vmem:[%s2453 + $0x158] sm:$0xff]
  %v2484 = vld [vmem:[%s2453 + $0x168] sm:$0xff]
  %v2485 = vld [vmem:[%s2453 + $0x170] sm:$0xff]
  %v2486 = vld [vmem:[%s2453 + $0x1] sm:$0xff]
  %v2487 = vld [vmem:[%s2453 + $0x9] sm:$0xff]
  %v2488 = vld [vmem:[%s2453 + $0x19] sm:$0xff]
  %v2489 = vld [vmem:[%s2453 + $0x21] sm:$0xff]
  %v2490 = vld [vmem:[%s2453 + $0x31] sm:$0xff]
  %v2491 = vld [vmem:[%s2453 + $0x39] sm:$0xff]
  %v2492 = vld [vmem:[%s2453 + $0x49] sm:$0xff]
  %v2493 = vld [vmem:[%s2453 + $0x51] sm:$0xff]
  %v2494 = vld [vmem:[%s2453 + $0x61] sm:$0xff]
  %v2495 = vld [vmem:[%s2453 + $0x69] sm:$0xff]
  %v2496 = vld [vmem:[%s2453 + $0x79] sm:$0xff]
  %v2497 = vld [vmem:[%s2453 + $0x81] sm:$0xff]
  %v2498 = vld [vmem:[%s2453 + $0x91] sm:$0xff]
  %v2499 = vld [vmem:[%s2453 + $0x99] sm:$0xff]
  %v2500 = vld [vmem:[%s2453 + $0xa9] sm:$0xff]
  %v2501 = vld [vmem:[%s2453 + $0xb1] sm:$0xff]
  %v2502 = vld [vmem:[%s2453 + $0xc1] sm:$0xff]
  %v2503 = vld [vmem:[%s2453 + $0xc9] sm:$0xff]
  %v2504 = vld [vmem:[%s2453 + $0xd9] sm:$0xff]
  %v2505 = vld [vmem:[%s2453 + $0xe1] sm:$0xff]
  %v2506 = vld [vmem:[%s2453 + $0xf1] sm:$0xff]
  %v2507 = vld [vmem:[%s2453 + $0xf9] sm:$0xff]
  %v2508 = vld [vmem:[%s2453 + $0x109] sm:$0xff]
  %v2509 = vld [vmem:[%s2453 + $0x111] sm:$0xff]
  %v2510 = vld [vmem:[%s2453 + $0x121] sm:$0xff]
  %v2511 = vld [vmem:[%s2453 + $0x129] sm:$0xff]
  %v2512 = vld [vmem:[%s2453 + $0x139] sm:$0xff]
  %v2513 = vld [vmem:[%s2453 + $0x141] sm:$0xff]
  %v2514 = vld [vmem:[%s2453 + $0x151] sm:$0xff]
  %v2515 = vld [vmem:[%s2453 + $0x159] sm:$0xff]
  %v2516 = vld [vmem:[%s2453 + $0x169] sm:$0xff]
  %v2517 = vld [vmem:[%s2453 + $0x171] sm:$0xff]
  %v2518 = vld [vmem:[%s2453 + $0x2] sm:$0xff]
  %v2519 = vld [vmem:[%s2453 + $0xa] sm:$0xff]
  %v2520 = vld [vmem:[%s2453 + $0x1a] sm:$0xff]
  %v2521 = vld [vmem:[%s2453 + $0x22] sm:$0xff]
  %v2522 = vld [vmem:[%s2453 + $0x32] sm:$0xff]
  %v2523 = vld [vmem:[%s2453 + $0x3a] sm:$0xff]
  %v2524 = vld [vmem:[%s2453 + $0x4a] sm:$0xff]
  %v2525 = vld [vmem:[%s2453 + $0x52] sm:$0xff]
  %v2526 = vld [vmem:[%s2453 + $0x62] sm:$0xff]
  %v2527 = vld [vmem:[%s2453 + $0x6a] sm:$0xff]
  %v2528 = vld [vmem:[%s2453 + $0x7a] sm:$0xff]
  %v2529 = vld [vmem:[%s2453 + $0x82] sm:$0xff]
  %v2530 = vld [vmem:[%s2453 + $0x92] sm:$0xff]
  %v2531 = vld [vmem:[%s2453 + $0x9a] sm:$0xff]
  %v2532 = vld [vmem:[%s2453 + $0xaa] sm:$0xff]
  %v2533 = vld [vmem:[%s2453 + $0xb2] sm:$0xff]
  %v2534 = vld [vmem:[%s2453 + $0xc2] sm:$0xff]
  %v2535 = vld [vmem:[%s2453 + $0xca] sm:$0xff]
  %v2536 = vld [vmem:[%s2453 + $0xda] sm:$0xff]
  %v2537 = vld [vmem:[%s2453 + $0xe2] sm:$0xff]
  %v2538 = vld [vmem:[%s2453 + $0xf2] sm:$0xff]
  %v2539 = vld [vmem:[%s2453 + $0xfa] sm:$0xff]
  %v2540 = vld [vmem:[%s2453 + $0x10a] sm:$0xff]
  %v2541 = vld [vmem:[%s2453 + $0x112] sm:$0xff]
  %v2542 = vld [vmem:[%s2453 + $0x122] sm:$0xff]
  %v2543 = vld [vmem:[%s2453 + $0x12a] sm:$0xff]
  %v2544 = vld [vmem:[%s2453 + $0x13a] sm:$0xff]
  %v2545 = vld [vmem:[%s2453 + $0x142] sm:$0xff]
  %v2546 = vld [vmem:[%s2453 + $0x152] sm:$0xff]
  %v2547 = vld [vmem:[%s2453 + $0x15a] sm:$0xff]
  %v2548 = vld [vmem:[%s2453 + $0x16a] sm:$0xff]
  %v2549 = vld [vmem:[%s2453 + $0x172] sm:$0xff]
  %2582 = vrot.lane.b32.xlu0 %v2292, 4
  %v2583 = vpop.permute.xlu0 %2582
  %2584 = vrot.lane.b32.xlu0 %v2293, 4
  %v2585 = vpop.permute.xlu0 %2584
  %2586 = vrot.lane.b32.xlu0 %v2294, 4
  %v2587 = vpop.permute.xlu0 %2586
  %2588 = vrot.lane.b32.xlu0 %v2295, 4
  %v2589 = vpop.permute.xlu0 %2588
  %2590 = vrot.lane.b32.xlu0 %v2296, 4
  %v2591 = vpop.permute.xlu0 %2590
  %2592 = vrot.lane.b32.xlu0 %v2297, 4
  %v2593 = vpop.permute.xlu0 %2592
  %2594 = vrot.lane.b32.xlu0 %v2298, 4
  %v2595 = vpop.permute.xlu0 %2594
  %2596 = vrot.lane.b32.xlu0 %v2299, 4
  %v2597 = vpop.permute.xlu0 %2596
  %2598 = vrot.lane.b32.xlu0 %v2300, 4
  %v2599 = vpop.permute.xlu0 %2598
  %2600 = vrot.lane.b32.xlu0 %v2301, 4
  %v2601 = vpop.permute.xlu0 %2600
  %2602 = vrot.lane.b32.xlu0 %v2302, 4
  %v2603 = vpop.permute.xlu0 %2602
  %2604 = vrot.lane.b32.xlu0 %v2303, 4
  %v2605 = vpop.permute.xlu0 %2604
  %2606 = vrot.lane.b32.xlu0 %v2304, 4
  %v2607 = vpop.permute.xlu0 %2606
  %2608 = vrot.lane.b32.xlu0 %v2305, 4
  %v2609 = vpop.permute.xlu0 %2608
  %2610 = vrot.lane.b32.xlu0 %v2306, 4
  %v2611 = vpop.permute.xlu0 %2610
  %2612 = vrot.lane.b32.xlu0 %v2307, 4
  %v2613 = vpop.permute.xlu0 %2612
  %2614 = vrot.lane.b32.xlu0 %v2308, 4
  %v2615 = vpop.permute.xlu0 %2614
  %2616 = vrot.lane.b32.xlu0 %v2309, 4
  %v2617 = vpop.permute.xlu0 %2616
  %2618 = vrot.lane.b32.xlu0 %v2310, 4
  %v2619 = vpop.permute.xlu0 %2618
  %2620 = vrot.lane.b32.xlu0 %v2311, 4
  %v2621 = vpop.permute.xlu0 %2620
  %2622 = vrot.lane.b32.xlu0 %v2312, 4
  %v2623 = vpop.permute.xlu0 %2622
  %2624 = vrot.lane.b32.xlu0 %v2313, 4
  %v2625 = vpop.permute.xlu0 %2624
  %2626 = vrot.lane.b32.xlu0 %v2314, 4
  %v2627 = vpop.permute.xlu0 %2626
  %2628 = vrot.lane.b32.xlu0 %v2315, 4
  %v2629 = vpop.permute.xlu0 %2628
  %2630 = vrot.lane.b32.xlu0 %v2316, 4
  %v2631 = vpop.permute.xlu0 %2630
  %2632 = vrot.lane.b32.xlu0 %v2317, 4
  %v2633 = vpop.permute.xlu0 %2632
  %2634 = vrot.lane.b32.xlu0 %v2318, 4
  %v2635 = vpop.permute.xlu0 %2634
  %2636 = vrot.lane.b32.xlu0 %v2319, 4
  %v2637 = vpop.permute.xlu0 %2636
  %2638 = vrot.lane.b32.xlu0 %v2320, 4
  %v2639 = vpop.permute.xlu0 %2638
  %2640 = vrot.lane.b32.xlu0 %v2321, 4
  %v2641 = vpop.permute.xlu0 %2640
  %2642 = vrot.lane.b32.xlu0 %v2322, 4
  %v2643 = vpop.permute.xlu0 %2642
  %2644 = vrot.lane.b32.xlu0 %v2323, 4
  %v2645 = vpop.permute.xlu0 %2644
  %2710 = vrot.lane.b32.xlu0 %v2324, 8
  %v2711 = vpop.permute.xlu0 %2710
  %2712 = vrot.lane.b32.xlu0 %v2325, 8
  %v2713 = vpop.permute.xlu0 %2712
  %2714 = vrot.lane.b32.xlu0 %v2326, 8
  %v2715 = vpop.permute.xlu0 %2714
  %2716 = vrot.lane.b32.xlu0 %v2327, 8
  %v2717 = vpop.permute.xlu0 %2716
  %2718 = vrot.lane.b32.xlu0 %v2328, 8
  %v2719 = vpop.permute.xlu0 %2718
  %2720 = vrot.lane.b32.xlu0 %v2329, 8
  %v2721 = vpop.permute.xlu0 %2720
  %2722 = vrot.lane.b32.xlu0 %v2330, 8
  %v2723 = vpop.permute.xlu0 %2722
  %2724 = vrot.lane.b32.xlu0 %v2331, 8
  %v2725 = vpop.permute.xlu0 %2724
  %2726 = vrot.lane.b32.xlu0 %v2332, 8
  %v2727 = vpop.permute.xlu0 %2726
  %2728 = vrot.lane.b32.xlu0 %v2333, 8
  %v2729 = vpop.permute.xlu0 %2728
  %2730 = vrot.lane.b32.xlu0 %v2334, 8
  %v2731 = vpop.permute.xlu0 %2730
  %2732 = vrot.lane.b32.xlu0 %v2335, 8
  %v2733 = vpop.permute.xlu0 %2732
  %2734 = vrot.lane.b32.xlu0 %v2336, 8
  %v2735 = vpop.permute.xlu0 %2734
  %2736 = vrot.lane.b32.xlu0 %v2337, 8
  %v2737 = vpop.permute.xlu0 %2736
  %2738 = vrot.lane.b32.xlu0 %v2338, 8
  %v2739 = vpop.permute.xlu0 %2738
  %2740 = vrot.lane.b32.xlu0 %v2339, 8
  %v2741 = vpop.permute.xlu0 %2740
  %2742 = vrot.lane.b32.xlu0 %v2340, 8
  %v2743 = vpop.permute.xlu0 %2742
  %2744 = vrot.lane.b32.xlu0 %v2341, 8
  %v2745 = vpop.permute.xlu0 %2744
  %2746 = vrot.lane.b32.xlu0 %v2342, 8
  %v2747 = vpop.permute.xlu0 %2746
  %2748 = vrot.lane.b32.xlu0 %v2343, 8
  %v2749 = vpop.permute.xlu0 %2748
  %2750 = vrot.lane.b32.xlu0 %v2344, 8
  %v2751 = vpop.permute.xlu0 %2750
  %2752 = vrot.lane.b32.xlu0 %v2345, 8
  %v2753 = vpop.permute.xlu0 %2752
  %2754 = vrot.lane.b32.xlu0 %v2346, 8
  %v2755 = vpop.permute.xlu0 %2754
  %2756 = vrot.lane.b32.xlu0 %v2347, 8
  %v2757 = vpop.permute.xlu0 %2756
  %2758 = vrot.lane.b32.xlu0 %v2348, 8
  %v2759 = vpop.permute.xlu0 %2758
  %2760 = vrot.lane.b32.xlu0 %v2349, 8
  %v2761 = vpop.permute.xlu0 %2760
  %2762 = vrot.lane.b32.xlu0 %v2350, 8
  %v2763 = vpop.permute.xlu0 %2762
  %2764 = vrot.lane.b32.xlu0 %v2351, 8
  %v2765 = vpop.permute.xlu0 %2764
  %2766 = vrot.lane.b32.xlu0 %v2352, 8
  %v2767 = vpop.permute.xlu0 %2766
  %2768 = vrot.lane.b32.xlu0 %v2353, 8
  %v2769 = vpop.permute.xlu0 %2768
  %2770 = vrot.lane.b32.xlu0 %v2354, 8
  %v2771 = vpop.permute.xlu0 %2770
  %2772 = vrot.lane.b32.xlu0 %v2355, 8
  %v2773 = vpop.permute.xlu0 %2772
  %2838 = vrot.lane.b32.xlu0 %v2357, 12
  %v2839 = vpop.permute.xlu0 %2838
  %2840 = vrot.lane.b32.xlu0 %v2358, 12
  %v2841 = vpop.permute.xlu0 %2840
  %2842 = vrot.lane.b32.xlu0 %v2359, 12
  %v2843 = vpop.permute.xlu0 %2842
  %2844 = vrot.lane.b32.xlu0 %v2360, 12
  %v2845 = vpop.permute.xlu0 %2844
  %2846 = vrot.lane.b32.xlu0 %v2361, 12
  %v2847 = vpop.permute.xlu0 %2846
  %2848 = vrot.lane.b32.xlu0 %v2362, 12
  %v2849 = vpop.permute.xlu0 %2848
  %2850 = vrot.lane.b32.xlu0 %v2363, 12
  %v2851 = vpop.permute.xlu0 %2850
  %2852 = vrot.lane.b32.xlu0 %v2364, 12
  %v2853 = vpop.permute.xlu0 %2852
  %2854 = vrot.lane.b32.xlu0 %v2365, 12
  %v2855 = vpop.permute.xlu0 %2854
  %2856 = vrot.lane.b32.xlu0 %v2366, 12
  %v2857 = vpop.permute.xlu0 %2856
  %2858 = vrot.lane.b32.xlu0 %v2367, 12
  %v2859 = vpop.permute.xlu0 %2858
  %2860 = vrot.lane.b32.xlu0 %v2368, 12
  %v2861 = vpop.permute.xlu0 %2860
  %2862 = vrot.lane.b32.xlu0 %v2369, 12
  %v2863 = vpop.permute.xlu0 %2862
  %2864 = vrot.lane.b32.xlu0 %v2370, 12
  %v2865 = vpop.permute.xlu0 %2864
  %2866 = vrot.lane.b32.xlu0 %v2371, 12
  %v2867 = vpop.permute.xlu0 %2866
  %2868 = vrot.lane.b32.xlu0 %v2372, 12
  %v2869 = vpop.permute.xlu0 %2868
  %2870 = vrot.lane.b32.xlu0 %v2373, 12
  %v2871 = vpop.permute.xlu0 %2870
  %2872 = vrot.lane.b32.xlu0 %v2374, 12
  %v2873 = vpop.permute.xlu0 %2872
  %2874 = vrot.lane.b32.xlu0 %v2375, 12
  %v2875 = vpop.permute.xlu0 %2874
  %2876 = vrot.lane.b32.xlu0 %v2376, 12
  %v2877 = vpop.permute.xlu0 %2876
  %2878 = vrot.lane.b32.xlu0 %v2377, 12
  %v2879 = vpop.permute.xlu0 %2878
  %2880 = vrot.lane.b32.xlu0 %v2378, 12
  %v2881 = vpop.permute.xlu0 %2880
  %2882 = vrot.lane.b32.xlu0 %v2379, 12
  %v2883 = vpop.permute.xlu0 %2882
  %2884 = vrot.lane.b32.xlu0 %v2380, 12
  %v2885 = vpop.permute.xlu0 %2884
  %2886 = vrot.lane.b32.xlu0 %v2381, 12
  %v2887 = vpop.permute.xlu0 %2886
  %2888 = vrot.lane.b32.xlu0 %v2382, 12
  %v2889 = vpop.permute.xlu0 %2888
  %2890 = vrot.lane.b32.xlu0 %v2383, 12
  %v2891 = vpop.permute.xlu0 %2890
  %2892 = vrot.lane.b32.xlu0 %v2384, 12
  %v2893 = vpop.permute.xlu0 %2892
  %2894 = vrot.lane.b32.xlu0 %v2385, 12
  %v2895 = vpop.permute.xlu0 %2894
  %2896 = vrot.lane.b32.xlu0 %v2386, 12
  %v2897 = vpop.permute.xlu0 %2896
  %2898 = vrot.lane.b32.xlu0 %v2387, 12
  %v2899 = vpop.permute.xlu0 %2898
  %2900 = vrot.lane.b32.xlu0 %v2388, 12
  %v2901 = vpop.permute.xlu0 %2900
  %2966 = vrot.lane.b32.xlu0 %v2389, 16
  %v2967 = vpop.permute.xlu0 %2966
  %2968 = vrot.lane.b32.xlu0 %v2390, 16
  %v2969 = vpop.permute.xlu0 %2968
  %2970 = vrot.lane.b32.xlu0 %v2391, 16
  %v2971 = vpop.permute.xlu0 %2970
  %2972 = vrot.lane.b32.xlu0 %v2392, 16
  %v2973 = vpop.permute.xlu0 %2972
  %2974 = vrot.lane.b32.xlu0 %v2393, 16
  %v2975 = vpop.permute.xlu0 %2974
  %2976 = vrot.lane.b32.xlu0 %v2394, 16
  %v2977 = vpop.permute.xlu0 %2976
  %2978 = vrot.lane.b32.xlu0 %v2395, 16
  %v2979 = vpop.permute.xlu0 %2978
  %2980 = vrot.lane.b32.xlu0 %v2396, 16
  %v2981 = vpop.permute.xlu0 %2980
  %2982 = vrot.lane.b32.xlu0 %v2397, 16
  %v2983 = vpop.permute.xlu0 %2982
  %2984 = vrot.lane.b32.xlu0 %v2398, 16
  %v2985 = vpop.permute.xlu0 %2984
  %2986 = vrot.lane.b32.xlu0 %v2399, 16
  %v2987 = vpop.permute.xlu0 %2986
  %2988 = vrot.lane.b32.xlu0 %v2400, 16
  %v2989 = vpop.permute.xlu0 %2988
  %2990 = vrot.lane.b32.xlu0 %v2401, 16
  %v2991 = vpop.permute.xlu0 %2990
  %2992 = vrot.lane.b32.xlu0 %v2402, 16
  %v2993 = vpop.permute.xlu0 %2992
  %2994 = vrot.lane.b32.xlu0 %v2403, 16
  %v2995 = vpop.permute.xlu0 %2994
  %2996 = vrot.lane.b32.xlu0 %v2404, 16
  %v2997 = vpop.permute.xlu0 %2996
  %2998 = vrot.lane.b32.xlu0 %v2405, 16
  %v2999 = vpop.permute.xlu0 %2998
  %3000 = vrot.lane.b32.xlu0 %v2406, 16
  %v3001 = vpop.permute.xlu0 %3000
  %3002 = vrot.lane.b32.xlu0 %v2407, 16
  %v3003 = vpop.permute.xlu0 %3002
  %3004 = vrot.lane.b32.xlu0 %v2408, 16
  %v3005 = vpop.permute.xlu0 %3004
  %3006 = vrot.lane.b32.xlu0 %v2409, 16
  %v3007 = vpop.permute.xlu0 %3006
  %3008 = vrot.lane.b32.xlu0 %v2410, 16
  %v3009 = vpop.permute.xlu0 %3008
  %3010 = vrot.lane.b32.xlu0 %v2411, 16
  %v3011 = vpop.permute.xlu0 %3010
  %3012 = vrot.lane.b32.xlu0 %v2412, 16
  %v3013 = vpop.permute.xlu0 %3012
  %3014 = vrot.lane.b32.xlu0 %v2413, 16
  %v3015 = vpop.permute.xlu0 %3014
  %3016 = vrot.lane.b32.xlu0 %v2414, 16
  %v3017 = vpop.permute.xlu0 %3016
  %3018 = vrot.lane.b32.xlu0 %v2415, 16
  %v3019 = vpop.permute.xlu0 %3018
  %3020 = vrot.lane.b32.xlu0 %v2416, 16
  %v3021 = vpop.permute.xlu0 %3020
  %3022 = vrot.lane.b32.xlu0 %v2417, 16
  %v3023 = vpop.permute.xlu0 %3022
  %3024 = vrot.lane.b32.xlu0 %v2418, 16
  %v3025 = vpop.permute.xlu0 %3024
  %3026 = vrot.lane.b32.xlu0 %v2419, 16
  %v3027 = vpop.permute.xlu0 %3026
  %3028 = vrot.lane.b32.xlu0 %v2420, 16
  %v3029 = vpop.permute.xlu0 %3028
  %3094 = vrot.lane.b32.xlu0 %v2421, 20
  %v3095 = vpop.permute.xlu0 %3094
  %3096 = vrot.lane.b32.xlu0 %v2422, 20
  %v3097 = vpop.permute.xlu0 %3096
  %3098 = vrot.lane.b32.xlu0 %v2423, 20
  %v3099 = vpop.permute.xlu0 %3098
  %3100 = vrot.lane.b32.xlu0 %v2424, 20
  %v3101 = vpop.permute.xlu0 %3100
  %3102 = vrot.lane.b32.xlu0 %v2425, 20
  %v3103 = vpop.permute.xlu0 %3102
  %3104 = vrot.lane.b32.xlu0 %v2426, 20
  %v3105 = vpop.permute.xlu0 %3104
  %3106 = vrot.lane.b32.xlu0 %v2427, 20
  %v3107 = vpop.permute.xlu0 %3106
  %3108 = vrot.lane.b32.xlu0 %v2428, 20
  %v3109 = vpop.permute.xlu0 %3108
  %3110 = vrot.lane.b32.xlu0 %v2429, 20
  %v3111 = vpop.permute.xlu0 %3110
  %3112 = vrot.lane.b32.xlu0 %v2430, 20
  %v3113 = vpop.permute.xlu0 %3112
  %3114 = vrot.lane.b32.xlu0 %v2431, 20
  %v3115 = vpop.permute.xlu0 %3114
  %3116 = vrot.lane.b32.xlu0 %v2432, 20
  %v3117 = vpop.permute.xlu0 %3116
  %3118 = vrot.lane.b32.xlu0 %v2433, 20
  %v3119 = vpop.permute.xlu0 %3118
  %3120 = vrot.lane.b32.xlu0 %v2434, 20
  %v3121 = vpop.permute.xlu0 %3120
  %3122 = vrot.lane.b32.xlu0 %v2435, 20
  %v3123 = vpop.permute.xlu0 %3122
  %3124 = vrot.lane.b32.xlu0 %v2436, 20
  %v3125 = vpop.permute.xlu0 %3124
  %3126 = vrot.lane.b32.xlu0 %v2437, 20
  %v3127 = vpop.permute.xlu0 %3126
  %3128 = vrot.lane.b32.xlu0 %v2438, 20
  %v3129 = vpop.permute.xlu0 %3128
  %3130 = vrot.lane.b32.xlu0 %v2439, 20
  %v3131 = vpop.permute.xlu0 %3130
  %3132 = vrot.lane.b32.xlu0 %v2440, 20
  %v3133 = vpop.permute.xlu0 %3132
  %3134 = vrot.lane.b32.xlu0 %v2441, 20
  %v3135 = vpop.permute.xlu0 %3134
  %3136 = vrot.lane.b32.xlu0 %v2442, 20
  %v3137 = vpop.permute.xlu0 %3136
  %3138 = vrot.lane.b32.xlu0 %v2443, 20
  %v3139 = vpop.permute.xlu0 %3138
  %3140 = vrot.lane.b32.xlu0 %v2444, 20
  %v3141 = vpop.permute.xlu0 %3140
  %3142 = vrot.lane.b32.xlu0 %v2445, 20
  %v3143 = vpop.permute.xlu0 %3142
  %3144 = vrot.lane.b32.xlu0 %v2446, 20
  %v3145 = vpop.permute.xlu0 %3144
  %3146 = vrot.lane.b32.xlu0 %v2447, 20
  %v3147 = vpop.permute.xlu0 %3146
  %3148 = vrot.lane.b32.xlu0 %v2448, 20
  %v3149 = vpop.permute.xlu0 %3148
  %3150 = vrot.lane.b32.xlu0 %v2449, 20
  %v3151 = vpop.permute.xlu0 %3150
  %3152 = vrot.lane.b32.xlu0 %v2450, 20
  %v3153 = vpop.permute.xlu0 %3152
  %3154 = vrot.lane.b32.xlu0 %v2451, 20
  %v3155 = vpop.permute.xlu0 %3154
  %3156 = vrot.lane.b32.xlu0 %v2452, 20
  %v3157 = vpop.permute.xlu0 %3156
  %3222 = vrot.lane.b32.xlu0 %v2454, 24
  %v3223 = vpop.permute.xlu0 %3222
  %3224 = vrot.lane.b32.xlu0 %v2455, 24
  %v3225 = vpop.permute.xlu0 %3224
  %3226 = vrot.lane.b32.xlu0 %v2456, 24
  %v3227 = vpop.permute.xlu0 %3226
  %3228 = vrot.lane.b32.xlu0 %v2457, 24
  %v3229 = vpop.permute.xlu0 %3228
  %3230 = vrot.lane.b32.xlu0 %v2458, 24
  %v3231 = vpop.permute.xlu0 %3230
  %3232 = vrot.lane.b32.xlu0 %v2459, 24
  %v3233 = vpop.permute.xlu0 %3232
  %3234 = vrot.lane.b32.xlu0 %v2460, 24
  %v3235 = vpop.permute.xlu0 %3234
  %3236 = vrot.lane.b32.xlu0 %v2461, 24
  %v3237 = vpop.permute.xlu0 %3236
  %3238 = vrot.lane.b32.xlu0 %v2462, 24
  %v3239 = vpop.permute.xlu0 %3238
  %3240 = vrot.lane.b32.xlu0 %v2463, 24
  %v3241 = vpop.permute.xlu0 %3240
  %3242 = vrot.lane.b32.xlu0 %v2464, 24
  %v3243 = vpop.permute.xlu0 %3242
  %3244 = vrot.lane.b32.xlu0 %v2465, 24
  %v3245 = vpop.permute.xlu0 %3244
  %3246 = vrot.lane.b32.xlu0 %v2466, 24
  %v3247 = vpop.permute.xlu0 %3246
  %3248 = vrot.lane.b32.xlu0 %v2467, 24
  %v3249 = vpop.permute.xlu0 %3248
  %3250 = vrot.lane.b32.xlu0 %v2468, 24
  %v3251 = vpop.permute.xlu0 %3250
  %3252 = vrot.lane.b32.xlu0 %v2469, 24
  %v3253 = vpop.permute.xlu0 %3252
  %3254 = vrot.lane.b32.xlu0 %v2470, 24
  %v3255 = vpop.permute.xlu0 %3254
  %3256 = vrot.lane.b32.xlu0 %v2471, 24
  %v3257 = vpop.permute.xlu0 %3256
  %3258 = vrot.lane.b32.xlu0 %v2472, 24
  %v3259 = vpop.permute.xlu0 %3258
  %3260 = vrot.lane.b32.xlu0 %v2473, 24
  %v3261 = vpop.permute.xlu0 %3260
  %3262 = vrot.lane.b32.xlu0 %v2474, 24
  %v3263 = vpop.permute.xlu0 %3262
  %3264 = vrot.lane.b32.xlu0 %v2475, 24
  %v3265 = vpop.permute.xlu0 %3264
  %3266 = vrot.lane.b32.xlu0 %v2476, 24
  %v3267 = vpop.permute.xlu0 %3266
  %3268 = vrot.lane.b32.xlu0 %v2477, 24
  %v3269 = vpop.permute.xlu0 %3268
  %3270 = vrot.lane.b32.xlu0 %v2478, 24
  %v3271 = vpop.permute.xlu0 %3270
  %3272 = vrot.lane.b32.xlu0 %v2479, 24
  %v3273 = vpop.permute.xlu0 %3272
  %3274 = vrot.lane.b32.xlu0 %v2480, 24
  %v3275 = vpop.permute.xlu0 %3274
  %3276 = vrot.lane.b32.xlu0 %v2481, 24
  %v3277 = vpop.permute.xlu0 %3276
  %3278 = vrot.lane.b32.xlu0 %v2482, 24
  %v3279 = vpop.permute.xlu0 %3278
  %3280 = vrot.lane.b32.xlu0 %v2483, 24
  %v3281 = vpop.permute.xlu0 %3280
  %3282 = vrot.lane.b32.xlu0 %v2484, 24
  %v3283 = vpop.permute.xlu0 %3282
  %3284 = vrot.lane.b32.xlu0 %v2485, 24
  %v3285 = vpop.permute.xlu0 %3284
  %3350 = vrot.lane.b32.xlu0 %v2486, 28
  %v3351 = vpop.permute.xlu0 %3350
  %3352 = vrot.lane.b32.xlu0 %v2487, 28
  %v3353 = vpop.permute.xlu0 %3352
  %3354 = vrot.lane.b32.xlu0 %v2488, 28
  %v3355 = vpop.permute.xlu0 %3354
  %3356 = vrot.lane.b32.xlu0 %v2489, 28
  %v3357 = vpop.permute.xlu0 %3356
  %3358 = vrot.lane.b32.xlu0 %v2490, 28
  %v3359 = vpop.permute.xlu0 %3358
  %3360 = vrot.lane.b32.xlu0 %v2491, 28
  %v3361 = vpop.permute.xlu0 %3360
  %3362 = vrot.lane.b32.xlu0 %v2492, 28
  %v3363 = vpop.permute.xlu0 %3362
  %3364 = vrot.lane.b32.xlu0 %v2493, 28
  %v3365 = vpop.permute.xlu0 %3364
  %3366 = vrot.lane.b32.xlu0 %v2494, 28
  %v3367 = vpop.permute.xlu0 %3366
  %3368 = vrot.lane.b32.xlu0 %v2495, 28
  %v3369 = vpop.permute.xlu0 %3368
  %3370 = vrot.lane.b32.xlu0 %v2496, 28
  %v3371 = vpop.permute.xlu0 %3370
  %3372 = vrot.lane.b32.xlu0 %v2497, 28
  %v3373 = vpop.permute.xlu0 %3372
  %3374 = vrot.lane.b32.xlu0 %v2498, 28
  %v3375 = vpop.permute.xlu0 %3374
  %3376 = vrot.lane.b32.xlu0 %v2499, 28
  %v3377 = vpop.permute.xlu0 %3376
  %3378 = vrot.lane.b32.xlu0 %v2500, 28
  %v3379 = vpop.permute.xlu0 %3378
  %3380 = vrot.lane.b32.xlu0 %v2501, 28
  %v3381 = vpop.permute.xlu0 %3380
  %3382 = vrot.lane.b32.xlu0 %v2502, 28
  %v3383 = vpop.permute.xlu0 %3382
  %3384 = vrot.lane.b32.xlu0 %v2503, 28
  %v3385 = vpop.permute.xlu0 %3384
  %3386 = vrot.lane.b32.xlu0 %v2504, 28
  %v3387 = vpop.permute.xlu0 %3386
  %3388 = vrot.lane.b32.xlu0 %v2505, 28
  %v3389 = vpop.permute.xlu0 %3388
  %3390 = vrot.lane.b32.xlu0 %v2506, 28
  %v3391 = vpop.permute.xlu0 %3390
  %3392 = vrot.lane.b32.xlu0 %v2507, 28
  %v3393 = vpop.permute.xlu0 %3392
  %3394 = vrot.lane.b32.xlu0 %v2508, 28
  %v3395 = vpop.permute.xlu0 %3394
  %3396 = vrot.lane.b32.xlu0 %v2509, 28
  %v3397 = vpop.permute.xlu0 %3396
  %3398 = vrot.lane.b32.xlu0 %v2510, 28
  %v3399 = vpop.permute.xlu0 %3398
  %3400 = vrot.lane.b32.xlu0 %v2511, 28
  %v3401 = vpop.permute.xlu0 %3400
  %3402 = vrot.lane.b32.xlu0 %v2512, 28
  %v3403 = vpop.permute.xlu0 %3402
  %3404 = vrot.lane.b32.xlu0 %v2513, 28
  %v3405 = vpop.permute.xlu0 %3404
  %3406 = vrot.lane.b32.xlu0 %v2514, 28
  %v3407 = vpop.permute.xlu0 %3406
  %3408 = vrot.lane.b32.xlu0 %v2515, 28
  %v3409 = vpop.permute.xlu0 %3408
  %3410 = vrot.lane.b32.xlu0 %v2516, 28
  %v3411 = vpop.permute.xlu0 %3410
  %3412 = vrot.lane.b32.xlu0 %v2517, 28
  %v3413 = vpop.permute.xlu0 %3412
  %3478 = vrot.lane.b32.xlu0 %v2518, 32
  %v3479 = vpop.permute.xlu0 %3478
  %3480 = vrot.lane.b32.xlu0 %v2519, 32
  %v3481 = vpop.permute.xlu0 %3480
  %3482 = vrot.lane.b32.xlu0 %v2520, 32
  %v3483 = vpop.permute.xlu0 %3482
  %3484 = vrot.lane.b32.xlu0 %v2521, 32
  %v3485 = vpop.permute.xlu0 %3484
  %3486 = vrot.lane.b32.xlu0 %v2522, 32
  %v3487 = vpop.permute.xlu0 %3486
  %3488 = vrot.lane.b32.xlu0 %v2523, 32
  %v3489 = vpop.permute.xlu0 %3488
  %3490 = vrot.lane.b32.xlu0 %v2524, 32
  %v3491 = vpop.permute.xlu0 %3490
  %3492 = vrot.lane.b32.xlu0 %v2525, 32
  %v3493 = vpop.permute.xlu0 %3492
  %3494 = vrot.lane.b32.xlu0 %v2526, 32
  %v3495 = vpop.permute.xlu0 %3494
  %3496 = vrot.lane.b32.xlu0 %v2527, 32
  %v3497 = vpop.permute.xlu0 %3496
  %3498 = vrot.lane.b32.xlu0 %v2528, 32
  %v3499 = vpop.permute.xlu0 %3498
  %3500 = vrot.lane.b32.xlu0 %v2529, 32
  %v3501 = vpop.permute.xlu0 %3500
  %3502 = vrot.lane.b32.xlu0 %v2530, 32
  %v3503 = vpop.permute.xlu0 %3502
  %3504 = vrot.lane.b32.xlu0 %v2531, 32
  %v3505 = vpop.permute.xlu0 %3504
  %3506 = vrot.lane.b32.xlu0 %v2532, 32
  %v3507 = vpop.permute.xlu0 %3506
  %3508 = vrot.lane.b32.xlu0 %v2533, 32
  %v3509 = vpop.permute.xlu0 %3508
  %3510 = vrot.lane.b32.xlu0 %v2534, 32
  %v3511 = vpop.permute.xlu0 %3510
  %3512 = vrot.lane.b32.xlu0 %v2535, 32
  %v3513 = vpop.permute.xlu0 %3512
  %3514 = vrot.lane.b32.xlu0 %v2536, 32
  %v3515 = vpop.permute.xlu0 %3514
  %3516 = vrot.lane.b32.xlu0 %v2537, 32
  %v3517 = vpop.permute.xlu0 %3516
  %3518 = vrot.lane.b32.xlu0 %v2538, 32
  %v3519 = vpop.permute.xlu0 %3518
  %3520 = vrot.lane.b32.xlu0 %v2539, 32
  %v3521 = vpop.permute.xlu0 %3520
  %3522 = vrot.lane.b32.xlu0 %v2540, 32
  %v3523 = vpop.permute.xlu0 %3522
  %3524 = vrot.lane.b32.xlu0 %v2541, 32
  %v3525 = vpop.permute.xlu0 %3524
  %3526 = vrot.lane.b32.xlu0 %v2542, 32
  %v3527 = vpop.permute.xlu0 %3526
  %3528 = vrot.lane.b32.xlu0 %v2543, 32
  %v3529 = vpop.permute.xlu0 %3528
  %3530 = vrot.lane.b32.xlu0 %v2544, 32
  %v3531 = vpop.permute.xlu0 %3530
  %3532 = vrot.lane.b32.xlu0 %v2545, 32
  %v3533 = vpop.permute.xlu0 %3532
  %3534 = vrot.lane.b32.xlu0 %v2546, 32
  %v3535 = vpop.permute.xlu0 %3534
  %3536 = vrot.lane.b32.xlu0 %v2547, 32
  %v3537 = vpop.permute.xlu0 %3536
  %3538 = vrot.lane.b32.xlu0 %v2548, 32
  %v3539 = vpop.permute.xlu0 %3538
  %3540 = vrot.lane.b32.xlu0 %v2549, 32
  %v3541 = vpop.permute.xlu0 %3540
  %v3574 = vsel %vm17, %v2260, %v2583
  %v3575 = vsel %vm17, %v2261, %v2585
  %v3576 = vsel %vm17, %v2262, %v2587
  %v3577 = vsel %vm17, %v2263, %v2589
  %v3578 = vsel %vm17, %v2264, %v2591
  %v3579 = vsel %vm17, %v2265, %v2593
  %v3580 = vsel %vm17, %v2266, %v2595
  %v3581 = vsel %vm17, %v2267, %v2597
  %v3582 = vsel %vm17, %v2268, %v2599
  %v3583 = vsel %vm17, %v2269, %v2601
  %v3584 = vsel %vm17, %v2270, %v2603
  %v3585 = vsel %vm17, %v2271, %v2605
  %v3586 = vsel %vm17, %v2272, %v2607
  %v3587 = vsel %vm17, %v2273, %v2609
  %v3588 = vsel %vm17, %v2274, %v2611
  %v3589 = vsel %vm17, %v2275, %v2613
  %v3590 = vsel %vm17, %v2276, %v2615
  %v3591 = vsel %vm17, %v2277, %v2617
  %v3592 = vsel %vm17, %v2278, %v2619
  %v3593 = vsel %vm17, %v2279, %v2621
  %v3594 = vsel %vm17, %v2280, %v2623
  %v3595 = vsel %vm17, %v2281, %v2625
  %v3596 = vsel %vm17, %v2282, %v2627
  %v3597 = vsel %vm17, %v2283, %v2629
  %v3598 = vsel %vm17, %v2284, %v2631
  %v3599 = vsel %vm17, %v2285, %v2633
  %v3600 = vsel %vm17, %v2286, %v2635
  %v3601 = vsel %vm17, %v2287, %v2637
  %v3602 = vsel %vm17, %v2288, %v2639
  %v3603 = vsel %vm17, %v2289, %v2641
  %v3604 = vsel %vm17, %v2290, %v2643
  %v3605 = vsel %vm17, %v2291, %v2645
  %v3606 = vsel %vm1601, %v3574, %v2711
  %v3607 = vsel %vm1601, %v3575, %v2713
  %v3608 = vsel %vm1601, %v3576, %v2715
  %v3609 = vsel %vm1601, %v3577, %v2717
  %v3610 = vsel %vm1601, %v3578, %v2719
  %v3611 = vsel %vm1601, %v3579, %v2721
  %v3612 = vsel %vm1601, %v3580, %v2723
  %v3613 = vsel %vm1601, %v3581, %v2725
  %v3614 = vsel %vm1601, %v3582, %v2727
  %v3615 = vsel %vm1601, %v3583, %v2729
  %v3616 = vsel %vm1601, %v3584, %v2731
  %v3617 = vsel %vm1601, %v3585, %v2733
  %v3618 = vsel %vm1601, %v3586, %v2735
  %v3619 = vsel %vm1601, %v3587, %v2737
  %v3620 = vsel %vm1601, %v3588, %v2739
  %v3621 = vsel %vm1601, %v3589, %v2741
  %v3622 = vsel %vm1601, %v3590, %v2743
  %v3623 = vsel %vm1601, %v3591, %v2745
  %v3624 = vsel %vm1601, %v3592, %v2747
  %v3625 = vsel %vm1601, %v3593, %v2749
  %v3626 = vsel %vm1601, %v3594, %v2751
  %v3627 = vsel %vm1601, %v3595, %v2753
  %v3628 = vsel %vm1601, %v3596, %v2755
  %v3629 = vsel %vm1601, %v3597, %v2757
  %v3630 = vsel %vm1601, %v3598, %v2759
  %v3631 = vsel %vm1601, %v3599, %v2761
  %v3632 = vsel %vm1601, %v3600, %v2763
  %v3633 = vsel %vm1601, %v3601, %v2765
  %v3634 = vsel %vm1601, %v3602, %v2767
  %v3635 = vsel %vm1601, %v3603, %v2769
  %v3636 = vsel %vm1601, %v3604, %v2771
  %v3637 = vsel %vm1601, %v3605, %v2773
  %v3638 = vsel %vm1634, %v3606, %v2839
  %v3639 = vsel %vm1634, %v3607, %v2841
  %v3640 = vsel %vm1634, %v3608, %v2843
  %v3641 = vsel %vm1634, %v3609, %v2845
  %v3642 = vsel %vm1634, %v3610, %v2847
  %v3643 = vsel %vm1634, %v3611, %v2849
  %v3644 = vsel %vm1634, %v3612, %v2851
  %v3645 = vsel %vm1634, %v3613, %v2853
  %v3646 = vsel %vm1634, %v3614, %v2855
  %v3647 = vsel %vm1634, %v3615, %v2857
  %v3648 = vsel %vm1634, %v3616, %v2859
  %v3649 = vsel %vm1634, %v3617, %v2861
  %v3650 = vsel %vm1634, %v3618, %v2863
  %v3651 = vsel %vm1634, %v3619, %v2865
  %v3652 = vsel %vm1634, %v3620, %v2867
  %v3653 = vsel %vm1634, %v3621, %v2869
  %v3654 = vsel %vm1634, %v3622, %v2871
  %v3655 = vsel %vm1634, %v3623, %v2873
  %v3656 = vsel %vm1634, %v3624, %v2875
  %v3657 = vsel %vm1634, %v3625, %v2877
  %v3658 = vsel %vm1634, %v3626, %v2879
  %v3659 = vsel %vm1634, %v3627, %v2881
  %v3660 = vsel %vm1634, %v3628, %v2883
  %v3661 = vsel %vm1634, %v3629, %v2885
  %v3662 = vsel %vm1634, %v3630, %v2887
  %v3663 = vsel %vm1634, %v3631, %v2889
  %v3664 = vsel %vm1634, %v3632, %v2891
  %v3665 = vsel %vm1634, %v3633, %v2893
  %v3666 = vsel %vm1634, %v3634, %v2895
  %v3667 = vsel %vm1634, %v3635, %v2897
  %v3668 = vsel %vm1634, %v3636, %v2899
  %v3669 = vsel %vm1634, %v3637, %v2901
  %v3670 = vsel %vm1667, %v3638, %v2967
  %v3671 = vsel %vm1667, %v3639, %v2969
  %v3672 = vsel %vm1667, %v3640, %v2971
  %v3673 = vsel %vm1667, %v3641, %v2973
  %v3674 = vsel %vm1667, %v3642, %v2975
  %v3675 = vsel %vm1667, %v3643, %v2977
  %v3676 = vsel %vm1667, %v3644, %v2979
  %v3677 = vsel %vm1667, %v3645, %v2981
  %v3678 = vsel %vm1667, %v3646, %v2983
  %v3679 = vsel %vm1667, %v3647, %v2985
  %v3680 = vsel %vm1667, %v3648, %v2987
  %v3681 = vsel %vm1667, %v3649, %v2989
  %v3682 = vsel %vm1667, %v3650, %v2991
  %v3683 = vsel %vm1667, %v3651, %v2993
  %v3684 = vsel %vm1667, %v3652, %v2995
  %v3685 = vsel %vm1667, %v3653, %v2997
  %v3686 = vsel %vm1667, %v3654, %v2999
  %v3687 = vsel %vm1667, %v3655, %v3001
  %v3688 = vsel %vm1667, %v3656, %v3003
  %v3689 = vsel %vm1667, %v3657, %v3005
  %v3690 = vsel %vm1667, %v3658, %v3007
  %v3691 = vsel %vm1667, %v3659, %v3009
  %v3692 = vsel %vm1667, %v3660, %v3011
  %v3693 = vsel %vm1667, %v3661, %v3013
  %v3694 = vsel %vm1667, %v3662, %v3015
  %v3695 = vsel %vm1667, %v3663, %v3017
  %v3696 = vsel %vm1667, %v3664, %v3019
  %v3697 = vsel %vm1667, %v3665, %v3021
  %v3698 = vsel %vm1667, %v3666, %v3023
  %v3699 = vsel %vm1667, %v3667, %v3025
  %v3700 = vsel %vm1667, %v3668, %v3027
  %v3701 = vsel %vm1667, %v3669, %v3029
  %v3702 = vsel %vm1700, %v3670, %v3095
  %v3703 = vsel %vm1700, %v3671, %v3097
  %v3704 = vsel %vm1700, %v3672, %v3099
  %v3705 = vsel %vm1700, %v3673, %v3101
  %v3706 = vsel %vm1700, %v3674, %v3103
  %v3707 = vsel %vm1700, %v3675, %v3105
  %v3708 = vsel %vm1700, %v3676, %v3107
  %v3709 = vsel %vm1700, %v3677, %v3109
  %v3710 = vsel %vm1700, %v3678, %v3111
  %v3711 = vsel %vm1700, %v3679, %v3113
  %v3712 = vsel %vm1700, %v3680, %v3115
  %v3713 = vsel %vm1700, %v3681, %v3117
  %v3714 = vsel %vm1700, %v3682, %v3119
  %v3715 = vsel %vm1700, %v3683, %v3121
  %v3716 = vsel %vm1700, %v3684, %v3123
  %v3717 = vsel %vm1700, %v3685, %v3125
  %v3718 = vsel %vm1700, %v3686, %v3127
  %v3719 = vsel %vm1700, %v3687, %v3129
  %v3720 = vsel %vm1700, %v3688, %v3131
  %v3721 = vsel %vm1700, %v3689, %v3133
  %v3722 = vsel %vm1700, %v3690, %v3135
  %v3723 = vsel %vm1700, %v3691, %v3137
  %v3724 = vsel %vm1700, %v3692, %v3139
  %v3725 = vsel %vm1700, %v3693, %v3141
  %v3726 = vsel %vm1700, %v3694, %v3143
  %v3727 = vsel %vm1700, %v3695, %v3145
  %v3728 = vsel %vm1700, %v3696, %v3147
  %v3729 = vsel %vm1700, %v3697, %v3149
  %v3730 = vsel %vm1700, %v3698, %v3151
  %v3731 = vsel %vm1700, %v3699, %v3153
  %v3732 = vsel %vm1700, %v3700, %v3155
  %v3733 = vsel %vm1700, %v3701, %v3157
  %v3734 = vsel %vm1733, %v3702, %v3223
  %v3735 = vsel %vm1733, %v3703, %v3225
  %v3736 = vsel %vm1733, %v3704, %v3227
  %v3737 = vsel %vm1733, %v3705, %v3229
  %v3738 = vsel %vm1733, %v3706, %v3231
  %v3739 = vsel %vm1733, %v3707, %v3233
  %v3740 = vsel %vm1733, %v3708, %v3235
  %v3741 = vsel %vm1733, %v3709, %v3237
  %v3742 = vsel %vm1733, %v3710, %v3239
  %v3743 = vsel %vm1733, %v3711, %v3241
  %v3744 = vsel %vm1733, %v3712, %v3243
  %v3745 = vsel %vm1733, %v3713, %v3245
  %v3746 = vsel %vm1733, %v3714, %v3247
  %v3747 = vsel %vm1733, %v3715, %v3249
  %v3748 = vsel %vm1733, %v3716, %v3251
  %v3749 = vsel %vm1733, %v3717, %v3253
  %v3750 = vsel %vm1733, %v3718, %v3255
  %v3751 = vsel %vm1733, %v3719, %v3257
  %v3752 = vsel %vm1733, %v3720, %v3259
  %v3753 = vsel %vm1733, %v3721, %v3261
  %v3754 = vsel %vm1733, %v3722, %v3263
  %v3755 = vsel %vm1733, %v3723, %v3265
  %v3756 = vsel %vm1733, %v3724, %v3267
  %v3757 = vsel %vm1733, %v3725, %v3269
  %v3758 = vsel %vm1733, %v3726, %v3271
  %v3759 = vsel %vm1733, %v3727, %v3273
  %v3760 = vsel %vm1733, %v3728, %v3275
  %v3761 = vsel %vm1733, %v3729, %v3277
  %v3762 = vsel %vm1733, %v3730, %v3279
  %v3763 = vsel %vm1733, %v3731, %v3281
  %v3764 = vsel %vm1733, %v3732, %v3283
  %v3765 = vsel %vm1733, %v3733, %v3285
  %v3766 = vsel %vm1766, %v3734, %v3351
  %v3767 = vsel %vm1766, %v3735, %v3353
  %v3768 = vsel %vm1766, %v3736, %v3355
  %v3769 = vsel %vm1766, %v3737, %v3357
  %v3770 = vsel %vm1766, %v3738, %v3359
  %v3771 = vsel %vm1766, %v3739, %v3361
  %v3772 = vsel %vm1766, %v3740, %v3363
  %v3773 = vsel %vm1766, %v3741, %v3365
  %v3774 = vsel %vm1766, %v3742, %v3367
  %v3775 = vsel %vm1766, %v3743, %v3369
  %v3776 = vsel %vm1766, %v3744, %v3371
  %v3777 = vsel %vm1766, %v3745, %v3373
  %v3778 = vsel %vm1766, %v3746, %v3375
  %v3779 = vsel %vm1766, %v3747, %v3377
  %v3780 = vsel %vm1766, %v3748, %v3379
  %v3781 = vsel %vm1766, %v3749, %v3381
  %v3782 = vsel %vm1766, %v3750, %v3383
  %v3783 = vsel %vm1766, %v3751, %v3385
  %v3784 = vsel %vm1766, %v3752, %v3387
  %v3785 = vsel %vm1766, %v3753, %v3389
  %v3786 = vsel %vm1766, %v3754, %v3391
  %v3787 = vsel %vm1766, %v3755, %v3393
  %v3788 = vsel %vm1766, %v3756, %v3395
  %v3789 = vsel %vm1766, %v3757, %v3397
  %v3790 = vsel %vm1766, %v3758, %v3399
  %v3791 = vsel %vm1766, %v3759, %v3401
  %v3792 = vsel %vm1766, %v3760, %v3403
  %v3793 = vsel %vm1766, %v3761, %v3405
  %v3794 = vsel %vm1766, %v3762, %v3407
  %v3795 = vsel %vm1766, %v3763, %v3409
  %v3796 = vsel %vm1766, %v3764, %v3411
  %v3797 = vsel %vm1766, %v3765, %v3413
  %v3798 = vsel %vm1799, %v3766, %v3479
  %v3799 = vsel %vm1799, %v3767, %v3481
  %v3800 = vsel %vm1799, %v3768, %v3483
  %v3801 = vsel %vm1799, %v3769, %v3485
  %v3802 = vsel %vm1799, %v3770, %v3487
  %v3803 = vsel %vm1799, %v3771, %v3489
  %v3804 = vsel %vm1799, %v3772, %v3491
  %v3805 = vsel %vm1799, %v3773, %v3493
  %v3806 = vsel %vm1799, %v3774, %v3495
  %v3807 = vsel %vm1799, %v3775, %v3497
  %v3808 = vsel %vm1799, %v3776, %v3499
  %v3809 = vsel %vm1799, %v3777, %v3501
  %v3810 = vsel %vm1799, %v3778, %v3503
  %v3811 = vsel %vm1799, %v3779, %v3505
  %v3812 = vsel %vm1799, %v3780, %v3507
  %v3813 = vsel %vm1799, %v3781, %v3509
  %v3814 = vsel %vm1799, %v3782, %v3511
  %v3815 = vsel %vm1799, %v3783, %v3513
  %v3816 = vsel %vm1799, %v3784, %v3515
  %v3817 = vsel %vm1799, %v3785, %v3517
  %v3818 = vsel %vm1799, %v3786, %v3519
  %v3819 = vsel %vm1799, %v3787, %v3521
  %v3820 = vsel %vm1799, %v3788, %v3523
  %v3821 = vsel %vm1799, %v3789, %v3525
  %v3822 = vsel %vm1799, %v3790, %v3527
  %v3823 = vsel %vm1799, %v3791, %v3529
  %v3824 = vsel %vm1799, %v3792, %v3531
  %v3825 = vsel %vm1799, %v3793, %v3533
  %v3826 = vsel %vm1799, %v3794, %v3535
  %v3827 = vsel %vm1799, %v3795, %v3537
  %v3828 = vsel %vm1799, %v3796, %v3539
  %v3829 = vsel %vm1799, %v3797, %v3541
  %v3830 = vld [vmem:[%s1] sm:$0xff]
  %v3831 = vld [vmem:[%s1 + $0x8] sm:$0xff]
  %v3832 = vld [vmem:[%s1 + $0x10] sm:$0xff]
  %v3833 = vld [vmem:[%s1 + $0x18] sm:$0xff]
  %v3834 = vld [vmem:[%s1 + $0x20] sm:$0xf]
  %v3835 = vld [vmem:[%s2] sm:$0x1]
  %v3837 = vperm.slane %v3835, 0
  %v3840 = vsel %vm1841, %v3798, 0
  %v3843 = vsel %vm1841, %v3799, 0
  %v3846 = vsel %vm1841, %v3800, 0
  %v3849 = vsel %vm1841, %v3801, 0
  %v3852 = vsel %vm1841, %v3802, 0
  %v3855 = vsel %vm1841, %v3803, 0
  %v3858 = vsel %vm1841, %v3804, 0
  %v3861 = vsel %vm1841, %v3805, 0
  %v3864 = vsel %vm1841, %v3806, 0
  %v3867 = vsel %vm1841, %v3807, 0
  %v3870 = vsel %vm1841, %v3808, 0
  %v3873 = vsel %vm1841, %v3809, 0
  %v3876 = vsel %vm1841, %v3810, 0
  %v3879 = vsel %vm1841, %v3811, 0
  %v3882 = vsel %vm1841, %v3812, 0
  %v3885 = vsel %vm1841, %v3813, 0
  %v3888 = vsel %vm1841, %v3814, 0
  %v3891 = vsel %vm1841, %v3815, 0
  %v3894 = vsel %vm1841, %v3816, 0
  %v3897 = vsel %vm1841, %v3817, 0
  %v3900 = vsel %vm1841, %v3818, 0
  %v3903 = vsel %vm1841, %v3819, 0
  %v3906 = vsel %vm1841, %v3820, 0
  %v3909 = vsel %vm1841, %v3821, 0
  %v3912 = vsel %vm1841, %v3822, 0
  %v3915 = vsel %vm1841, %v3823, 0
  %v3918 = vsel %vm1841, %v3824, 0
  %v3921 = vsel %vm1841, %v3825, 0
  %v3924 = vsel %vm1841, %v3826, 0
  %v3927 = vsel %vm1841, %v3827, 0
  %v3930 = vsel %vm1841, %v3828, 0
  %v3933 = vsel %vm1841, %v3829, 0
  %v3936 = vsel %vm1938, %v3834, 0
  %3938 = vmatpush.msra.mxu0 0.0
  %3939 = vmatpush.msra.mxu0 0.0
  %3940 = vmatpush.msra.mxu0 0.0
  %3941 = vmatpush.msra.mxu0 0.0
  %3942 = vmatpush.msra.mxu0 0.0
  %3943 = vmatpush.msra.mxu0 0.0
  %3944 = vmatpush.msra.mxu0 0.0
  %3945 = vmatpush.msra.mxu0 0.0
  %3946 = vmatpush.msra.mxu0 0.0
  %3947 = vmatpush.msra.mxu0 0.0
  %3948 = vmatpush.msra.mxu0 0.0
  %3949 = vmatpush.msra.mxu0 %v3936
  %3950 = vmatpush.msra.mxu0 %v3833
  %3951 = vmatpush.msra.mxu0 %v3832
  %3952 = vmatpush.msra.mxu0 %v3831
  %3953 = vmatpush.msra.mxu0 %v3830
  %3954 = vmatmul.f32.gmra.mxu0 %v3840
  %v3955 = vpop.f32.mrf.mxu0
  %v3956 = vadd.f32 %v3837, %v3955
  %3957 = vmatmul.f32.gmra.mxu0 %v3843
  %v3958 = vpop.f32.mrf.mxu0
  %v3959 = vadd.f32 %v3837, %v3958
  %3960 = vmatmul.f32.gmra.mxu0 %v3846
  %v3961 = vpop.f32.mrf.mxu0
  %v3962 = vadd.f32 %v3837, %v3961
  %3963 = vmatmul.f32.gmra.mxu0 %v3849
  %v3964 = vpop.f32.mrf.mxu0
  %v3965 = vadd.f32 %v3837, %v3964
  %3966 = vmatmul.f32.gmra.mxu0 %v3852
  %v3967 = vpop.f32.mrf.mxu0
  %v3968 = vadd.f32 %v3837, %v3967
  %3969 = vmatmul.f32.gmra.mxu0 %v3855
  %v3970 = vpop.f32.mrf.mxu0
  %v3971 = vadd.f32 %v3837, %v3970
  %3972 = vmatmul.f32.gmra.mxu0 %v3858
  %v3973 = vpop.f32.mrf.mxu0
  %v3974 = vadd.f32 %v3837, %v3973
  %3975 = vmatmul.f32.gmra.mxu0 %v3861
  %v3976 = vpop.f32.mrf.mxu0
  %v3977 = vadd.f32 %v3837, %v3976
  %3978 = vmatmul.f32.gmra.mxu0 %v3864
  %v3979 = vpop.f32.mrf.mxu0
  %v3980 = vadd.f32 %v3837, %v3979
  %3981 = vmatmul.f32.gmra.mxu0 %v3867
  %v3982 = vpop.f32.mrf.mxu0
  %v3983 = vadd.f32 %v3837, %v3982
  %3984 = vmatmul.f32.gmra.mxu0 %v3870
  %v3985 = vpop.f32.mrf.mxu0
  %v3986 = vadd.f32 %v3837, %v3985
  %3987 = vmatmul.f32.gmra.mxu0 %v3873
  %v3988 = vpop.f32.mrf.mxu0
  %v3989 = vadd.f32 %v3837, %v3988
  %3990 = vmatmul.f32.gmra.mxu0 %v3876
  %v3991 = vpop.f32.mrf.mxu0
  %v3992 = vadd.f32 %v3837, %v3991
  %3993 = vmatmul.f32.gmra.mxu0 %v3879
  %v3994 = vpop.f32.mrf.mxu0
  %v3995 = vadd.f32 %v3837, %v3994
  %3996 = vmatmul.f32.gmra.mxu0 %v3882
  %v3997 = vpop.f32.mrf.mxu0
  %v3998 = vadd.f32 %v3837, %v3997
  %3999 = vmatmul.f32.gmra.mxu0 %v3885
  %v4000 = vpop.f32.mrf.mxu0
  %v4001 = vadd.f32 %v3837, %v4000
  %4002 = vmatmul.f32.gmra.mxu0 %v3888
  %v4003 = vpop.f32.mrf.mxu0
  %v4004 = vadd.f32 %v3837, %v4003
  %4005 = vmatmul.f32.gmra.mxu0 %v3891
  %v4006 = vpop.f32.mrf.mxu0
  %v4007 = vadd.f32 %v3837, %v4006
  %4008 = vmatmul.f32.gmra.mxu0 %v3894
  %v4009 = vpop.f32.mrf.mxu0
  %v4010 = vadd.f32 %v3837, %v4009
  %4011 = vmatmul.f32.gmra.mxu0 %v3897
  %v4012 = vpop.f32.mrf.mxu0
  %v4013 = vadd.f32 %v3837, %v4012
  %4014 = vmatmul.f32.gmra.mxu0 %v3900
  %v4015 = vpop.f32.mrf.mxu0
  %v4016 = vadd.f32 %v3837, %v4015
  %4017 = vmatmul.f32.gmra.mxu0 %v3903
  %v4018 = vpop.f32.mrf.mxu0
  %v4019 = vadd.f32 %v3837, %v4018
  %4020 = vmatmul.f32.gmra.mxu0 %v3906
  %v4021 = vpop.f32.mrf.mxu0
  %v4022 = vadd.f32 %v3837, %v4021
  %4023 = vmatmul.f32.gmra.mxu0 %v3909
  %v4024 = vpop.f32.mrf.mxu0
  %v4025 = vadd.f32 %v3837, %v4024
  %4026 = vmatmul.f32.gmra.mxu0 %v3912
  %v4027 = vpop.f32.mrf.mxu0
  %v4028 = vadd.f32 %v3837, %v4027
  %4029 = vmatmul.f32.gmra.mxu0 %v3915
  %v4030 = vpop.f32.mrf.mxu0
  %v4031 = vadd.f32 %v3837, %v4030
  %4032 = vmatmul.f32.gmra.mxu0 %v3918
  %v4033 = vpop.f32.mrf.mxu0
  %v4034 = vadd.f32 %v3837, %v4033
  %4035 = vmatmul.f32.gmra.mxu0 %v3921
  %v4036 = vpop.f32.mrf.mxu0
  %v4037 = vadd.f32 %v3837, %v4036
  %4038 = vmatmul.f32.gmra.mxu0 %v3924
  %v4039 = vpop.f32.mrf.mxu0
  %v4040 = vadd.f32 %v3837, %v4039
  %4041 = vmatmul.f32.gmra.mxu0 %v3927
  %v4042 = vpop.f32.mrf.mxu0
  %v4043 = vadd.f32 %v3837, %v4042
  %4044 = vmatmul.f32.gmra.mxu0 %v3930
  %v4045 = vpop.f32.mrf.mxu0
  %v4046 = vadd.f32 %v3837, %v4045
  %4047 = vmatmul.f32.gmra.mxu0 %v3933
  %v4048 = vpop.f32.mrf.mxu0
  %v4049 = vadd.f32 %v3837, %v4048
  %4050 = vdwg.mxu0
  %s4051 = scalar_lea.vmem %s3, 256
  %4052 = vst.msk [vmem:[%s4051] sm:$0xff] %vm1601, %v3956
  %4053 = vst.msk [vmem:[%s4051 + $0x8] sm:$0xff] %vm1601, %v3959
  %4054 = vst.msk [vmem:[%s4051 + $0x10] sm:$0xff] %vm1601, %v3962
  %4055 = vst.msk [vmem:[%s4051 + $0x18] sm:$0xff] %vm1601, %v3965
  %4056 = vst.msk [vmem:[%s4051 + $0x20] sm:$0xff] %vm1601, %v3968
  %4057 = vst.msk [vmem:[%s4051 + $0x28] sm:$0xff] %vm1601, %v3971
  %4058 = vst.msk [vmem:[%s4051 + $0x30] sm:$0xff] %vm1601, %v3974
  %4059 = vst.msk [vmem:[%s4051 + $0x38] sm:$0xff] %vm1601, %v3977
  %4060 = vst.msk [vmem:[%s4051 + $0x40] sm:$0xff] %vm1601, %v3980
  %4061 = vst.msk [vmem:[%s4051 + $0x48] sm:$0xff] %vm1601, %v3983
  %4062 = vst.msk [vmem:[%s4051 + $0x50] sm:$0xff] %vm1601, %v3986
  %4063 = vst.msk [vmem:[%s4051 + $0x58] sm:$0xff] %vm1601, %v3989
  %4064 = vst.msk [vmem:[%s4051 + $0x60] sm:$0xff] %vm1601, %v3992
  %4065 = vst.msk [vmem:[%s4051 + $0x68] sm:$0xff] %vm1601, %v3995
  %4066 = vst.msk [vmem:[%s4051 + $0x70] sm:$0xff] %vm1601, %v3998
  %4067 = vst.msk [vmem:[%s4051 + $0x78] sm:$0xff] %vm1601, %v4001
  %4068 = vst.msk [vmem:[%s4051 + $0x80] sm:$0xff] %vm1601, %v4004
  %4069 = vst.msk [vmem:[%s4051 + $0x88] sm:$0xff] %vm1601, %v4007
  %4070 = vst.msk [vmem:[%s4051 + $0x90] sm:$0xff] %vm1601, %v4010
  %4071 = vst.msk [vmem:[%s4051 + $0x98] sm:$0xff] %vm1601, %v4013
  %4072 = vst.msk [vmem:[%s4051 + $0xa0] sm:$0xff] %vm1601, %v4016
  %4073 = vst.msk [vmem:[%s4051 + $0xa8] sm:$0xff] %vm1601, %v4019
  %4074 = vst.msk [vmem:[%s4051 + $0xb0] sm:$0xff] %vm1601, %v4022
  %4075 = vst.msk [vmem:[%s4051 + $0xb8] sm:$0xff] %vm1601, %v4025
  %4076 = vst.msk [vmem:[%s4051 + $0xc0] sm:$0xff] %vm1601, %v4028
  %4077 = vst.msk [vmem:[%s4051 + $0xc8] sm:$0xff] %vm1601, %v4031
  %4078 = vst.msk [vmem:[%s4051 + $0xd0] sm:$0xff] %vm1601, %v4034
  %4079 = vst.msk [vmem:[%s4051 + $0xd8] sm:$0xff] %vm1601, %v4037
  %4080 = vst.msk [vmem:[%s4051 + $0xe0] sm:$0xff] %vm1601, %v4040
  %4081 = vst.msk [vmem:[%s4051 + $0xe8] sm:$0xff] %vm1601, %v4043
  %4082 = vst.msk [vmem:[%s4051 + $0xf0] sm:$0xff] %vm1601, %v4046
  %4083 = vst.msk [vmem:[%s4051 + $0xf8] sm:$0xff] %vm1601, %v4049
  %v4084 = vsel %vm1601, %v3956, 0.0
  %v4085 = vsel %vm1601, %v3959, 0.0
  %v4086 = vadd.f32 %v4084, %v4085
  %v4087 = vsel %vm1601, %v3962, 0.0
  %v4088 = vadd.f32 %v4086, %v4087
  %v4089 = vsel %vm1601, %v3965, 0.0
  %v4090 = vadd.f32 %v4088, %v4089
  %v4091 = vsel %vm1601, %v3968, 0.0
  %v4092 = vadd.f32 %v4090, %v4091
  %v4093 = vsel %vm1601, %v3971, 0.0
  %v4094 = vadd.f32 %v4092, %v4093
  %v4095 = vsel %vm1601, %v3974, 0.0
  %v4096 = vadd.f32 %v4094, %v4095
  %v4097 = vsel %vm1601, %v3977, 0.0
  %v4098 = vadd.f32 %v4096, %v4097
  %v4099 = vsel %vm1601, %v3980, 0.0
  %v4100 = vadd.f32 %v4098, %v4099
  %v4101 = vsel %vm1601, %v3983, 0.0
  %v4102 = vadd.f32 %v4100, %v4101
  %v4103 = vsel %vm1601, %v3986, 0.0
  %v4104 = vadd.f32 %v4102, %v4103
  %v4105 = vsel %vm1601, %v3989, 0.0
  %v4106 = vadd.f32 %v4104, %v4105
  %v4107 = vsel %vm1601, %v3992, 0.0
  %v4108 = vadd.f32 %v4106, %v4107
  %v4109 = vsel %vm1601, %v3995, 0.0
  %v4110 = vadd.f32 %v4108, %v4109
  %v4111 = vsel %vm1601, %v3998, 0.0
  %v4112 = vadd.f32 %v4110, %v4111
  %v4113 = vsel %vm1601, %v4001, 0.0
  %v4114 = vadd.f32 %v4112, %v4113
  %v4115 = vsel %vm1601, %v4004, 0.0
  %v4116 = vadd.f32 %v4114, %v4115
  %v4117 = vsel %vm1601, %v4007, 0.0
  %v4118 = vadd.f32 %v4116, %v4117
  %v4119 = vsel %vm1601, %v4010, 0.0
  %v4120 = vadd.f32 %v4118, %v4119
  %v4121 = vsel %vm1601, %v4013, 0.0
  %v4122 = vadd.f32 %v4120, %v4121
  %v4123 = vsel %vm1601, %v4016, 0.0
  %v4124 = vadd.f32 %v4122, %v4123
  %v4125 = vsel %vm1601, %v4019, 0.0
  %v4126 = vadd.f32 %v4124, %v4125
  %v4127 = vsel %vm1601, %v4022, 0.0
  %v4128 = vadd.f32 %v4126, %v4127
  %v4129 = vsel %vm1601, %v4025, 0.0
  %v4130 = vadd.f32 %v4128, %v4129
  %v4131 = vsel %vm1601, %v4028, 0.0
  %v4132 = vadd.f32 %v4130, %v4131
  %v4133 = vsel %vm1601, %v4031, 0.0
  %v4134 = vadd.f32 %v4132, %v4133
  %v4135 = vsel %vm1601, %v4034, 0.0
  %v4136 = vadd.f32 %v4134, %v4135
  %v4137 = vsel %vm1601, %v4037, 0.0
  %v4138 = vadd.f32 %v4136, %v4137
  %v4139 = vsel %vm1601, %v4040, 0.0
  %v4140 = vadd.f32 %v4138, %v4139
  %v4141 = vsel %vm1601, %v4043, 0.0
  %v4142 = vadd.f32 %v4140, %v4141
  %v4143 = vsel %vm1601, %v4046, 0.0
  %v4144 = vadd.f32 %v4142, %v4143
  %v4145 = vsel %vm1601, %v4049, 0.0
  %v4146 = vadd.f32 %v4144, %v4145
  %v4147 = vrot.slane %v4146, 4
  %v4148 = vadd.f32 %v4146, %v4147
  %v4149 = vrot.slane %v4148, 2
  %v4150 = vadd.f32 %v4148, %v4149
  %v4151 = vrot.slane %v4150, 1
  %v4152 = vadd.f32 %v4150, %v4151
  %v4153 = vadd.f32 %v2156, %v4152
  %v4154 = vmul.f32 %v3956, %v3956
  %v4155 = vmul.f32 %v3959, %v3959
  %v4156 = vmul.f32 %v3962, %v3962
  %v4157 = vmul.f32 %v3965, %v3965
  %v4158 = vmul.f32 %v3968, %v3968
  %v4159 = vmul.f32 %v3971, %v3971
  %v4160 = vmul.f32 %v3974, %v3974
  %v4161 = vmul.f32 %v3977, %v3977
  %v4162 = vmul.f32 %v3980, %v3980
  %v4163 = vmul.f32 %v3983, %v3983
  %v4164 = vmul.f32 %v3986, %v3986
  %v4165 = vmul.f32 %v3989, %v3989
  %v4166 = vmul.f32 %v3992, %v3992
  %v4167 = vmul.f32 %v3995, %v3995
  %v4168 = vmul.f32 %v3998, %v3998
  %v4169 = vmul.f32 %v4001, %v4001
  %v4170 = vmul.f32 %v4004, %v4004
  %v4171 = vmul.f32 %v4007, %v4007
  %v4172 = vmul.f32 %v4010, %v4010
  %v4173 = vmul.f32 %v4013, %v4013
  %v4174 = vmul.f32 %v4016, %v4016
  %v4175 = vmul.f32 %v4019, %v4019
  %v4176 = vmul.f32 %v4022, %v4022
  %v4177 = vmul.f32 %v4025, %v4025
  %v4178 = vmul.f32 %v4028, %v4028
  %v4179 = vmul.f32 %v4031, %v4031
  %v4180 = vmul.f32 %v4034, %v4034
  %v4181 = vmul.f32 %v4037, %v4037
  %v4182 = vmul.f32 %v4040, %v4040
  %v4183 = vmul.f32 %v4043, %v4043
  %v4184 = vmul.f32 %v4046, %v4046
  %v4185 = vmul.f32 %v4049, %v4049
  %v4186 = vsel %vm1601, %v4154, 0.0
  %v4187 = vsel %vm1601, %v4155, 0.0
  %v4188 = vadd.f32 %v4186, %v4187
  %v4189 = vsel %vm1601, %v4156, 0.0
  %v4190 = vadd.f32 %v4188, %v4189
  %v4191 = vsel %vm1601, %v4157, 0.0
  %v4192 = vadd.f32 %v4190, %v4191
  %v4193 = vsel %vm1601, %v4158, 0.0
  %v4194 = vadd.f32 %v4192, %v4193
  %v4195 = vsel %vm1601, %v4159, 0.0
  %v4196 = vadd.f32 %v4194, %v4195
  %v4197 = vsel %vm1601, %v4160, 0.0
  %v4198 = vadd.f32 %v4196, %v4197
  %v4199 = vsel %vm1601, %v4161, 0.0
  %v4200 = vadd.f32 %v4198, %v4199
  %v4201 = vsel %vm1601, %v4162, 0.0
  %v4202 = vadd.f32 %v4200, %v4201
  %v4203 = vsel %vm1601, %v4163, 0.0
  %v4204 = vadd.f32 %v4202, %v4203
  %v4205 = vsel %vm1601, %v4164, 0.0
  %v4206 = vadd.f32 %v4204, %v4205
  %v4207 = vsel %vm1601, %v4165, 0.0
  %v4208 = vadd.f32 %v4206, %v4207
  %v4209 = vsel %vm1601, %v4166, 0.0
  %v4210 = vadd.f32 %v4208, %v4209
  %v4211 = vsel %vm1601, %v4167, 0.0
  %v4212 = vadd.f32 %v4210, %v4211
  %v4213 = vsel %vm1601, %v4168, 0.0
  %v4214 = vadd.f32 %v4212, %v4213
  %v4215 = vsel %vm1601, %v4169, 0.0
  %v4216 = vadd.f32 %v4214, %v4215
  %v4217 = vsel %vm1601, %v4170, 0.0
  %v4218 = vadd.f32 %v4216, %v4217
  %v4219 = vsel %vm1601, %v4171, 0.0
  %v4220 = vadd.f32 %v4218, %v4219
  %v4221 = vsel %vm1601, %v4172, 0.0
  %v4222 = vadd.f32 %v4220, %v4221
  %v4223 = vsel %vm1601, %v4173, 0.0
  %v4224 = vadd.f32 %v4222, %v4223
  %v4225 = vsel %vm1601, %v4174, 0.0
  %v4226 = vadd.f32 %v4224, %v4225
  %v4227 = vsel %vm1601, %v4175, 0.0
  %v4228 = vadd.f32 %v4226, %v4227
  %v4229 = vsel %vm1601, %v4176, 0.0
  %v4230 = vadd.f32 %v4228, %v4229
  %v4231 = vsel %vm1601, %v4177, 0.0
  %v4232 = vadd.f32 %v4230, %v4231
  %v4233 = vsel %vm1601, %v4178, 0.0
  %v4234 = vadd.f32 %v4232, %v4233
  %v4235 = vsel %vm1601, %v4179, 0.0
  %v4236 = vadd.f32 %v4234, %v4235
  %v4237 = vsel %vm1601, %v4180, 0.0
  %v4238 = vadd.f32 %v4236, %v4237
  %v4239 = vsel %vm1601, %v4181, 0.0
  %v4240 = vadd.f32 %v4238, %v4239
  %v4241 = vsel %vm1601, %v4182, 0.0
  %v4242 = vadd.f32 %v4240, %v4241
  %v4243 = vsel %vm1601, %v4183, 0.0
  %v4244 = vadd.f32 %v4242, %v4243
  %v4245 = vsel %vm1601, %v4184, 0.0
  %v4246 = vadd.f32 %v4244, %v4245
  %v4247 = vsel %vm1601, %v4185, 0.0
  %v4248 = vadd.f32 %v4246, %v4247
  %v4249 = vrot.slane %v4248, 4
  %v4250 = vadd.f32 %v4248, %v4249
  %v4251 = vrot.slane %v4250, 2
  %v4252 = vadd.f32 %v4250, %v4251
  %v4253 = vrot.slane %v4252, 1
  %v4254 = vadd.f32 %v4252, %v4253
  %v4255 = vadd.f32 %v2258, %v4254
  %vm4256 = vcmask 57344
  %4257 = vst.msk [vmem:[%s4] sm:$0x1] %vm4256, %v4153
  %4258 = vst.msk [vmem:[%s5] sm:$0x1] %vm4256, %v4255
  // Predicated region
  $region14: #{cbn_forward.2} parent=0 // pred_check
    _
  $region15: #{cbn_forward.2} parent=0 // pred_check_branch
    %4260 = sbr.rel (0) target = $region17
  $region16: #{cbn_forward.2} parent=0 // pred_region
    _
  $region17: #{cbn_forward.2} parent=0 // pred_fallthru
    _
  // Predicated region
  $region18: #{cbn_forward.2} parent=0 // pred_check
    _
  $region19: #{cbn_forward.2} parent=0 // pred_check_branch
    %4262 = sbr.rel (0) target = $region21
  $region20: #{cbn_forward.2} parent=0 // pred_region
    _
  $region21: #{cbn_forward.2} parent=0 // pred_fallthru
    _
  // Predicated region
  $region22: #{cbn_forward.2} parent=0 // pred_check
    _
  $region23: #{cbn_forward.2} parent=0 // pred_check_branch
    %4264 = sbr.rel (0) target = $region25
  $region24: #{cbn_forward.2} parent=0 // pred_region
    _
  $region25: #{cbn_forward.2} parent=0 // pred_fallthru
    _
  // Predicated region
  $region26: #{cbn_forward.2} parent=0 // pred_check
    _
  $region27: #{cbn_forward.2} parent=0 // pred_check_branch
    %4266 = sbr.rel (0) target = $region29
  $region28: #{cbn_forward.2} parent=0 // pred_region
    _
  $region29: #{cbn_forward.2} parent=0 // pred_fallthru
    _
  // Predicated region
  $region30: #{cbn_forward.2} parent=0 // pred_check
    _
  $region31: #{cbn_forward.2} parent=0 // pred_check_branch
    %4268 = sbr.rel (0) target = $region33
  $region32: #{cbn_forward.2} parent=0 // pred_region
    _
  $region33: #{cbn_forward.2} parent=0 // pred_fallthru
    _
  // Predicated region
  $region34: #{cbn_forward.2} parent=0 // pred_check
    _
  $region35: #{cbn_forward.2} parent=0 // pred_check_branch
    %4270 = sbr.rel (0) target = $region37
  $region36: #{cbn_forward.2} parent=0 // pred_region
    _
  $region37: #{cbn_forward.2} parent=0 // pred_fallthru
    _

</llo_original>
